<compile_context>
chip_gen: v7x
topology: tpu7x:2x2x1
jax: 0.10.0
libtpu: 0.0.40
codegen_flags: <defaults>
</compile_context>

<pallas_src>
import numpy as np
import jax
import jax.numpy as jnp
from jax import lax
from jax.experimental import pallas as pl
from jax.experimental.pallas import tpu as pltpu

# ------------------------------------------------------------------ config ---
BATCH = 2
IN_CHANNELS = 4
SPATIAL = 16                      # input_size = (16, 16)
HIDDEN_DIM = 32                   # config.hidden_dim (gf output width)
N_LATENTS = 10                    # config.n_latents
HIDDEN_CHANNELS = 32              # Burgess conv width
KSIZE, STRIDE, PAD = 4, 2, 1
OH1 = OW1 = SPATIAL // 2          # 8   conv1 output spatial
OH2 = OW2 = SPATIAL // 4          # 4   conv2 output spatial
NPOS = KSIZE * KSIZE              # 16  kernel positions
GF_IN = HIDDEN_CHANNELS * OH2 * OW2   # 512
JOINT_DIM = 2 * HIDDEN_DIM        # 64

_VMEM = pl.BlockSpec(memory_space=pltpu.MemorySpace.VMEM)


# ----------------------------------------------------------- fused kernel ---
def _burgess_disc_kernel(p1_ref, z_ref,
                         w1_ref, b1_ref,
                         sel2_ref, w2_ref, b2_ref,
                         gw1_ref, gb1_ref, gw2_ref, gb2_ref,
                         j1x_ref, j1z_ref, jb1_ref,
                         j2_ref, jb2_ref, j3_ref, jb3_ref,
                         o_ref):
    f32 = jnp.float32
    bsz = z_ref.shape[0]
    npos, rows2, _ = sel2_ref.shape          # (16, B*16, B*64)
    oc2 = w2_ref.shape[2]
    n_sp2 = rows2 // bsz                     # 16 conv2 output spatial positions

    # --- infer_x.lf conv1: one MXU matmul on the wrapper-built patch matrix.
    h1 = jnp.dot(p1_ref[...], w1_ref[...], preferred_element_type=f32)
    h1 = jnp.maximum(h1 + b1_ref[...], 0.0)          # [B*64, 32], rows = (b, oh1, ow1)

    # --- infer_x.lf conv2: 16 shifted sub-matmuls.  The stride-2 + padding=1
    #     patch gather is a row-selection matmul against a constant 0/1 matrix,
    #     so the whole thing stays in VMEM/vregs (no strided loads, no scratch,
    #     zero-padding rows are simply all-zero selection rows).
    acc2 = jnp.zeros((rows2, oc2), f32)
    for p in range(npos):
        gathered = jnp.dot(sel2_ref[p], h1, preferred_element_type=f32)   # [B*16, 32]
        acc2 = acc2 + jnp.dot(gathered, w2_ref[p], preferred_element_type=f32)
    h2 = jnp.maximum(acc2 + b2_ref[...], 0.0)        # rows = (oh2, ow2, b)

    # --- infer_x.gf linear 1: contract over (spatial, channel) with an unrolled
    #     per-position accumulation, so no in-kernel transpose/flatten is needed
    #     (gf weights were permuted at prep time to match this ordering).
    accg = jnp.zeros((bsz, gw1_ref.shape[2]), f32)
    for s in range(n_sp2):
        accg = accg + jnp.dot(h2[s * bsz:(s + 1) * bsz, :], gw1_ref[s],
                              preferred_element_type=f32)
    g1 = jnp.maximum(accg + gb1_ref[...], 0.0)

    # --- infer_x.gf linear 2
    out_x = jnp.maximum(jnp.dot(g1, gw2_ref[...], preferred_element_type=f32)
                        + gb2_ref[...], 0.0)         # [B, HIDDEN_DIM]

    # --- infer_joint: torch.cat((output_x, z), 1) folded into split weights.
    hj = (jnp.dot(out_x, j1x_ref[...], preferred_element_type=f32)
          + jnp.dot(z_ref[...], j1z_ref[...], preferred_element_type=f32)
          + jb1_ref[...])
    hj = jnp.maximum(hj, 0.0)
    hj = jnp.maximum(jnp.dot(hj, j2_ref[...], preferred_element_type=f32)
                     + jb2_ref[...], 0.0)
    out = jnp.dot(hj, j3_ref[...], preferred_element_type=f32) + jb3_ref[...]
    o_ref[...] = out.astype(o_ref.dtype)             # only HBM write: [B, 1]


# ----------------------------------------------------------- wrapper glue ---
def _conv1_patches(x):
    """NCHW -> conv1 im2col patch matrix [B*OH1*OW1, C*KH*KW], columns (c,i,j)-major.

    This is the only per-call XLA glue left (a single tiny fusion over the 4 KB
    input); everything downstream runs inside the fused Pallas kernel."""
    b, c, h, w = x.shape
    oh, ow = h // STRIDE, w // STRIDE
    xp = jnp.pad(x, ((0, 0), (0, 0), (PAD, PAD), (PAD, PAD)))
    blocks = [xp[:, :, i:i + STRIDE * oh:STRIDE, j:j + STRIDE * ow:STRIDE]
              for i in range(KSIZE) for j in range(KSIZE)]       # each [B, C, OH, OW]
    pk = jnp.stack(blocks, axis=-1)                  # [B, C, OH, OW, KH*KW]
    pk = pk.transpose(0, 2, 3, 1, 4)                 # [B, OH, OW, C, KH*KW]
    return pk.reshape(b * oh * ow, c * KSIZE * KSIZE)


def _build_conv2_selection(batch):
    """Constant 0/1 matrices gathering conv1-output rows into conv2 patch rows.

    sel[p, r, m] = 1 iff conv2 output row r = (oh2, ow2, b) at kernel position
    p = (i, j) reads conv1 output row m = (b, oh1, ow1) with
    oh1 = 2*oh2 + i - 1, ow1 = 2*ow2 + j - 1 (out-of-range -> all-zero row,
    which implements Conv2d padding=1 for free)."""
    rows = OH2 * OW2 * batch
    cols = batch * OH1 * OW1
    sel = np.zeros((NPOS, rows, cols), np.float32)
    for i in range(KSIZE):
        for j in range(KSIZE):
            p = i * KSIZE + j
            for oh2 in range(OH2):
                for ow2 in range(OW2):
                    oh1 = STRIDE * oh2 + i - PAD
                    ow1 = STRIDE * ow2 + j - PAD
                    if 0 <= oh1 < OH1 and 0 <= ow1 < OW1:
                        for b in range(batch):
                            r = (oh2 * OW2 + ow2) * batch + b
                            m = (b * OH1 + oh1) * OW1 + ow1
                            sel[p, r, m] = 1.0
    return jnp.asarray(sel)


# -------------------------------------------------------------- parameters ---
def init_torch_params(key):
    """Parameters in PyTorch layout ([out, in], [OC, IC, KH, KW])."""
    ks = jax.random.split(key, 14)
    s = 0.1
    p = {}
    p["W1"] = s * jax.random.normal(ks[0], (HIDDEN_CHANNELS, IN_CHANNELS, KSIZE, KSIZE), jnp.float32)
    p["b1"] = s * jax.random.normal(ks[1], (HIDDEN_CHANNELS,), jnp.float32)
    p["W2"] = s * jax.random.normal(ks[2], (HIDDEN_CHANNELS, HIDDEN_CHANNELS, KSIZE, KSIZE), jnp.float32)
    p["b2"] = s * jax.random.normal(ks[3], (HIDDEN_CHANNELS,), jnp.float32)
    p["G1"] = s * jax.random.normal(ks[4], (HIDDEN_DIM, GF_IN), jnp.float32)
    p["gb1"] = s * jax.random.normal(ks[5], (HIDDEN_DIM,), jnp.float32)
    p["G2"] = s * jax.random.normal(ks[6], (HIDDEN_DIM, HIDDEN_DIM), jnp.float32)
    p["gb2"] = s * jax.random.normal(ks[7], (HIDDEN_DIM,), jnp.float32)
    p["J1"] = s * jax.random.normal(ks[8], (JOINT_DIM, HIDDEN_DIM + N_LATENTS), jnp.float32)
    p["jb1"] = s * jax.random.normal(ks[9], (JOINT_DIM,), jnp.float32)
    p["J2"] = s * jax.random.normal(ks[10], (JOINT_DIM, JOINT_DIM), jnp.float32)
    p["jb2"] = s * jax.random.normal(ks[11], (JOINT_DIM,), jnp.float32)
    p["J3"] = s * jax.random.normal(ks[12], (1, JOINT_DIM), jnp.float32)
    p["jb3"] = s * jax.random.normal(ks[13], (1,), jnp.float32)
    return p


def prepare_params(tp, batch=BATCH):
    """One-time layout plumbing: permute/split torch-layout weights into the
    MXU-friendly layouts the fused kernel consumes (nothing is cast or reshaped
    per forward call)."""
    kp = {}
    kp["w1"] = tp["W1"].reshape(HIDDEN_CHANNELS, IN_CHANNELS * NPOS).T      # [64, 32], K = (c,i,j)
    kp["b1"] = tp["b1"].reshape(1, -1)
    kp["sel2"] = _build_conv2_selection(batch)                              # [16, B*16, B*64]
    kp["w2"] = tp["W2"].transpose(2, 3, 1, 0).reshape(NPOS, HIDDEN_CHANNELS, HIDDEN_CHANNELS)
    kp["b2"] = tp["b2"].reshape(1, -1)
    # gf linear 1: torch flattens NCHW -> feature index c*16 + (oh2*4 + ow2)
    kp["gw1"] = tp["G1"].reshape(HIDDEN_DIM, HIDDEN_CHANNELS, OH2 * OW2).transpose(2, 1, 0)
    kp["gb1"] = tp["gb1"].reshape(1, -1)
    kp["gw2"] = tp["G2"].T
    kp["gb2"] = tp["gb2"].reshape(1, -1)
    # infer_joint: split first linear so torch.cat((output_x, z), 1) never materialises
    kp["j1x"] = tp["J1"][:, :HIDDEN_DIM].T                                  # [32, 64]
    kp["j1z"] = tp["J1"][:, HIDDEN_DIM:].T                                  # [10, 64]
    kp["jb1"] = tp["jb1"].reshape(1, -1)
    kp["j2"] = tp["J2"].T
    kp["jb2"] = tp["jb2"].reshape(1, -1)
    kp["j3"] = tp["J3"].T                                                   # [64, 1]
    kp["jb3"] = tp["jb3"].reshape(1, -1)
    return kp


# ------------------------------------------------------------ forward pass ---
def _fused_forward(p1, z, kp):
    batch = z.shape[0]
    operands = (p1, z, kp["w1"], kp["b1"], kp["sel2"], kp["w2"], kp["b2"],
                kp["gw1"], kp["gb1"], kp["gw2"], kp["gb2"],
                kp["j1x"], kp["j1z"], kp["jb1"], kp["j2"], kp["jb2"],
                kp["j3"], kp["jb3"])
    m1 = p1.shape[0]
    rows2 = kp["sel2"].shape[1]
    flops = 2 * (m1 * p1.shape[1] * HIDDEN_CHANNELS
                 + NPOS * rows2 * m1 * HIDDEN_CHANNELS
                 + NPOS * rows2 * HIDDEN_CHANNELS * HIDDEN_CHANNELS
                 + OH2 * OW2 * batch * HIDDEN_CHANNELS * HIDDEN_DIM
                 + batch * HIDDEN_DIM * HIDDEN_DIM
                 + batch * (HIDDEN_DIM + N_LATENTS) * JOINT_DIM
                 + batch * JOINT_DIM * JOINT_DIM
                 + batch * JOINT_DIM)
    bytes_accessed = sum(int(np.prod(a.shape)) * a.dtype.itemsize for a in operands) + batch * 4
    return pl.pallas_call(
        _burgess_disc_kernel,
        out_shape=jax.ShapeDtypeStruct((batch, 1), jnp.float32),
        in_specs=[_VMEM] * len(operands),
        out_specs=_VMEM,
        cost_estimate=pl.CostEstimate(flops=flops, transcendentals=0,
                                      bytes_accessed=bytes_accessed),
    )(*operands)


def burgess_discriminator_forward(kp, x, z):
    """forward(x, z): output = infer_joint(cat(infer_x(x), z)) -- one Pallas call."""
    return _fused_forward(_conv1_patches(x), z, kp)


# --------------------------------------------------- pure-JAX reference ---
def reference_forward(tp, x, z):
    """XLA reference mirroring the PyTorch module (for correctness checking)."""
    dn = ("NCHW", "OIHW", "NCHW")
    h = lax.conv_general_dilated(x, tp["W1"], (STRIDE, STRIDE),
                                 ((PAD, PAD), (PAD, PAD)), dimension_numbers=dn)
    h = jax.nn.relu(h + tp["b1"][None, :, None, None])
    h = lax.conv_general_dilated(h, tp["W2"], (STRIDE, STRIDE),
                                 ((PAD, PAD), (PAD, PAD)), dimension_numbers=dn)
    h = jax.nn.relu(h + tp["b2"][None, :, None, None])
    hf = h.reshape(h.shape[0], -1)                   # torch .view(B, -1) on NCHW
    g = jax.nn.relu(hf @ tp["G1"].T + tp["gb1"])
    out_x = jax.nn.relu(g @ tp["G2"].T + tp["gb2"])
    ji = jnp.concatenate([out_x, z], axis=1)
    o = jax.nn.relu(ji @ tp["J1"].T + tp["jb1"])
    o = jax.nn.relu(o @ tp["J2"].T + tp["jb2"])
    return o @ tp["J3"].T + tp["jb3"]


# --------------------------------------------------------------------- main ---
if __name__ == "__main__":
    key = jax.random.PRNGKey(0)
    kparam, kx, kz = jax.random.split(key, 3)
    torch_params = init_torch_params(kparam)
    kernel_params = prepare_params(torch_params)       # one-time layout prep

    x = jax.random.normal(kx, (BATCH, IN_CHANNELS, SPATIAL, SPATIAL), jnp.float32)
    z = jax.random.normal(kz, (BATCH, N_LATENTS), jnp.float32)

    fwd = jax.jit(burgess_discriminator_forward)
    out = jax.block_until_ready(fwd(kernel_params, x, z))
    assert out.shape == (BATCH, 1), out.shape
    assert out.dtype == jnp.float32

    ref = jax.block_until_ready(jax.jit(reference_forward)(torch_params, x, z))
    max_err = float(jnp.max(jnp.abs(out - ref)))
    tol = 5e-3 + 5e-2 * float(jnp.max(jnp.abs(ref)))   # covers MXU mixed-precision modes
    assert max_err < tol, f"mismatch vs reference: {max_err} (tol {tol})"
    print("KERNEL_OK")
</pallas_src>

<mosaic_0001>
module attributes {stable_mosaic.version = 11 : i64} {
  func.func @_burgess_disc_kernel(%arg0: memref<128x64xf32, #tpu.memory_space<vmem>>, %arg1: memref<2x10xf32, #tpu.memory_space<vmem>>, %arg2: memref<64x32xf32, #tpu.memory_space<vmem>>, %arg3: memref<1x32xf32, #tpu.memory_space<vmem>>, %arg4: memref<16x32x128xf32, #tpu.memory_space<vmem>>, %arg5: memref<16x32x32xf32, #tpu.memory_space<vmem>>, %arg6: memref<1x32xf32, #tpu.memory_space<vmem>>, %arg7: memref<16x32x32xf32, #tpu.memory_space<vmem>>, %arg8: memref<1x32xf32, #tpu.memory_space<vmem>>, %arg9: memref<32x32xf32, #tpu.memory_space<vmem>>, %arg10: memref<1x32xf32, #tpu.memory_space<vmem>>, %arg11: memref<32x64xf32, #tpu.memory_space<vmem>>, %arg12: memref<10x64xf32, #tpu.memory_space<vmem>>, %arg13: memref<1x64xf32, #tpu.memory_space<vmem>>, %arg14: memref<64x64xf32, #tpu.memory_space<vmem>>, %arg15: memref<1x64xf32, #tpu.memory_space<vmem>>, %arg16: memref<64x1xf32, #tpu.memory_space<vmem>>, %arg17: memref<1x1xf32, #tpu.memory_space<vmem>>, %arg18: memref<2x1xf32, #tpu.memory_space<vmem>>) attributes {dimension_semantics = [], scalar_prefetch = 0 : i64, scratch_operands = 0 : i64, tpu.core_type = #tpu.core_type<tc>} {
    %c0 = arith.constant 0 : index
    %c0_0 = arith.constant 0 : index
    %0 = vector.load %arg0[%c0, %c0_0] : memref<128x64xf32, #tpu.memory_space<vmem>>, vector<128x64xf32>
    %c0_1 = arith.constant 0 : index
    %c0_2 = arith.constant 0 : index
    %1 = vector.load %arg2[%c0_1, %c0_2] : memref<64x32xf32, #tpu.memory_space<vmem>>, vector<64x32xf32>
    %cst = arith.constant dense<0.000000e+00> : vector<128x32xf32>
    %2 = tpu.matmul %0, %1, %cst {dimension_numbers = #tpu.dot_dimension_numbers<[1], [0], [0], [1], [0, 0, 1, 1], [], []>} : vector<128x64xf32>, vector<64x32xf32>, vector<128x32xf32> -> vector<128x32xf32>
    %c0_3 = arith.constant 0 : index
    %c0_4 = arith.constant 0 : index
    %3 = vector.load %arg3[%c0_3, %c0_4] : memref<1x32xf32, #tpu.memory_space<vmem>>, vector<1x32xf32>
    %4 = vector.broadcast %3 : vector<1x32xf32> to vector<128x32xf32>
    %5 = arith.addf %2, %4 : vector<128x32xf32>
    %cst_5 = arith.constant 0.000000e+00 : f32
    %6 = vector.broadcast %cst_5 : f32 to vector<128x32xf32>
    %7 = arith.maximumf %5, %6 : vector<128x32xf32>
    %cst_6 = arith.constant 0.000000e+00 : f32
    %8 = vector.broadcast %cst_6 : f32 to vector<32x32xf32>
    %c0_7 = arith.constant 0 : index
    %c0_8 = arith.constant 0 : index
    %c0_9 = arith.constant 0 : index
    %9 = vector.load %arg4[%c0_7, %c0_8, %c0_9] : memref<16x32x128xf32, #tpu.memory_space<vmem>>, vector<1x32x128xf32>
    %10 = vector.shape_cast %9 : vector<1x32x128xf32> to vector<32x128xf32>
    %cst_10 = arith.constant dense<0.000000e+00> : vector<32x32xf32>
    %11 = tpu.matmul %10, %7, %cst_10 {dimension_numbers = #tpu.dot_dimension_numbers<[1], [0], [0], [1], [0, 0, 1, 1], [], []>} : vector<32x128xf32>, vector<128x32xf32>, vector<32x32xf32> -> vector<32x32xf32>
    %c0_11 = arith.constant 0 : index
    %c0_12 = arith.constant 0 : index
    %c0_13 = arith.constant 0 : index
    %12 = vector.load %arg5[%c0_11, %c0_12, %c0_13] : memref<16x32x32xf32, #tpu.memory_space<vmem>>, vector<1x32x32xf32>
    %13 = vector.shape_cast %12 : vector<1x32x32xf32> to vector<32x32xf32>
    %cst_14 = arith.constant dense<0.000000e+00> : vector<32x32xf32>
    %14 = tpu.matmul %11, %13, %cst_14 {dimension_numbers = #tpu.dot_dimension_numbers<[1], [0], [0], [1], [0, 0, 1, 1], [], []>} : vector<32x32xf32>, vector<32x32xf32>, vector<32x32xf32> -> vector<32x32xf32>
    %15 = arith.addf %8, %14 : vector<32x32xf32>
    %c1 = arith.constant 1 : index
    %c0_15 = arith.constant 0 : index
    %c0_16 = arith.constant 0 : index
    %16 = vector.load %arg4[%c1, %c0_15, %c0_16] : memref<16x32x128xf32, #tpu.memory_space<vmem>>, vector<1x32x128xf32>
    %17 = vector.shape_cast %16 : vector<1x32x128xf32> to vector<32x128xf32>
    %cst_17 = arith.constant dense<0.000000e+00> : vector<32x32xf32>
    %18 = tpu.matmul %17, %7, %cst_17 {dimension_numbers = #tpu.dot_dimension_numbers<[1], [0], [0], [1], [0, 0, 1, 1], [], []>} : vector<32x128xf32>, vector<128x32xf32>, vector<32x32xf32> -> vector<32x32xf32>
    %c1_18 = arith.constant 1 : index
    %c0_19 = arith.constant 0 : index
    %c0_20 = arith.constant 0 : index
    %19 = vector.load %arg5[%c1_18, %c0_19, %c0_20] : memref<16x32x32xf32, #tpu.memory_space<vmem>>, vector<1x32x32xf32>
    %20 = vector.shape_cast %19 : vector<1x32x32xf32> to vector<32x32xf32>
    %cst_21 = arith.constant dense<0.000000e+00> : vector<32x32xf32>
    %21 = tpu.matmul %18, %20, %cst_21 {dimension_numbers = #tpu.dot_dimension_numbers<[1], [0], [0], [1], [0, 0, 1, 1], [], []>} : vector<32x32xf32>, vector<32x32xf32>, vector<32x32xf32> -> vector<32x32xf32>
    %22 = arith.addf %15, %21 : vector<32x32xf32>
    %c2 = arith.constant 2 : index
    %c0_22 = arith.constant 0 : index
    %c0_23 = arith.constant 0 : index
    %23 = vector.load %arg4[%c2, %c0_22, %c0_23] : memref<16x32x128xf32, #tpu.memory_space<vmem>>, vector<1x32x128xf32>
    %24 = vector.shape_cast %23 : vector<1x32x128xf32> to vector<32x128xf32>
    %cst_24 = arith.constant dense<0.000000e+00> : vector<32x32xf32>
    %25 = tpu.matmul %24, %7, %cst_24 {dimension_numbers = #tpu.dot_dimension_numbers<[1], [0], [0], [1], [0, 0, 1, 1], [], []>} : vector<32x128xf32>, vector<128x32xf32>, vector<32x32xf32> -> vector<32x32xf32>
    %c2_25 = arith.constant 2 : index
    %c0_26 = arith.constant 0 : index
    %c0_27 = arith.constant 0 : index
    %26 = vector.load %arg5[%c2_25, %c0_26, %c0_27] : memref<16x32x32xf32, #tpu.memory_space<vmem>>, vector<1x32x32xf32>
    %27 = vector.shape_cast %26 : vector<1x32x32xf32> to vector<32x32xf32>
    %cst_28 = arith.constant dense<0.000000e+00> : vector<32x32xf32>
    %28 = tpu.matmul %25, %27, %cst_28 {dimension_numbers = #tpu.dot_dimension_numbers<[1], [0], [0], [1], [0, 0, 1, 1], [], []>} : vector<32x32xf32>, vector<32x32xf32>, vector<32x32xf32> -> vector<32x32xf32>
    %29 = arith.addf %22, %28 : vector<32x32xf32>
    %c3 = arith.constant 3 : index
    %c0_29 = arith.constant 0 : index
    %c0_30 = arith.constant 0 : index
    %30 = vector.load %arg4[%c3, %c0_29, %c0_30] : memref<16x32x128xf32, #tpu.memory_space<vmem>>, vector<1x32x128xf32>
    %31 = vector.shape_cast %30 : vector<1x32x128xf32> to vector<32x128xf32>
    %cst_31 = arith.constant dense<0.000000e+00> : vector<32x32xf32>
    %32 = tpu.matmul %31, %7, %cst_31 {dimension_numbers = #tpu.dot_dimension_numbers<[1], [0], [0], [1], [0, 0, 1, 1], [], []>} : vector<32x128xf32>, vector<128x32xf32>, vector<32x32xf32> -> vector<32x32xf32>
    %c3_32 = arith.constant 3 : index
    %c0_33 = arith.constant 0 : index
    %c0_34 = arith.constant 0 : index
    %33 = vector.load %arg5[%c3_32, %c0_33, %c0_34] : memref<16x32x32xf32, #tpu.memory_space<vmem>>, vector<1x32x32xf32>
    %34 = vector.shape_cast %33 : vector<1x32x32xf32> to vector<32x32xf32>
    %cst_35 = arith.constant dense<0.000000e+00> : vector<32x32xf32>
    %35 = tpu.matmul %32, %34, %cst_35 {dimension_numbers = #tpu.dot_dimension_numbers<[1], [0], [0], [1], [0, 0, 1, 1], [], []>} : vector<32x32xf32>, vector<32x32xf32>, vector<32x32xf32> -> vector<32x32xf32>
    %36 = arith.addf %29, %35 : vector<32x32xf32>
    %c4 = arith.constant 4 : index
    %c0_36 = arith.constant 0 : index
    %c0_37 = arith.constant 0 : index
    %37 = vector.load %arg4[%c4, %c0_36, %c0_37] : memref<16x32x128xf32, #tpu.memory_space<vmem>>, vector<1x32x128xf32>
    %38 = vector.shape_cast %37 : vector<1x32x128xf32> to vector<32x128xf32>
    %cst_38 = arith.constant dense<0.000000e+00> : vector<32x32xf32>
    %39 = tpu.matmul %38, %7, %cst_38 {dimension_numbers = #tpu.dot_dimension_numbers<[1], [0], [0], [1], [0, 0, 1, 1], [], []>} : vector<32x128xf32>, vector<128x32xf32>, vector<32x32xf32> -> vector<32x32xf32>
    %c4_39 = arith.constant 4 : index
    %c0_40 = arith.constant 0 : index
    %c0_41 = arith.constant 0 : index
    %40 = vector.load %arg5[%c4_39, %c0_40, %c0_41] : memref<16x32x32xf32, #tpu.memory_space<vmem>>, vector<1x32x32xf32>
    %41 = vector.shape_cast %40 : vector<1x32x32xf32> to vector<32x32xf32>
    %cst_42 = arith.constant dense<0.000000e+00> : vector<32x32xf32>
    %42 = tpu.matmul %39, %41, %cst_42 {dimension_numbers = #tpu.dot_dimension_numbers<[1], [0], [0], [1], [0, 0, 1, 1], [], []>} : vector<32x32xf32>, vector<32x32xf32>, vector<32x32xf32> -> vector<32x32xf32>
    %43 = arith.addf %36, %42 : vector<32x32xf32>
    %c5 = arith.constant 5 : index
    %c0_43 = arith.constant 0 : index
    %c0_44 = arith.constant 0 : index
    %44 = vector.load %arg4[%c5, %c0_43, %c0_44] : memref<16x32x128xf32, #tpu.memory_space<vmem>>, vector<1x32x128xf32>
    %45 = vector.shape_cast %44 : vector<1x32x128xf32> to vector<32x128xf32>
    %cst_45 = arith.constant dense<0.000000e+00> : vector<32x32xf32>
    %46 = tpu.matmul %45, %7, %cst_45 {dimension_numbers = #tpu.dot_dimension_numbers<[1], [0], [0], [1], [0, 0, 1, 1], [], []>} : vector<32x128xf32>, vector<128x32xf32>, vector<32x32xf32> -> vector<32x32xf32>
    %c5_46 = arith.constant 5 : index
    %c0_47 = arith.constant 0 : index
    %c0_48 = arith.constant 0 : index
    %47 = vector.load %arg5[%c5_46, %c0_47, %c0_48] : memref<16x32x32xf32, #tpu.memory_space<vmem>>, vector<1x32x32xf32>
    %48 = vector.shape_cast %47 : vector<1x32x32xf32> to vector<32x32xf32>
    %cst_49 = arith.constant dense<0.000000e+00> : vector<32x32xf32>
    %49 = tpu.matmul %46, %48, %cst_49 {dimension_numbers = #tpu.dot_dimension_numbers<[1], [0], [0], [1], [0, 0, 1, 1], [], []>} : vector<32x32xf32>, vector<32x32xf32>, vector<32x32xf32> -> vector<32x32xf32>
    %50 = arith.addf %43, %49 : vector<32x32xf32>
    %c6 = arith.constant 6 : index
    %c0_50 = arith.constant 0 : index
    %c0_51 = arith.constant 0 : index
    %51 = vector.load %arg4[%c6, %c0_50, %c0_51] : memref<16x32x128xf32, #tpu.memory_space<vmem>>, vector<1x32x128xf32>
    %52 = vector.shape_cast %51 : vector<1x32x128xf32> to vector<32x128xf32>
    %cst_52 = arith.constant dense<0.000000e+00> : vector<32x32xf32>
    %53 = tpu.matmul %52, %7, %cst_52 {dimension_numbers = #tpu.dot_dimension_numbers<[1], [0], [0], [1], [0, 0, 1, 1], [], []>} : vector<32x128xf32>, vector<128x32xf32>, vector<32x32xf32> -> vector<32x32xf32>
    %c6_53 = arith.constant 6 : index
    %c0_54 = arith.constant 0 : index
    %c0_55 = arith.constant 0 : index
    %54 = vector.load %arg5[%c6_53, %c0_54, %c0_55] : memref<16x32x32xf32, #tpu.memory_space<vmem>>, vector<1x32x32xf32>
    %55 = vector.shape_cast %54 : vector<1x32x32xf32> to vector<32x32xf32>
    %cst_56 = arith.constant dense<0.000000e+00> : vector<32x32xf32>
    %56 = tpu.matmul %53, %55, %cst_56 {dimension_numbers = #tpu.dot_dimension_numbers<[1], [0], [0], [1], [0, 0, 1, 1], [], []>} : vector<32x32xf32>, vector<32x32xf32>, vector<32x32xf32> -> vector<32x32xf32>
    %57 = arith.addf %50, %56 : vector<32x32xf32>
    %c7 = arith.constant 7 : index
    %c0_57 = arith.constant 0 : index
    %c0_58 = arith.constant 0 : index
    %58 = vector.load %arg4[%c7, %c0_57, %c0_58] : memref<16x32x128xf32, #tpu.memory_space<vmem>>, vector<1x32x128xf32>
    %59 = vector.shape_cast %58 : vector<1x32x128xf32> to vector<32x128xf32>
    %cst_59 = arith.constant dense<0.000000e+00> : vector<32x32xf32>
    %60 = tpu.matmul %59, %7, %cst_59 {dimension_numbers = #tpu.dot_dimension_numbers<[1], [0], [0], [1], [0, 0, 1, 1], [], []>} : vector<32x128xf32>, vector<128x32xf32>, vector<32x32xf32> -> vector<32x32xf32>
    %c7_60 = arith.constant 7 : index
    %c0_61 = arith.constant 0 : index
    %c0_62 = arith.constant 0 : index
    %61 = vector.load %arg5[%c7_60, %c0_61, %c0_62] : memref<16x32x32xf32, #tpu.memory_space<vmem>>, vector<1x32x32xf32>
    %62 = vector.shape_cast %61 : vector<1x32x32xf32> to vector<32x32xf32>
    %cst_63 = arith.constant dense<0.000000e+00> : vector<32x32xf32>
    %63 = tpu.matmul %60, %62, %cst_63 {dimension_numbers = #tpu.dot_dimension_numbers<[1], [0], [0], [1], [0, 0, 1, 1], [], []>} : vector<32x32xf32>, vector<32x32xf32>, vector<32x32xf32> -> vector<32x32xf32>
    %64 = arith.addf %57, %63 : vector<32x32xf32>
    %c8 = arith.constant 8 : index
    %c0_64 = arith.constant 0 : index
    %c0_65 = arith.constant 0 : index
    %65 = vector.load %arg4[%c8, %c0_64, %c0_65] : memref<16x32x128xf32, #tpu.memory_space<vmem>>, vector<1x32x128xf32>
    %66 = vector.shape_cast %65 : vector<1x32x128xf32> to vector<32x128xf32>
    %cst_66 = arith.constant dense<0.000000e+00> : vector<32x32xf32>
    %67 = tpu.matmul %66, %7, %cst_66 {dimension_numbers = #tpu.dot_dimension_numbers<[1], [0], [0], [1], [0, 0, 1, 1], [], []>} : vector<32x128xf32>, vector<128x32xf32>, vector<32x32xf32> -> vector<32x32xf32>
    %c8_67 = arith.constant 8 : index
    %c0_68 = arith.constant 0 : index
    %c0_69 = arith.constant 0 : index
    %68 = vector.load %arg5[%c8_67, %c0_68, %c0_69] : memref<16x32x32xf32, #tpu.memory_space<vmem>>, vector<1x32x32xf32>
    %69 = vector.shape_cast %68 : vector<1x32x32xf32> to vector<32x32xf32>
    %cst_70 = arith.constant dense<0.000000e+00> : vector<32x32xf32>
    %70 = tpu.matmul %67, %69, %cst_70 {dimension_numbers = #tpu.dot_dimension_numbers<[1], [0], [0], [1], [0, 0, 1, 1], [], []>} : vector<32x32xf32>, vector<32x32xf32>, vector<32x32xf32> -> vector<32x32xf32>
    %71 = arith.addf %64, %70 : vector<32x32xf32>
    %c9 = arith.constant 9 : index
    %c0_71 = arith.constant 0 : index
    %c0_72 = arith.constant 0 : index
    %72 = vector.load %arg4[%c9, %c0_71, %c0_72] : memref<16x32x128xf32, #tpu.memory_space<vmem>>, vector<1x32x128xf32>
    %73 = vector.shape_cast %72 : vector<1x32x128xf32> to vector<32x128xf32>
    %cst_73 = arith.constant dense<0.000000e+00> : vector<32x32xf32>
    %74 = tpu.matmul %73, %7, %cst_73 {dimension_numbers = #tpu.dot_dimension_numbers<[1], [0], [0], [1], [0, 0, 1, 1], [], []>} : vector<32x128xf32>, vector<128x32xf32>, vector<32x32xf32> -> vector<32x32xf32>
    %c9_74 = arith.constant 9 : index
    %c0_75 = arith.constant 0 : index
    %c0_76 = arith.constant 0 : index
    %75 = vector.load %arg5[%c9_74, %c0_75, %c0_76] : memref<16x32x32xf32, #tpu.memory_space<vmem>>, vector<1x32x32xf32>
    %76 = vector.shape_cast %75 : vector<1x32x32xf32> to vector<32x32xf32>
    %cst_77 = arith.constant dense<0.000000e+00> : vector<32x32xf32>
    %77 = tpu.matmul %74, %76, %cst_77 {dimension_numbers = #tpu.dot_dimension_numbers<[1], [0], [0], [1], [0, 0, 1, 1], [], []>} : vector<32x32xf32>, vector<32x32xf32>, vector<32x32xf32> -> vector<32x32xf32>
    %78 = arith.addf %71, %77 : vector<32x32xf32>
    %c10 = arith.constant 10 : index
    %c0_78 = arith.constant 0 : index
    %c0_79 = arith.constant 0 : index
    %79 = vector.load %arg4[%c10, %c0_78, %c0_79] : memref<16x32x128xf32, #tpu.memory_space<vmem>>, vector<1x32x128xf32>
    %80 = vector.shape_cast %79 : vector<1x32x128xf32> to vector<32x128xf32>
    %cst_80 = arith.constant dense<0.000000e+00> : vector<32x32xf32>
    %81 = tpu.matmul %80, %7, %cst_80 {dimension_numbers = #tpu.dot_dimension_numbers<[1], [0], [0], [1], [0, 0, 1, 1], [], []>} : vector<32x128xf32>, vector<128x32xf32>, vector<32x32xf32> -> vector<32x32xf32>
    %c10_81 = arith.constant 10 : index
    %c0_82 = arith.constant 0 : index
    %c0_83 = arith.constant 0 : index
    %82 = vector.load %arg5[%c10_81, %c0_82, %c0_83] : memref<16x32x32xf32, #tpu.memory_space<vmem>>, vector<1x32x32xf32>
    %83 = vector.shape_cast %82 : vector<1x32x32xf32> to vector<32x32xf32>
    %cst_84 = arith.constant dense<0.000000e+00> : vector<32x32xf32>
    %84 = tpu.matmul %81, %83, %cst_84 {dimension_numbers = #tpu.dot_dimension_numbers<[1], [0], [0], [1], [0, 0, 1, 1], [], []>} : vector<32x32xf32>, vector<32x32xf32>, vector<32x32xf32> -> vector<32x32xf32>
    %85 = arith.addf %78, %84 : vector<32x32xf32>
    %c11 = arith.constant 11 : index
    %c0_85 = arith.constant 0 : index
    %c0_86 = arith.constant 0 : index
    %86 = vector.load %arg4[%c11, %c0_85, %c0_86] : memref<16x32x128xf32, #tpu.memory_space<vmem>>, vector<1x32x128xf32>
    %87 = vector.shape_cast %86 : vector<1x32x128xf32> to vector<32x128xf32>
    %cst_87 = arith.constant dense<0.000000e+00> : vector<32x32xf32>
    %88 = tpu.matmul %87, %7, %cst_87 {dimension_numbers = #tpu.dot_dimension_numbers<[1], [0], [0], [1], [0, 0, 1, 1], [], []>} : vector<32x128xf32>, vector<128x32xf32>, vector<32x32xf32> -> vector<32x32xf32>
    %c11_88 = arith.constant 11 : index
    %c0_89 = arith.constant 0 : index
    %c0_90 = arith.constant 0 : index
    %89 = vector.load %arg5[%c11_88, %c0_89, %c0_90] : memref<16x32x32xf32, #tpu.memory_space<vmem>>, vector<1x32x32xf32>
    %90 = vector.shape_cast %89 : vector<1x32x32xf32> to vector<32x32xf32>
    %cst_91 = arith.constant dense<0.000000e+00> : vector<32x32xf32>
    %91 = tpu.matmul %88, %90, %cst_91 {dimension_numbers = #tpu.dot_dimension_numbers<[1], [0], [0], [1], [0, 0, 1, 1], [], []>} : vector<32x32xf32>, vector<32x32xf32>, vector<32x32xf32> -> vector<32x32xf32>
    %92 = arith.addf %85, %91 : vector<32x32xf32>
    %c12 = arith.constant 12 : index
    %c0_92 = arith.constant 0 : index
    %c0_93 = arith.constant 0 : index
    %93 = vector.load %arg4[%c12, %c0_92, %c0_93] : memref<16x32x128xf32, #tpu.memory_space<vmem>>, vector<1x32x128xf32>
    %94 = vector.shape_cast %93 : vector<1x32x128xf32> to vector<32x128xf32>
    %cst_94 = arith.constant dense<0.000000e+00> : vector<32x32xf32>
    %95 = tpu.matmul %94, %7, %cst_94 {dimension_numbers = #tpu.dot_dimension_numbers<[1], [0], [0], [1], [0, 0, 1, 1], [], []>} : vector<32x128xf32>, vector<128x32xf32>, vector<32x32xf32> -> vector<32x32xf32>
    %c12_95 = arith.constant 12 : index
    %c0_96 = arith.constant 0 : index
    %c0_97 = arith.constant 0 : index
    %96 = vector.load %arg5[%c12_95, %c0_96, %c0_97] : memref<16x32x32xf32, #tpu.memory_space<vmem>>, vector<1x32x32xf32>
    %97 = vector.shape_cast %96 : vector<1x32x32xf32> to vector<32x32xf32>
    %cst_98 = arith.constant dense<0.000000e+00> : vector<32x32xf32>
    %98 = tpu.matmul %95, %97, %cst_98 {dimension_numbers = #tpu.dot_dimension_numbers<[1], [0], [0], [1], [0, 0, 1, 1], [], []>} : vector<32x32xf32>, vector<32x32xf32>, vector<32x32xf32> -> vector<32x32xf32>
    %99 = arith.addf %92, %98 : vector<32x32xf32>
    %c13 = arith.constant 13 : index
    %c0_99 = arith.constant 0 : index
    %c0_100 = arith.constant 0 : index
    %100 = vector.load %arg4[%c13, %c0_99, %c0_100] : memref<16x32x128xf32, #tpu.memory_space<vmem>>, vector<1x32x128xf32>
    %101 = vector.shape_cast %100 : vector<1x32x128xf32> to vector<32x128xf32>
    %cst_101 = arith.constant dense<0.000000e+00> : vector<32x32xf32>
    %102 = tpu.matmul %101, %7, %cst_101 {dimension_numbers = #tpu.dot_dimension_numbers<[1], [0], [0], [1], [0, 0, 1, 1], [], []>} : vector<32x128xf32>, vector<128x32xf32>, vector<32x32xf32> -> vector<32x32xf32>
    %c13_102 = arith.constant 13 : index
    %c0_103 = arith.constant 0 : index
    %c0_104 = arith.constant 0 : index
    %103 = vector.load %arg5[%c13_102, %c0_103, %c0_104] : memref<16x32x32xf32, #tpu.memory_space<vmem>>, vector<1x32x32xf32>
    %104 = vector.shape_cast %103 : vector<1x32x32xf32> to vector<32x32xf32>
    %cst_105 = arith.constant dense<0.000000e+00> : vector<32x32xf32>
    %105 = tpu.matmul %102, %104, %cst_105 {dimension_numbers = #tpu.dot_dimension_numbers<[1], [0], [0], [1], [0, 0, 1, 1], [], []>} : vector<32x32xf32>, vector<32x32xf32>, vector<32x32xf32> -> vector<32x32xf32>
    %106 = arith.addf %99, %105 : vector<32x32xf32>
    %c14 = arith.constant 14 : index
    %c0_106 = arith.constant 0 : index
    %c0_107 = arith.constant 0 : index
    %107 = vector.load %arg4[%c14, %c0_106, %c0_107] : memref<16x32x128xf32, #tpu.memory_space<vmem>>, vector<1x32x128xf32>
    %108 = vector.shape_cast %107 : vector<1x32x128xf32> to vector<32x128xf32>
    %cst_108 = arith.constant dense<0.000000e+00> : vector<32x32xf32>
    %109 = tpu.matmul %108, %7, %cst_108 {dimension_numbers = #tpu.dot_dimension_numbers<[1], [0], [0], [1], [0, 0, 1, 1], [], []>} : vector<32x128xf32>, vector<128x32xf32>, vector<32x32xf32> -> vector<32x32xf32>
    %c14_109 = arith.constant 14 : index
    %c0_110 = arith.constant 0 : index
    %c0_111 = arith.constant 0 : index
    %110 = vector.load %arg5[%c14_109, %c0_110, %c0_111] : memref<16x32x32xf32, #tpu.memory_space<vmem>>, vector<1x32x32xf32>
    %111 = vector.shape_cast %110 : vector<1x32x32xf32> to vector<32x32xf32>
    %cst_112 = arith.constant dense<0.000000e+00> : vector<32x32xf32>
    %112 = tpu.matmul %109, %111, %cst_112 {dimension_numbers = #tpu.dot_dimension_numbers<[1], [0], [0], [1], [0, 0, 1, 1], [], []>} : vector<32x32xf32>, vector<32x32xf32>, vector<32x32xf32> -> vector<32x32xf32>
    %113 = arith.addf %106, %112 : vector<32x32xf32>
    %c15 = arith.constant 15 : index
    %c0_113 = arith.constant 0 : index
    %c0_114 = arith.constant 0 : index
    %114 = vector.load %arg4[%c15, %c0_113, %c0_114] : memref<16x32x128xf32, #tpu.memory_space<vmem>>, vector<1x32x128xf32>
    %115 = vector.shape_cast %114 : vector<1x32x128xf32> to vector<32x128xf32>
    %cst_115 = arith.constant dense<0.000000e+00> : vector<32x32xf32>
    %116 = tpu.matmul %115, %7, %cst_115 {dimension_numbers = #tpu.dot_dimension_numbers<[1], [0], [0], [1], [0, 0, 1, 1], [], []>} : vector<32x128xf32>, vector<128x32xf32>, vector<32x32xf32> -> vector<32x32xf32>
    %c15_116 = arith.constant 15 : index
    %c0_117 = arith.constant 0 : index
    %c0_118 = arith.constant 0 : index
    %117 = vector.load %arg5[%c15_116, %c0_117, %c0_118] : memref<16x32x32xf32, #tpu.memory_space<vmem>>, vector<1x32x32xf32>
    %118 = vector.shape_cast %117 : vector<1x32x32xf32> to vector<32x32xf32>
    %cst_119 = arith.constant dense<0.000000e+00> : vector<32x32xf32>
    %119 = tpu.matmul %116, %118, %cst_119 {dimension_numbers = #tpu.dot_dimension_numbers<[1], [0], [0], [1], [0, 0, 1, 1], [], []>} : vector<32x32xf32>, vector<32x32xf32>, vector<32x32xf32> -> vector<32x32xf32>
    %120 = arith.addf %113, %119 : vector<32x32xf32>
    %c0_120 = arith.constant 0 : index
    %c0_121 = arith.constant 0 : index
    %121 = vector.load %arg6[%c0_120, %c0_121] : memref<1x32xf32, #tpu.memory_space<vmem>>, vector<1x32xf32>
    %122 = vector.broadcast %121 : vector<1x32xf32> to vector<32x32xf32>
    %123 = arith.addf %120, %122 : vector<32x32xf32>
    %cst_122 = arith.constant 0.000000e+00 : f32
    %124 = vector.broadcast %cst_122 : f32 to vector<32x32xf32>
    %125 = arith.maximumf %123, %124 : vector<32x32xf32>
    %cst_123 = arith.constant 0.000000e+00 : f32
    %126 = vector.broadcast %cst_123 : f32 to vector<2x32xf32>
    %127 = vector.extract_strided_slice %125 {offsets = [0, 0], sizes = [2, 32], strides = [1, 1]} : vector<32x32xf32> to vector<2x32xf32>
    %c0_124 = arith.constant 0 : index
    %c0_125 = arith.constant 0 : index
    %c0_126 = arith.constant 0 : index
    %128 = vector.load %arg7[%c0_124, %c0_125, %c0_126] : memref<16x32x32xf32, #tpu.memory_space<vmem>>, vector<1x32x32xf32>
    %129 = vector.shape_cast %128 : vector<1x32x32xf32> to vector<32x32xf32>
    %cst_127 = arith.constant dense<0.000000e+00> : vector<2x32xf32>
    %130 = tpu.matmul %127, %129, %cst_127 {dimension_numbers = #tpu.dot_dimension_numbers<[1], [0], [0], [1], [0, 0, 1, 1], [], []>} : vector<2x32xf32>, vector<32x32xf32>, vector<2x32xf32> -> vector<2x32xf32>
    %131 = arith.addf %126, %130 : vector<2x32xf32>
    %132 = vector.extract_strided_slice %125 {offsets = [2, 0], sizes = [2, 32], strides = [1, 1]} : vector<32x32xf32> to vector<2x32xf32>
    %c1_128 = arith.constant 1 : index
    %c0_129 = arith.constant 0 : index
    %c0_130 = arith.constant 0 : index
    %133 = vector.load %arg7[%c1_128, %c0_129, %c0_130] : memref<16x32x32xf32, #tpu.memory_space<vmem>>, vector<1x32x32xf32>
    %134 = vector.shape_cast %133 : vector<1x32x32xf32> to vector<32x32xf32>
    %cst_131 = arith.constant dense<0.000000e+00> : vector<2x32xf32>
    %135 = tpu.matmul %132, %134, %cst_131 {dimension_numbers = #tpu.dot_dimension_numbers<[1], [0], [0], [1], [0, 0, 1, 1], [], []>} : vector<2x32xf32>, vector<32x32xf32>, vector<2x32xf32> -> vector<2x32xf32>
    %136 = arith.addf %131, %135 : vector<2x32xf32>
    %137 = vector.extract_strided_slice %125 {offsets = [4, 0], sizes = [2, 32], strides = [1, 1]} : vector<32x32xf32> to vector<2x32xf32>
    %c2_132 = arith.constant 2 : index
    %c0_133 = arith.constant 0 : index
    %c0_134 = arith.constant 0 : index
    %138 = vector.load %arg7[%c2_132, %c0_133, %c0_134] : memref<16x32x32xf32, #tpu.memory_space<vmem>>, vector<1x32x32xf32>
    %139 = vector.shape_cast %138 : vector<1x32x32xf32> to vector<32x32xf32>
    %cst_135 = arith.constant dense<0.000000e+00> : vector<2x32xf32>
    %140 = tpu.matmul %137, %139, %cst_135 {dimension_numbers = #tpu.dot_dimension_numbers<[1], [0], [0], [1], [0, 0, 1, 1], [], []>} : vector<2x32xf32>, vector<32x32xf32>, vector<2x32xf32> -> vector<2x32xf32>
    %141 = arith.addf %136, %140 : vector<2x32xf32>
    %142 = vector.extract_strided_slice %125 {offsets = [6, 0], sizes = [2, 32], strides = [1, 1]} : vector<32x32xf32> to vector<2x32xf32>
    %c3_136 = arith.constant 3 : index
    %c0_137 = arith.constant 0 : index
    %c0_138 = arith.constant 0 : index
    %143 = vector.load %arg7[%c3_136, %c0_137, %c0_138] : memref<16x32x32xf32, #tpu.memory_space<vmem>>, vector<1x32x32xf32>
    %144 = vector.shape_cast %143 : vector<1x32x32xf32> to vector<32x32xf32>
    %cst_139 = arith.constant dense<0.000000e+00> : vector<2x32xf32>
    %145 = tpu.matmul %142, %144, %cst_139 {dimension_numbers = #tpu.dot_dimension_numbers<[1], [0], [0], [1], [0, 0, 1, 1], [], []>} : vector<2x32xf32>, vector<32x32xf32>, vector<2x32xf32> -> vector<2x32xf32>
    %146 = arith.addf %141, %145 : vector<2x32xf32>
    %147 = vector.extract_strided_slice %125 {offsets = [8, 0], sizes = [2, 32], strides = [1, 1]} : vector<32x32xf32> to vector<2x32xf32>
    %c4_140 = arith.constant 4 : index
    %c0_141 = arith.constant 0 : index
    %c0_142 = arith.constant 0 : index
    %148 = vector.load %arg7[%c4_140, %c0_141, %c0_142] : memref<16x32x32xf32, #tpu.memory_space<vmem>>, vector<1x32x32xf32>
    %149 = vector.shape_cast %148 : vector<1x32x32xf32> to vector<32x32xf32>
    %cst_143 = arith.constant dense<0.000000e+00> : vector<2x32xf32>
    %150 = tpu.matmul %147, %149, %cst_143 {dimension_numbers = #tpu.dot_dimension_numbers<[1], [0], [0], [1], [0, 0, 1, 1], [], []>} : vector<2x32xf32>, vector<32x32xf32>, vector<2x32xf32> -> vector<2x32xf32>
    %151 = arith.addf %146, %150 : vector<2x32xf32>
    %152 = vector.extract_strided_slice %125 {offsets = [10, 0], sizes = [2, 32], strides = [1, 1]} : vector<32x32xf32> to vector<2x32xf32>
    %c5_144 = arith.constant 5 : index
    %c0_145 = arith.constant 0 : index
    %c0_146 = arith.constant 0 : index
    %153 = vector.load %arg7[%c5_144, %c0_145, %c0_146] : memref<16x32x32xf32, #tpu.memory_space<vmem>>, vector<1x32x32xf32>
    %154 = vector.shape_cast %153 : vector<1x32x32xf32> to vector<32x32xf32>
    %cst_147 = arith.constant dense<0.000000e+00> : vector<2x32xf32>
    %155 = tpu.matmul %152, %154, %cst_147 {dimension_numbers = #tpu.dot_dimension_numbers<[1], [0], [0], [1], [0, 0, 1, 1], [], []>} : vector<2x32xf32>, vector<32x32xf32>, vector<2x32xf32> -> vector<2x32xf32>
    %156 = arith.addf %151, %155 : vector<2x32xf32>
    %157 = vector.extract_strided_slice %125 {offsets = [12, 0], sizes = [2, 32], strides = [1, 1]} : vector<32x32xf32> to vector<2x32xf32>
    %c6_148 = arith.constant 6 : index
    %c0_149 = arith.constant 0 : index
    %c0_150 = arith.constant 0 : index
    %158 = vector.load %arg7[%c6_148, %c0_149, %c0_150] : memref<16x32x32xf32, #tpu.memory_space<vmem>>, vector<1x32x32xf32>
    %159 = vector.shape_cast %158 : vector<1x32x32xf32> to vector<32x32xf32>
    %cst_151 = arith.constant dense<0.000000e+00> : vector<2x32xf32>
    %160 = tpu.matmul %157, %159, %cst_151 {dimension_numbers = #tpu.dot_dimension_numbers<[1], [0], [0], [1], [0, 0, 1, 1], [], []>} : vector<2x32xf32>, vector<32x32xf32>, vector<2x32xf32> -> vector<2x32xf32>
    %161 = arith.addf %156, %160 : vector<2x32xf32>
    %162 = vector.extract_strided_slice %125 {offsets = [14, 0], sizes = [2, 32], strides = [1, 1]} : vector<32x32xf32> to vector<2x32xf32>
    %c7_152 = arith.constant 7 : index
    %c0_153 = arith.constant 0 : index
    %c0_154 = arith.constant 0 : index
    %163 = vector.load %arg7[%c7_152, %c0_153, %c0_154] : memref<16x32x32xf32, #tpu.memory_space<vmem>>, vector<1x32x32xf32>
    %164 = vector.shape_cast %163 : vector<1x32x32xf32> to vector<32x32xf32>
    %cst_155 = arith.constant dense<0.000000e+00> : vector<2x32xf32>
    %165 = tpu.matmul %162, %164, %cst_155 {dimension_numbers = #tpu.dot_dimension_numbers<[1], [0], [0], [1], [0, 0, 1, 1], [], []>} : vector<2x32xf32>, vector<32x32xf32>, vector<2x32xf32> -> vector<2x32xf32>
    %166 = arith.addf %161, %165 : vector<2x32xf32>
    %167 = vector.extract_strided_slice %125 {offsets = [16, 0], sizes = [2, 32], strides = [1, 1]} : vector<32x32xf32> to vector<2x32xf32>
    %c8_156 = arith.constant 8 : index
    %c0_157 = arith.constant 0 : index
    %c0_158 = arith.constant 0 : index
    %168 = vector.load %arg7[%c8_156, %c0_157, %c0_158] : memref<16x32x32xf32, #tpu.memory_space<vmem>>, vector<1x32x32xf32>
    %169 = vector.shape_cast %168 : vector<1x32x32xf32> to vector<32x32xf32>
    %cst_159 = arith.constant dense<0.000000e+00> : vector<2x32xf32>
    %170 = tpu.matmul %167, %169, %cst_159 {dimension_numbers = #tpu.dot_dimension_numbers<[1], [0], [0], [1], [0, 0, 1, 1], [], []>} : vector<2x32xf32>, vector<32x32xf32>, vector<2x32xf32> -> vector<2x32xf32>
    %171 = arith.addf %166, %170 : vector<2x32xf32>
    %172 = vector.extract_strided_slice %125 {offsets = [18, 0], sizes = [2, 32], strides = [1, 1]} : vector<32x32xf32> to vector<2x32xf32>
    %c9_160 = arith.constant 9 : index
    %c0_161 = arith.constant 0 : index
    %c0_162 = arith.constant 0 : index
    %173 = vector.load %arg7[%c9_160, %c0_161, %c0_162] : memref<16x32x32xf32, #tpu.memory_space<vmem>>, vector<1x32x32xf32>
    %174 = vector.shape_cast %173 : vector<1x32x32xf32> to vector<32x32xf32>
    %cst_163 = arith.constant dense<0.000000e+00> : vector<2x32xf32>
    %175 = tpu.matmul %172, %174, %cst_163 {dimension_numbers = #tpu.dot_dimension_numbers<[1], [0], [0], [1], [0, 0, 1, 1], [], []>} : vector<2x32xf32>, vector<32x32xf32>, vector<2x32xf32> -> vector<2x32xf32>
    %176 = arith.addf %171, %175 : vector<2x32xf32>
    %177 = vector.extract_strided_slice %125 {offsets = [20, 0], sizes = [2, 32], strides = [1, 1]} : vector<32x32xf32> to vector<2x32xf32>
    %c10_164 = arith.constant 10 : index
    %c0_165 = arith.constant 0 : index
    %c0_166 = arith.constant 0 : index
    %178 = vector.load %arg7[%c10_164, %c0_165, %c0_166] : memref<16x32x32xf32, #tpu.memory_space<vmem>>, vector<1x32x32xf32>
    %179 = vector.shape_cast %178 : vector<1x32x32xf32> to vector<32x32xf32>
    %cst_167 = arith.constant dense<0.000000e+00> : vector<2x32xf32>
    %180 = tpu.matmul %177, %179, %cst_167 {dimension_numbers = #tpu.dot_dimension_numbers<[1], [0], [0], [1], [0, 0, 1, 1], [], []>} : vector<2x32xf32>, vector<32x32xf32>, vector<2x32xf32> -> vector<2x32xf32>
    %181 = arith.addf %176, %180 : vector<2x32xf32>
    %182 = vector.extract_strided_slice %125 {offsets = [22, 0], sizes = [2, 32], strides = [1, 1]} : vector<32x32xf32> to vector<2x32xf32>
    %c11_168 = arith.constant 11 : index
    %c0_169 = arith.constant 0 : index
    %c0_170 = arith.constant 0 : index
    %183 = vector.load %arg7[%c11_168, %c0_169, %c0_170] : memref<16x32x32xf32, #tpu.memory_space<vmem>>, vector<1x32x32xf32>
    %184 = vector.shape_cast %183 : vector<1x32x32xf32> to vector<32x32xf32>
    %cst_171 = arith.constant dense<0.000000e+00> : vector<2x32xf32>
    %185 = tpu.matmul %182, %184, %cst_171 {dimension_numbers = #tpu.dot_dimension_numbers<[1], [0], [0], [1], [0, 0, 1, 1], [], []>} : vector<2x32xf32>, vector<32x32xf32>, vector<2x32xf32> -> vector<2x32xf32>
    %186 = arith.addf %181, %185 : vector<2x32xf32>
    %187 = vector.extract_strided_slice %125 {offsets = [24, 0], sizes = [2, 32], strides = [1, 1]} : vector<32x32xf32> to vector<2x32xf32>
    %c12_172 = arith.constant 12 : index
    %c0_173 = arith.constant 0 : index
    %c0_174 = arith.constant 0 : index
    %188 = vector.load %arg7[%c12_172, %c0_173, %c0_174] : memref<16x32x32xf32, #tpu.memory_space<vmem>>, vector<1x32x32xf32>
    %189 = vector.shape_cast %188 : vector<1x32x32xf32> to vector<32x32xf32>
    %cst_175 = arith.constant dense<0.000000e+00> : vector<2x32xf32>
    %190 = tpu.matmul %187, %189, %cst_175 {dimension_numbers = #tpu.dot_dimension_numbers<[1], [0], [0], [1], [0, 0, 1, 1], [], []>} : vector<2x32xf32>, vector<32x32xf32>, vector<2x32xf32> -> vector<2x32xf32>
    %191 = arith.addf %186, %190 : vector<2x32xf32>
    %192 = vector.extract_strided_slice %125 {offsets = [26, 0], sizes = [2, 32], strides = [1, 1]} : vector<32x32xf32> to vector<2x32xf32>
    %c13_176 = arith.constant 13 : index
    %c0_177 = arith.constant 0 : index
    %c0_178 = arith.constant 0 : index
    %193 = vector.load %arg7[%c13_176, %c0_177, %c0_178] : memref<16x32x32xf32, #tpu.memory_space<vmem>>, vector<1x32x32xf32>
    %194 = vector.shape_cast %193 : vector<1x32x32xf32> to vector<32x32xf32>
    %cst_179 = arith.constant dense<0.000000e+00> : vector<2x32xf32>
    %195 = tpu.matmul %192, %194, %cst_179 {dimension_numbers = #tpu.dot_dimension_numbers<[1], [0], [0], [1], [0, 0, 1, 1], [], []>} : vector<2x32xf32>, vector<32x32xf32>, vector<2x32xf32> -> vector<2x32xf32>
    %196 = arith.addf %191, %195 : vector<2x32xf32>
    %197 = vector.extract_strided_slice %125 {offsets = [28, 0], sizes = [2, 32], strides = [1, 1]} : vector<32x32xf32> to vector<2x32xf32>
    %c14_180 = arith.constant 14 : index
    %c0_181 = arith.constant 0 : index
    %c0_182 = arith.constant 0 : index
    %198 = vector.load %arg7[%c14_180, %c0_181, %c0_182] : memref<16x32x32xf32, #tpu.memory_space<vmem>>, vector<1x32x32xf32>
    %199 = vector.shape_cast %198 : vector<1x32x32xf32> to vector<32x32xf32>
    %cst_183 = arith.constant dense<0.000000e+00> : vector<2x32xf32>
    %200 = tpu.matmul %197, %199, %cst_183 {dimension_numbers = #tpu.dot_dimension_numbers<[1], [0], [0], [1], [0, 0, 1, 1], [], []>} : vector<2x32xf32>, vector<32x32xf32>, vector<2x32xf32> -> vector<2x32xf32>
    %201 = arith.addf %196, %200 : vector<2x32xf32>
    %202 = vector.extract_strided_slice %125 {offsets = [30, 0], sizes = [2, 32], strides = [1, 1]} : vector<32x32xf32> to vector<2x32xf32>
    %c15_184 = arith.constant 15 : index
    %c0_185 = arith.constant 0 : index
    %c0_186 = arith.constant 0 : index
    %203 = vector.load %arg7[%c15_184, %c0_185, %c0_186] : memref<16x32x32xf32, #tpu.memory_space<vmem>>, vector<1x32x32xf32>
    %204 = vector.shape_cast %203 : vector<1x32x32xf32> to vector<32x32xf32>
    %cst_187 = arith.constant dense<0.000000e+00> : vector<2x32xf32>
    %205 = tpu.matmul %202, %204, %cst_187 {dimension_numbers = #tpu.dot_dimension_numbers<[1], [0], [0], [1], [0, 0, 1, 1], [], []>} : vector<2x32xf32>, vector<32x32xf32>, vector<2x32xf32> -> vector<2x32xf32>
    %206 = arith.addf %201, %205 : vector<2x32xf32>
    %c0_188 = arith.constant 0 : index
    %c0_189 = arith.constant 0 : index
    %207 = vector.load %arg8[%c0_188, %c0_189] : memref<1x32xf32, #tpu.memory_space<vmem>>, vector<1x32xf32>
    %208 = vector.broadcast %207 : vector<1x32xf32> to vector<2x32xf32>
    %209 = arith.addf %206, %208 : vector<2x32xf32>
    %cst_190 = arith.constant 0.000000e+00 : f32
    %210 = vector.broadcast %cst_190 : f32 to vector<2x32xf32>
    %211 = arith.maximumf %209, %210 : vector<2x32xf32>
    %c0_191 = arith.constant 0 : index
    %c0_192 = arith.constant 0 : index
    %212 = vector.load %arg9[%c0_191, %c0_192] : memref<32x32xf32, #tpu.memory_space<vmem>>, vector<32x32xf32>
    %cst_193 = arith.constant dense<0.000000e+00> : vector<2x32xf32>
    %213 = tpu.matmul %211, %212, %cst_193 {dimension_numbers = #tpu.dot_dimension_numbers<[1], [0], [0], [1], [0, 0, 1, 1], [], []>} : vector<2x32xf32>, vector<32x32xf32>, vector<2x32xf32> -> vector<2x32xf32>
    %c0_194 = arith.constant 0 : index
    %c0_195 = arith.constant 0 : index
    %214 = vector.load %arg10[%c0_194, %c0_195] : memref<1x32xf32, #tpu.memory_space<vmem>>, vector<1x32xf32>
    %215 = vector.broadcast %214 : vector<1x32xf32> to vector<2x32xf32>
    %216 = arith.addf %213, %215 : vector<2x32xf32>
    %cst_196 = arith.constant 0.000000e+00 : f32
    %217 = vector.broadcast %cst_196 : f32 to vector<2x32xf32>
    %218 = arith.maximumf %216, %217 : vector<2x32xf32>
    %c0_197 = arith.constant 0 : index
    %c0_198 = arith.constant 0 : index
    %219 = vector.load %arg11[%c0_197, %c0_198] : memref<32x64xf32, #tpu.memory_space<vmem>>, vector<32x64xf32>
    %cst_199 = arith.constant dense<0.000000e+00> : vector<2x64xf32>
    %220 = tpu.matmul %218, %219, %cst_199 {dimension_numbers = #tpu.dot_dimension_numbers<[1], [0], [0], [1], [0, 0, 1, 1], [], []>} : vector<2x32xf32>, vector<32x64xf32>, vector<2x64xf32> -> vector<2x64xf32>
    %c0_200 = arith.constant 0 : index
    %c0_201 = arith.constant 0 : index
    %221 = vector.load %arg1[%c0_200, %c0_201] : memref<2x10xf32, #tpu.memory_space<vmem>>, vector<2x10xf32>
    %c0_202 = arith.constant 0 : index
    %c0_203 = arith.constant 0 : index
    %222 = vector.load %arg12[%c0_202, %c0_203] : memref<10x64xf32, #tpu.memory_space<vmem>>, vector<10x64xf32>
    %cst_204 = arith.constant dense<0.000000e+00> : vector<2x64xf32>
    %223 = tpu.matmul %221, %222, %cst_204 {dimension_numbers = #tpu.dot_dimension_numbers<[1], [0], [0], [1], [0, 0, 1, 1], [], []>} : vector<2x10xf32>, vector<10x64xf32>, vector<2x64xf32> -> vector<2x64xf32>
    %224 = arith.addf %220, %223 : vector<2x64xf32>
    %c0_205 = arith.constant 0 : index
    %c0_206 = arith.constant 0 : index
    %225 = vector.load %arg13[%c0_205, %c0_206] : memref<1x64xf32, #tpu.memory_space<vmem>>, vector<1x64xf32>
    %226 = vector.broadcast %225 : vector<1x64xf32> to vector<2x64xf32>
    %227 = arith.addf %224, %226 : vector<2x64xf32>
    %cst_207 = arith.constant 0.000000e+00 : f32
    %228 = vector.broadcast %cst_207 : f32 to vector<2x64xf32>
    %229 = arith.maximumf %227, %228 : vector<2x64xf32>
    %c0_208 = arith.constant 0 : index
    %c0_209 = arith.constant 0 : index
    %230 = vector.load %arg14[%c0_208, %c0_209] : memref<64x64xf32, #tpu.memory_space<vmem>>, vector<64x64xf32>
    %cst_210 = arith.constant dense<0.000000e+00> : vector<2x64xf32>
    %231 = tpu.matmul %229, %230, %cst_210 {dimension_numbers = #tpu.dot_dimension_numbers<[1], [0], [0], [1], [0, 0, 1, 1], [], []>} : vector<2x64xf32>, vector<64x64xf32>, vector<2x64xf32> -> vector<2x64xf32>
    %c0_211 = arith.constant 0 : index
    %c0_212 = arith.constant 0 : index
    %232 = vector.load %arg15[%c0_211, %c0_212] : memref<1x64xf32, #tpu.memory_space<vmem>>, vector<1x64xf32>
    %233 = vector.broadcast %232 : vector<1x64xf32> to vector<2x64xf32>
    %234 = arith.addf %231, %233 : vector<2x64xf32>
    %cst_213 = arith.constant 0.000000e+00 : f32
    %235 = vector.broadcast %cst_213 : f32 to vector<2x64xf32>
    %236 = arith.maximumf %234, %235 : vector<2x64xf32>
    %c0_214 = arith.constant 0 : index
    %c0_215 = arith.constant 0 : index
    %237 = vector.load %arg16[%c0_214, %c0_215] : memref<64x1xf32, #tpu.memory_space<vmem>>, vector<64x1xf32>
    %cst_216 = arith.constant dense<0.000000e+00> : vector<2x1xf32>
    %238 = tpu.matmul %236, %237, %cst_216 {dimension_numbers = #tpu.dot_dimension_numbers<[1], [0], [0], [1], [0, 0, 1, 1], [], []>} : vector<2x64xf32>, vector<64x1xf32>, vector<2x1xf32> -> vector<2x1xf32>
    %c0_217 = arith.constant 0 : index
    %c0_218 = arith.constant 0 : index
    %239 = vector.load %arg17[%c0_217, %c0_218] : memref<1x1xf32, #tpu.memory_space<vmem>>, vector<1x1xf32>
    %240 = vector.broadcast %239 : vector<1x1xf32> to vector<2x1xf32>
    %241 = arith.addf %238, %240 : vector<2x1xf32>
    %c0_219 = arith.constant 0 : index
    %c0_220 = arith.constant 0 : index
    %242 = vector.load %arg18[%c0_219, %c0_220] : memref<2x1xf32, #tpu.memory_space<vmem>>, vector<2x1xf32>
    tpu.vector_store %arg18[%c0_219, %c0_220], %241 {strides = array<i32>} : memref<2x1xf32, #tpu.memory_space<vmem>>, vector<2x1xf32>,
    return
  }
}

</mosaic_0001>

<llo_original>
// kernel: burgess_discriminator_forward.1
$region0: #{burgess_discriminator_forward.1}
  #allocation0 [shape = 'u32[]', space=smem, size = 0x4, offset = 0x4, fixed_abs, tag = 'smem constant byte address 0x4 - core index']
  #allocation1 [shape = 'u32[144,128]{1,0:T(1,128)}', space=vmem, size = 0x12000, scoped, tag = 'internal scratch']
  #allocation2 [shape = 'f32[1,1]{1,0:T(1,128)S(1)}', space=vmem, size = 0x200, scoped, tag = 'scoped memory for burgess_discriminator_forward.1']
  %s0 = inlined_call_operand.vmem [shape: f32[128,64], index: 0, kind: input, shape index: {}]
  %s1 = inlined_call_operand.vmem [shape: f32[2,10], index: 1, kind: input, shape index: {}]
  %s2 = inlined_call_operand.vmem [shape: f32[64,32], index: 2, kind: input, shape index: {}]
  %s3 = inlined_call_operand.vmem [shape: f32[1,32], index: 3, kind: input, shape index: {}]
  %s4 = inlined_call_operand.vmem [shape: f32[16,32,128], index: 4, kind: input, shape index: {}]
  %s5 = inlined_call_operand.vmem [shape: f32[16,32,32], index: 5, kind: input, shape index: {}]
  %s6 = inlined_call_operand.vmem [shape: f32[1,32], index: 6, kind: input, shape index: {}]
  %s7 = inlined_call_operand.vmem [shape: f32[16,32,32], index: 7, kind: input, shape index: {}]
  %s8 = inlined_call_operand.vmem [shape: f32[1,32], index: 8, kind: input, shape index: {}]
  %s9 = inlined_call_operand.vmem [shape: f32[32,32], index: 9, kind: input, shape index: {}]
  %s10 = inlined_call_operand.vmem [shape: f32[1,32], index: 10, kind: input, shape index: {}]
  %s11 = inlined_call_operand.vmem [shape: f32[32,64], index: 11, kind: input, shape index: {}]
  %s12 = inlined_call_operand.vmem [shape: f32[10,64], index: 12, kind: input, shape index: {}]
  %s13 = inlined_call_operand.vmem [shape: f32[1,64], index: 13, kind: input, shape index: {}]
  %s14 = inlined_call_operand.vmem [shape: f32[64,64], index: 14, kind: input, shape index: {}]
  %s15 = inlined_call_operand.vmem [shape: f32[1,64], index: 15, kind: input, shape index: {}]
  %s16 = inlined_call_operand.vmem [shape: f32[64,1], index: 16, kind: input, shape index: {}]
  %s17 = inlined_call_operand.<no memory space> [shape: f32[1,1], index: 17, kind: input, shape index: {}]
  %s18 = inlined_call_operand.vmem [shape: f32[2,1], index: 18, kind: output, shape index: {}]
  %s19 = sld [smem:[#allocation0]]
  $region82: #{burgess_discriminator_forward.1} parent=0
    _
  %s21 = ssub.s32 1, %s19
  %s22 = scalar_select 0, %s21, %s19
  %v23 = vstv %s17
  %24 = vst [vmem:[#allocation2] sm:$0x1] %v23
  // Predicated region
  $region2: #{burgess_discriminator_forward.1} parent=0 // pred_check
    _
  $region3: #{burgess_discriminator_forward.1} parent=0 // pred_check_branch
    %26 = sbr.rel (0) target = $region5
  $region4: #{burgess_discriminator_forward.1} parent=0 // pred_region
    _
  $region5: #{burgess_discriminator_forward.1} parent=0 // pred_fallthru
    _
  // Predicated region
  $region6: #{burgess_discriminator_forward.1} parent=0 // pred_check
    _
  $region7: #{burgess_discriminator_forward.1} parent=0 // pred_check_branch
    %28 = sbr.rel (0) target = $region9
  $region8: #{burgess_discriminator_forward.1} parent=0 // pred_region
    _
  $region9: #{burgess_discriminator_forward.1} parent=0 // pred_fallthru
    _
  // Predicated region
  $region10: #{burgess_discriminator_forward.1} parent=0 // pred_check
    _
  $region11: #{burgess_discriminator_forward.1} parent=0 // pred_check_branch
    %30 = sbr.rel (0) target = $region13
  $region12: #{burgess_discriminator_forward.1} parent=0 // pred_region
    _
  $region13: #{burgess_discriminator_forward.1} parent=0 // pred_fallthru
    _
  // Predicated region
  $region14: #{burgess_discriminator_forward.1} parent=0 // pred_check
    _
  $region15: #{burgess_discriminator_forward.1} parent=0 // pred_check_branch
    %32 = sbr.rel (0) target = $region17
  $region16: #{burgess_discriminator_forward.1} parent=0 // pred_region
    _
  $region17: #{burgess_discriminator_forward.1} parent=0 // pred_fallthru
    _
  // Predicated region
  $region18: #{burgess_discriminator_forward.1} parent=0 // pred_check
    _
  $region19: #{burgess_discriminator_forward.1} parent=0 // pred_check_branch
    %34 = sbr.rel (0) target = $region21
  $region20: #{burgess_discriminator_forward.1} parent=0 // pred_region
    _
  $region21: #{burgess_discriminator_forward.1} parent=0 // pred_fallthru
    _
  // Predicated region
  $region22: #{burgess_discriminator_forward.1} parent=0 // pred_check
    _
  $region23: #{burgess_discriminator_forward.1} parent=0 // pred_check_branch
    %36 = sbr.rel (0) target = $region25
  $region24: #{burgess_discriminator_forward.1} parent=0 // pred_region
    _
  $region25: #{burgess_discriminator_forward.1} parent=0 // pred_fallthru
    _
  // Predicated region
  $region26: #{burgess_discriminator_forward.1} parent=0 // pred_check
    _
  $region27: #{burgess_discriminator_forward.1} parent=0 // pred_check_branch
    %38 = sbr.rel (0) target = $region29
  $region28: #{burgess_discriminator_forward.1} parent=0 // pred_region
    _
  $region29: #{burgess_discriminator_forward.1} parent=0 // pred_fallthru
    _
  // Predicated region
  $region30: #{burgess_discriminator_forward.1} parent=0 // pred_check
    _
  $region31: #{burgess_discriminator_forward.1} parent=0 // pred_check_branch
    %40 = sbr.rel (0) target = $region33
  $region32: #{burgess_discriminator_forward.1} parent=0 // pred_region
    _
  $region33: #{burgess_discriminator_forward.1} parent=0 // pred_fallthru
    _
  // Predicated region
  $region34: #{burgess_discriminator_forward.1} parent=0 // pred_check
    _
  $region35: #{burgess_discriminator_forward.1} parent=0 // pred_check_branch
    %42 = sbr.rel (0) target = $region37
  $region36: #{burgess_discriminator_forward.1} parent=0 // pred_region
    _
  $region37: #{burgess_discriminator_forward.1} parent=0 // pred_fallthru
    _
  // Predicated region
  $region38: #{burgess_discriminator_forward.1} parent=0 // pred_check
    _
  $region39: #{burgess_discriminator_forward.1} parent=0 // pred_check_branch
    %44 = sbr.rel (0) target = $region41
  $region40: #{burgess_discriminator_forward.1} parent=0 // pred_region
    _
  $region41: #{burgess_discriminator_forward.1} parent=0 // pred_fallthru
    _
  // Predicated region
  $region42: #{burgess_discriminator_forward.1} parent=0 // pred_check
    _
  $region43: #{burgess_discriminator_forward.1} parent=0 // pred_check_branch
    %46 = sbr.rel (0) target = $region45
  $region44: #{burgess_discriminator_forward.1} parent=0 // pred_region
    _
  $region45: #{burgess_discriminator_forward.1} parent=0 // pred_fallthru
    _
  // Predicated region
  $region46: #{burgess_discriminator_forward.1} parent=0 // pred_check
    _
  $region47: #{burgess_discriminator_forward.1} parent=0 // pred_check_branch
    %48 = sbr.rel (0) target = $region49
  $region48: #{burgess_discriminator_forward.1} parent=0 // pred_region
    _
  $region49: #{burgess_discriminator_forward.1} parent=0 // pred_fallthru
    _
  // Predicated region
  $region50: #{burgess_discriminator_forward.1} parent=0 // pred_check
    _
  $region51: #{burgess_discriminator_forward.1} parent=0 // pred_check_branch
    %50 = sbr.rel (0) target = $region53
  $region52: #{burgess_discriminator_forward.1} parent=0 // pred_region
    _
  $region53: #{burgess_discriminator_forward.1} parent=0 // pred_fallthru
    _
  // Predicated region
  $region54: #{burgess_discriminator_forward.1} parent=0 // pred_check
    _
  $region55: #{burgess_discriminator_forward.1} parent=0 // pred_check_branch
    %52 = sbr.rel (0) target = $region57
  $region56: #{burgess_discriminator_forward.1} parent=0 // pred_region
    _
  $region57: #{burgess_discriminator_forward.1} parent=0 // pred_fallthru
    _
  // Predicated region
  $region58: #{burgess_discriminator_forward.1} parent=0 // pred_check
    _
  $region59: #{burgess_discriminator_forward.1} parent=0 // pred_check_branch
    %54 = sbr.rel (0) target = $region61
  $region60: #{burgess_discriminator_forward.1} parent=0 // pred_region
    _
  $region61: #{burgess_discriminator_forward.1} parent=0 // pred_fallthru
    _
  // Predicated region
  $region62: #{burgess_discriminator_forward.1} parent=0 // pred_check
    _
  $region63: #{burgess_discriminator_forward.1} parent=0 // pred_check_branch
    %56 = sbr.rel (0) target = $region65
  $region64: #{burgess_discriminator_forward.1} parent=0 // pred_region
    _
  $region65: #{burgess_discriminator_forward.1} parent=0 // pred_fallthru
    _
  // Predicated region
  $region66: #{burgess_discriminator_forward.1} parent=0 // pred_check
    _
  $region67: #{burgess_discriminator_forward.1} parent=0 // pred_check_branch
    %58 = sbr.rel (0) target = $region69
  $region68: #{burgess_discriminator_forward.1} parent=0 // pred_region
    _
  $region69: #{burgess_discriminator_forward.1} parent=0 // pred_fallthru
    _
  // Predicated region
  $region70: #{burgess_discriminator_forward.1} parent=0 // pred_check
    _
  $region71: #{burgess_discriminator_forward.1} parent=0 // pred_check_branch
    %60 = sbr.rel (0) target = $region73
  $region72: #{burgess_discriminator_forward.1} parent=0 // pred_region
    _
  $region73: #{burgess_discriminator_forward.1} parent=0 // pred_fallthru
    _
  %v61 = vld [vmem:[%s0] sm:$0xff]
  %v62 = vld [vmem:[%s0 + $0x8] sm:$0xff]
  %v63 = vld [vmem:[%s0 + $0x10] sm:$0xff]
  %v64 = vld [vmem:[%s0 + $0x18] sm:$0xff]
  %v65 = vld [vmem:[%s0 + $0x20] sm:$0xff]
  %v66 = vld [vmem:[%s0 + $0x28] sm:$0xff]
  %v67 = vld [vmem:[%s0 + $0x30] sm:$0xff]
  %v68 = vld [vmem:[%s0 + $0x38] sm:$0xff]
  %v69 = vld [vmem:[%s0 + $0x40] sm:$0xff]
  %v70 = vld [vmem:[%s0 + $0x48] sm:$0xff]
  %v71 = vld [vmem:[%s0 + $0x50] sm:$0xff]
  %v72 = vld [vmem:[%s0 + $0x58] sm:$0xff]
  %v73 = vld [vmem:[%s0 + $0x60] sm:$0xff]
  %v74 = vld [vmem:[%s0 + $0x68] sm:$0xff]
  %v75 = vld [vmem:[%s0 + $0x70] sm:$0xff]
  %v76 = vld [vmem:[%s0 + $0x78] sm:$0xff]
  %v77 = vld [vmem:[%s2] sm:$0xff]
  %v78 = vld [vmem:[%s2 + $0x8] sm:$0xff]
  %v79 = vld [vmem:[%s2 + $0x10] sm:$0xff]
  %v80 = vld [vmem:[%s2 + $0x18] sm:$0xff]
  %v81 = vld [vmem:[%s2 + $0x20] sm:$0xff]
  %v82 = vld [vmem:[%s2 + $0x28] sm:$0xff]
  %v83 = vld [vmem:[%s2 + $0x30] sm:$0xff]
  %v84 = vld [vmem:[%s2 + $0x38] sm:$0xff]
  %v85 = vld [vmem:[%s3] sm:$0x1]
  %v87 = vlaneseq
  %v88 = vshrl.u32 %v87, 7
  %v89 = vsub.s32 0, %v88
  %v90 = vrot.slane %v85, %v89
  %vm92 = vcmask 523264
  %v94 = vsel %vm92, %v61, 0
  %v97 = vsel %vm92, %v62, 0
  %v100 = vsel %vm92, %v63, 0
  %v103 = vsel %vm92, %v64, 0
  %v106 = vsel %vm92, %v65, 0
  %v109 = vsel %vm92, %v66, 0
  %v112 = vsel %vm92, %v67, 0
  %v115 = vsel %vm92, %v68, 0
  %v118 = vsel %vm92, %v69, 0
  %v121 = vsel %vm92, %v70, 0
  %v124 = vsel %vm92, %v71, 0
  %v127 = vsel %vm92, %v72, 0
  %v130 = vsel %vm92, %v73, 0
  %v133 = vsel %vm92, %v74, 0
  %v136 = vsel %vm92, %v75, 0
  %v139 = vsel %vm92, %v76, 0
  %141 = vmatprep.subr.mxu0 0.0
  %142 = vmatpush1.msra.mxu0 %v77
  %143 = vmatprep.subr.mxu0 0.0
  %144 = vmatpush1.msra.mxu0 %v78
  %145 = vmatprep.subr.mxu0 0.0
  %146 = vmatpush1.msra.mxu0 %v79
  %147 = vmatprep.subr.mxu0 0.0
  %148 = vmatpush1.msra.mxu0 %v80
  %149 = vmatprep.subr.mxu0 0.0
  %150 = vmatpush1.msra.mxu0 %v81
  %151 = vmatprep.subr.mxu0 0.0
  %152 = vmatpush1.msra.mxu0 %v82
  %153 = vmatprep.subr.mxu0 0.0
  %154 = vmatpush1.msra.mxu0 %v83
  %155 = vmatprep.subr.mxu0 0.0
  %156 = vmatpush1.msra.mxu0 %v84
  %157 = vmatprep.subr.mxu0 0.0
  %158 = vmatpush1.msra.mxu0 0.0
  %159 = vmatprep.subr.mxu0 0.0
  %160 = vmatpush1.msra.mxu0 0.0
  %161 = vmatprep.subr.mxu0 0.0
  %162 = vmatpush1.msra.mxu0 0.0
  %163 = vmatprep.subr.mxu0 0.0
  %164 = vmatpush1.msra.mxu0 0.0
  %165 = vmatprep.subr.mxu0 0.0
  %166 = vmatpush1.msra.mxu0 0.0
  %167 = vmatprep.subr.mxu0 0.0
  %168 = vmatpush1.msra.mxu0 0.0
  %169 = vmatprep.subr.mxu0 0.0
  %170 = vmatpush1.msra.mxu0 0.0
  %171 = vmatprep.subr.mxu0 0.0
  %172 = vmatpush1.msra.mxu0 0.0
  %173 = vmatprep.subr.mxu0 0.0
  %174 = vmatpush1.msra.mxu0 0.0
  %175 = vmatprep.subr.mxu0 0.0
  %176 = vmatpush1.msra.mxu0 0.0
  %177 = vmatprep.subr.mxu0 0.0
  %178 = vmatpush1.msra.mxu0 0.0
  %179 = vmatprep.subr.mxu0 0.0
  %180 = vmatpush1.msra.mxu0 0.0
  %181 = vmatprep.subr.mxu0 0.0
  %182 = vmatpush1.msra.mxu0 0.0
  %183 = vmatprep.subr.mxu0 0.0
  %184 = vmatpush1.msra.mxu0 0.0
  %185 = vmatprep.subr.mxu0 0.0
  %186 = vmatpush1.msra.mxu0 0.0
  %187 = vmatprep.subr.mxu0 0.0
  %188 = vmatpush1.msra.mxu0 0.0
  %189 = vmatprep.subr.mxu0 0.0
  %190 = vmatpush1.msra.mxu0 0.0
  %191 = vmatprep.subr.mxu0 0.0
  %192 = vmatpush1.msra.mxu0 0.0
  %193 = vmatprep.subr.mxu0 0.0
  %194 = vmatpush1.msra.mxu0 0.0
  %195 = vmatprep.subr.mxu0 0.0
  %196 = vmatpush1.msra.mxu0 0.0
  %197 = vmatprep.subr.mxu0 0.0
  %198 = vmatpush1.msra.mxu0 0.0
  %199 = vmatprep.subr.mxu0 0.0
  %200 = vmatpush1.msra.mxu0 0.0
  %201 = vmatprep.subr.mxu0 0.0
  %202 = vmatpush1.msra.mxu0 0.0
  %203 = vmatprep.subr.mxu0 0.0
  %204 = vmatpush1.msra.mxu0 0.0
  %205 = vmatprep.mubr.f32.mxu0 0.0
  %206 = vmatmul.mubr.f32.gmra.mrb[0].mxu0 %v94
  %v207 = vpop.f32.mrb[0].mxu0
  %v208 = vadd.f32 %v90, %v207
  %v209 = vpop.f32.mrb[0].mxu0
  %210 = vmatprep.mubr.f32.mxu0 0.0
  %211 = vmatmul.mubr.f32.gmra.mrb[0].mxu0 %v97
  %v212 = vpop.f32.mrb[0].mxu0
  %v213 = vadd.f32 %v90, %v212
  %v214 = vpop.f32.mrb[0].mxu0
  %215 = vmatprep.mubr.f32.mxu0 0.0
  %216 = vmatmul.mubr.f32.gmra.mrb[0].mxu0 %v100
  %v217 = vpop.f32.mrb[0].mxu0
  %v218 = vadd.f32 %v90, %v217
  %v219 = vpop.f32.mrb[0].mxu0
  %220 = vmatprep.mubr.f32.mxu0 0.0
  %221 = vmatmul.mubr.f32.gmra.mrb[0].mxu0 %v103
  %v222 = vpop.f32.mrb[0].mxu0
  %v223 = vadd.f32 %v90, %v222
  %v224 = vpop.f32.mrb[0].mxu0
  %225 = vmatprep.mubr.f32.mxu0 0.0
  %226 = vmatmul.mubr.f32.gmra.mrb[0].mxu0 %v106
  %v227 = vpop.f32.mrb[0].mxu0
  %v228 = vadd.f32 %v90, %v227
  %v229 = vpop.f32.mrb[0].mxu0
  %230 = vmatprep.mubr.f32.mxu0 0.0
  %231 = vmatmul.mubr.f32.gmra.mrb[0].mxu0 %v109
  %v232 = vpop.f32.mrb[0].mxu0
  %v233 = vadd.f32 %v90, %v232
  %v234 = vpop.f32.mrb[0].mxu0
  %235 = vmatprep.mubr.f32.mxu0 0.0
  %236 = vmatmul.mubr.f32.gmra.mrb[0].mxu0 %v112
  %v237 = vpop.f32.mrb[0].mxu0
  %v238 = vadd.f32 %v90, %v237
  %v239 = vpop.f32.mrb[0].mxu0
  %240 = vmatprep.mubr.f32.mxu0 0.0
  %241 = vmatmul.mubr.f32.gmra.mrb[0].mxu0 %v115
  %v242 = vpop.f32.mrb[0].mxu0
  %v243 = vadd.f32 %v90, %v242
  %v244 = vpop.f32.mrb[0].mxu0
  %245 = vmatprep.mubr.f32.mxu0 0.0
  %246 = vmatmul.mubr.f32.gmra.mrb[0].mxu0 %v118
  %v247 = vpop.f32.mrb[0].mxu0
  %v248 = vadd.f32 %v90, %v247
  %v249 = vpop.f32.mrb[0].mxu0
  %250 = vmatprep.mubr.f32.mxu0 0.0
  %251 = vmatmul.mubr.f32.gmra.mrb[0].mxu0 %v121
  %v252 = vpop.f32.mrb[0].mxu0
  %v253 = vadd.f32 %v90, %v252
  %v254 = vpop.f32.mrb[0].mxu0
  %255 = vmatprep.mubr.f32.mxu0 0.0
  %256 = vmatmul.mubr.f32.gmra.mrb[0].mxu0 %v124
  %v257 = vpop.f32.mrb[0].mxu0
  %v258 = vadd.f32 %v90, %v257
  %v259 = vpop.f32.mrb[0].mxu0
  %260 = vmatprep.mubr.f32.mxu0 0.0
  %261 = vmatmul.mubr.f32.gmra.mrb[0].mxu0 %v127
  %v262 = vpop.f32.mrb[0].mxu0
  %v263 = vadd.f32 %v90, %v262
  %v264 = vpop.f32.mrb[0].mxu0
  %265 = vmatprep.mubr.f32.mxu0 0.0
  %266 = vmatmul.mubr.f32.gmra.mrb[0].mxu0 %v130
  %v267 = vpop.f32.mrb[0].mxu0
  %v268 = vadd.f32 %v90, %v267
  %v269 = vpop.f32.mrb[0].mxu0
  %270 = vmatprep.mubr.f32.mxu0 0.0
  %271 = vmatmul.mubr.f32.gmra.mrb[0].mxu0 %v133
  %v272 = vpop.f32.mrb[0].mxu0
  %v273 = vadd.f32 %v90, %v272
  %v274 = vpop.f32.mrb[0].mxu0
  %275 = vmatprep.mubr.f32.mxu0 0.0
  %276 = vmatmul.mubr.f32.gmra.mrb[0].mxu0 %v136
  %v277 = vpop.f32.mrb[0].mxu0
  %v278 = vadd.f32 %v90, %v277
  %v279 = vpop.f32.mrb[0].mxu0
  %280 = vmatprep.mubr.f32.mxu0 0.0
  %281 = vmatmul.mubr.f32.gmra.mrb[0].mxu0 %v139
  %v282 = vpop.f32.mrb[0].mxu0
  %v283 = vadd.f32 %v90, %v282
  %v284 = vpop.f32.mrb[0].mxu0
  %285 = vdwg.mxu0
  %v286 = vmax.f32 %v208, 0.0
  %v287 = vmax.f32 %v213, 0.0
  %v288 = vmax.f32 %v218, 0.0
  %v289 = vmax.f32 %v223, 0.0
  %v290 = vmax.f32 %v228, 0.0
  %v291 = vmax.f32 %v233, 0.0
  %v292 = vmax.f32 %v238, 0.0
  %v293 = vmax.f32 %v243, 0.0
  %v294 = vmax.f32 %v248, 0.0
  %v295 = vmax.f32 %v253, 0.0
  %v296 = vmax.f32 %v258, 0.0
  %v297 = vmax.f32 %v263, 0.0
  %v298 = vmax.f32 %v268, 0.0
  %v299 = vmax.f32 %v273, 0.0
  %v300 = vmax.f32 %v278, 0.0
  %v301 = vmax.f32 %v283, 0.0
  %v302 = vld [vmem:[%s4] sm:$0xff]
  %v303 = vld [vmem:[%s4 + $0x8] sm:$0xff]
  %v304 = vld [vmem:[%s4 + $0x10] sm:$0xff]
  %v305 = vld [vmem:[%s4 + $0x18] sm:$0xff]
  %306 = vmatprep.subr.mxu0 0.0
  %307 = vmatpush1.msra.mxu0 %v286
  %308 = vmatprep.subr.mxu0 0.0
  %309 = vmatpush1.msra.mxu0 %v287
  %310 = vmatprep.subr.mxu0 0.0
  %311 = vmatpush1.msra.mxu0 %v288
  %312 = vmatprep.subr.mxu0 0.0
  %313 = vmatpush1.msra.mxu0 %v289
  %314 = vmatprep.subr.mxu0 0.0
  %315 = vmatpush1.msra.mxu0 %v290
  %316 = vmatprep.subr.mxu0 0.0
  %317 = vmatpush1.msra.mxu0 %v291
  %318 = vmatprep.subr.mxu0 0.0
  %319 = vmatpush1.msra.mxu0 %v292
  %320 = vmatprep.subr.mxu0 0.0
  %321 = vmatpush1.msra.mxu0 %v293
  %322 = vmatprep.subr.mxu0 0.0
  %323 = vmatpush1.msra.mxu0 %v294
  %324 = vmatprep.subr.mxu0 0.0
  %325 = vmatpush1.msra.mxu0 %v295
  %326 = vmatprep.subr.mxu0 0.0
  %327 = vmatpush1.msra.mxu0 %v296
  %328 = vmatprep.subr.mxu0 0.0
  %329 = vmatpush1.msra.mxu0 %v297
  %330 = vmatprep.subr.mxu0 0.0
  %331 = vmatpush1.msra.mxu0 %v298
  %332 = vmatprep.subr.mxu0 0.0
  %333 = vmatpush1.msra.mxu0 %v299
  %334 = vmatprep.subr.mxu0 0.0
  %335 = vmatpush1.msra.mxu0 %v300
  %336 = vmatprep.subr.mxu0 0.0
  %337 = vmatpush1.msra.mxu0 %v301
  %338 = vmatprep.subr.mxu0 0.0
  %339 = vmatpush1.msra.mxu0 0.0
  %340 = vmatprep.subr.mxu0 0.0
  %341 = vmatpush1.msra.mxu0 0.0
  %342 = vmatprep.subr.mxu0 0.0
  %343 = vmatpush1.msra.mxu0 0.0
  %344 = vmatprep.subr.mxu0 0.0
  %345 = vmatpush1.msra.mxu0 0.0
  %346 = vmatprep.subr.mxu0 0.0
  %347 = vmatpush1.msra.mxu0 0.0
  %348 = vmatprep.subr.mxu0 0.0
  %349 = vmatpush1.msra.mxu0 0.0
  %350 = vmatprep.subr.mxu0 0.0
  %351 = vmatpush1.msra.mxu0 0.0
  %352 = vmatprep.subr.mxu0 0.0
  %353 = vmatpush1.msra.mxu0 0.0
  %354 = vmatprep.subr.mxu0 0.0
  %355 = vmatpush1.msra.mxu0 0.0
  %356 = vmatprep.subr.mxu0 0.0
  %357 = vmatpush1.msra.mxu0 0.0
  %358 = vmatprep.subr.mxu0 0.0
  %359 = vmatpush1.msra.mxu0 0.0
  %360 = vmatprep.subr.mxu0 0.0
  %361 = vmatpush1.msra.mxu0 0.0
  %362 = vmatprep.subr.mxu0 0.0
  %363 = vmatpush1.msra.mxu0 0.0
  %364 = vmatprep.subr.mxu0 0.0
  %365 = vmatpush1.msra.mxu0 0.0
  %366 = vmatprep.subr.mxu0 0.0
  %367 = vmatpush1.msra.mxu0 0.0
  %368 = vmatprep.subr.mxu0 0.0
  %369 = vmatpush1.msra.mxu0 0.0
  %370 = vmatprep.mubr.f32.mxu0 0.0
  %371 = vmatmul.mubr.f32.gmra.mrb[0].mxu0 %v302
  %v372 = vpop.f32.mrb[0].mxu0
  %v373 = vadd.f32 0.0, %v372
  %v374 = vpop.f32.mrb[0].mxu0
  %375 = vmatprep.mubr.f32.mxu0 0.0
  %376 = vmatmul.mubr.f32.gmra.mrb[0].mxu0 %v303
  %v377 = vpop.f32.mrb[0].mxu0
  %v378 = vadd.f32 0.0, %v377
  %v379 = vpop.f32.mrb[0].mxu0
  %380 = vmatprep.mubr.f32.mxu0 0.0
  %381 = vmatmul.mubr.f32.gmra.mrb[0].mxu0 %v304
  %v382 = vpop.f32.mrb[0].mxu0
  %v383 = vadd.f32 0.0, %v382
  %v384 = vpop.f32.mrb[0].mxu0
  %385 = vmatprep.mubr.f32.mxu0 0.0
  %386 = vmatmul.mubr.f32.gmra.mrb[0].mxu0 %v305
  %v387 = vpop.f32.mrb[0].mxu0
  %v388 = vadd.f32 0.0, %v387
  %v389 = vpop.f32.mrb[0].mxu0
  %390 = vdwg.mxu0
  %v391 = vld [vmem:[%s5] sm:$0xff]
  %v392 = vld [vmem:[%s5 + $0x8] sm:$0xff]
  %v393 = vld [vmem:[%s5 + $0x10] sm:$0xff]
  %v394 = vld [vmem:[%s5 + $0x18] sm:$0xff]
  %s395 = scalar_lea.vmem %s4, 32
  %v396 = vld [vmem:[%s395] sm:$0xff]
  %v397 = vld [vmem:[%s395 + $0x8] sm:$0xff]
  %v398 = vld [vmem:[%s395 + $0x10] sm:$0xff]
  %v399 = vld [vmem:[%s395 + $0x18] sm:$0xff]
  %400 = vmatprep.subr.mxu0 0.0
  %401 = vmatpush1.msra.mxu0 %v286
  %402 = vmatprep.subr.mxu0 0.0
  %403 = vmatpush1.msra.mxu0 %v287
  %404 = vmatprep.subr.mxu0 0.0
  %405 = vmatpush1.msra.mxu0 %v288
  %406 = vmatprep.subr.mxu0 0.0
  %407 = vmatpush1.msra.mxu0 %v289
  %408 = vmatprep.subr.mxu0 0.0
  %409 = vmatpush1.msra.mxu0 %v290
  %410 = vmatprep.subr.mxu0 0.0
  %411 = vmatpush1.msra.mxu0 %v291
  %412 = vmatprep.subr.mxu0 0.0
  %413 = vmatpush1.msra.mxu0 %v292
  %414 = vmatprep.subr.mxu0 0.0
  %415 = vmatpush1.msra.mxu0 %v293
  %416 = vmatprep.subr.mxu0 0.0
  %417 = vmatpush1.msra.mxu0 %v294
  %418 = vmatprep.subr.mxu0 0.0
  %419 = vmatpush1.msra.mxu0 %v295
  %420 = vmatprep.subr.mxu0 0.0
  %421 = vmatpush1.msra.mxu0 %v296
  %422 = vmatprep.subr.mxu0 0.0
  %423 = vmatpush1.msra.mxu0 %v297
  %424 = vmatprep.subr.mxu0 0.0
  %425 = vmatpush1.msra.mxu0 %v298
  %426 = vmatprep.subr.mxu0 0.0
  %427 = vmatpush1.msra.mxu0 %v299
  %428 = vmatprep.subr.mxu0 0.0
  %429 = vmatpush1.msra.mxu0 %v300
  %430 = vmatprep.subr.mxu0 0.0
  %431 = vmatpush1.msra.mxu0 %v301
  %432 = vmatprep.subr.mxu0 0.0
  %433 = vmatpush1.msra.mxu0 0.0
  %434 = vmatprep.subr.mxu0 0.0
  %435 = vmatpush1.msra.mxu0 0.0
  %436 = vmatprep.subr.mxu0 0.0
  %437 = vmatpush1.msra.mxu0 0.0
  %438 = vmatprep.subr.mxu0 0.0
  %439 = vmatpush1.msra.mxu0 0.0
  %440 = vmatprep.subr.mxu0 0.0
  %441 = vmatpush1.msra.mxu0 0.0
  %442 = vmatprep.subr.mxu0 0.0
  %443 = vmatpush1.msra.mxu0 0.0
  %444 = vmatprep.subr.mxu0 0.0
  %445 = vmatpush1.msra.mxu0 0.0
  %446 = vmatprep.subr.mxu0 0.0
  %447 = vmatpush1.msra.mxu0 0.0
  %448 = vmatprep.subr.mxu0 0.0
  %449 = vmatpush1.msra.mxu0 0.0
  %450 = vmatprep.subr.mxu0 0.0
  %451 = vmatpush1.msra.mxu0 0.0
  %452 = vmatprep.subr.mxu0 0.0
  %453 = vmatpush1.msra.mxu0 0.0
  %454 = vmatprep.subr.mxu0 0.0
  %455 = vmatpush1.msra.mxu0 0.0
  %456 = vmatprep.subr.mxu0 0.0
  %457 = vmatpush1.msra.mxu0 0.0
  %458 = vmatprep.subr.mxu0 0.0
  %459 = vmatpush1.msra.mxu0 0.0
  %460 = vmatprep.subr.mxu0 0.0
  %461 = vmatpush1.msra.mxu0 0.0
  %462 = vmatprep.subr.mxu0 0.0
  %463 = vmatpush1.msra.mxu0 0.0
  %464 = vmatprep.mubr.f32.mxu0 0.0
  %465 = vmatmul.mubr.f32.gmra.mrb[0].mxu0 %v396
  %v466 = vpop.f32.mrb[0].mxu0
  %v467 = vadd.f32 0.0, %v466
  %v468 = vpop.f32.mrb[0].mxu0
  %469 = vmatprep.mubr.f32.mxu0 0.0
  %470 = vmatmul.mubr.f32.gmra.mrb[0].mxu0 %v397
  %v471 = vpop.f32.mrb[0].mxu0
  %v472 = vadd.f32 0.0, %v471
  %v473 = vpop.f32.mrb[0].mxu0
  %474 = vmatprep.mubr.f32.mxu0 0.0
  %475 = vmatmul.mubr.f32.gmra.mrb[0].mxu0 %v398
  %v476 = vpop.f32.mrb[0].mxu0
  %v477 = vadd.f32 0.0, %v476
  %v478 = vpop.f32.mrb[0].mxu0
  %479 = vmatprep.mubr.f32.mxu0 0.0
  %480 = vmatmul.mubr.f32.gmra.mrb[0].mxu0 %v399
  %v481 = vpop.f32.mrb[0].mxu0
  %v482 = vadd.f32 0.0, %v481
  %v483 = vpop.f32.mrb[0].mxu0
  %484 = vdwg.mxu0
  %s485 = scalar_lea.vmem %s5, 32
  %v486 = vld [vmem:[%s485] sm:$0xff]
  %v487 = vld [vmem:[%s485 + $0x8] sm:$0xff]
  %v488 = vld [vmem:[%s485 + $0x10] sm:$0xff]
  %v489 = vld [vmem:[%s485 + $0x18] sm:$0xff]
  %vm490 = vcmask 261120
  %v492 = vsel %vm490, %v467, 0
  %v495 = vsel %vm490, %v472, 0
  %v498 = vsel %vm490, %v477, 0
  %v501 = vsel %vm490, %v482, 0
  %503 = vmatprep.subr.mxu0 0.0
  %504 = vmatpush1.msra.mxu0 %v486
  %505 = vmatprep.subr.mxu0 0.0
  %506 = vmatpush1.msra.mxu0 %v487
  %507 = vmatprep.subr.mxu0 0.0
  %508 = vmatpush1.msra.mxu0 %v488
  %509 = vmatprep.subr.mxu0 0.0
  %510 = vmatpush1.msra.mxu0 %v489
  %511 = vmatprep.subr.mxu0 0.0
  %512 = vmatpush1.msra.mxu0 0.0
  %513 = vmatprep.subr.mxu0 0.0
  %514 = vmatpush1.msra.mxu0 0.0
  %515 = vmatprep.subr.mxu0 0.0
  %516 = vmatpush1.msra.mxu0 0.0
  %517 = vmatprep.subr.mxu0 0.0
  %518 = vmatpush1.msra.mxu0 0.0
  %519 = vmatprep.subr.mxu0 0.0
  %520 = vmatpush1.msra.mxu0 0.0
  %521 = vmatprep.subr.mxu0 0.0
  %522 = vmatpush1.msra.mxu0 0.0
  %523 = vmatprep.subr.mxu0 0.0
  %524 = vmatpush1.msra.mxu0 0.0
  %525 = vmatprep.subr.mxu0 0.0
  %526 = vmatpush1.msra.mxu0 0.0
  %527 = vmatprep.subr.mxu0 0.0
  %528 = vmatpush1.msra.mxu0 0.0
  %529 = vmatprep.subr.mxu0 0.0
  %530 = vmatpush1.msra.mxu0 0.0
  %531 = vmatprep.subr.mxu0 0.0
  %532 = vmatpush1.msra.mxu0 0.0
  %533 = vmatprep.subr.mxu0 0.0
  %534 = vmatpush1.msra.mxu0 0.0
  %535 = vmatprep.subr.mxu0 0.0
  %536 = vmatpush1.msra.mxu0 0.0
  %537 = vmatprep.subr.mxu0 0.0
  %538 = vmatpush1.msra.mxu0 0.0
  %539 = vmatprep.subr.mxu0 0.0
  %540 = vmatpush1.msra.mxu0 0.0
  %541 = vmatprep.subr.mxu0 0.0
  %542 = vmatpush1.msra.mxu0 0.0
  %543 = vmatprep.subr.mxu0 0.0
  %544 = vmatpush1.msra.mxu0 0.0
  %545 = vmatprep.subr.mxu0 0.0
  %546 = vmatpush1.msra.mxu0 0.0
  %547 = vmatprep.subr.mxu0 0.0
  %548 = vmatpush1.msra.mxu0 0.0
  %549 = vmatprep.subr.mxu0 0.0
  %550 = vmatpush1.msra.mxu0 0.0
  %551 = vmatprep.subr.mxu0 0.0
  %552 = vmatpush1.msra.mxu0 0.0
  %553 = vmatprep.subr.mxu0 0.0
  %554 = vmatpush1.msra.mxu0 0.0
  %555 = vmatprep.subr.mxu0 0.0
  %556 = vmatpush1.msra.mxu0 0.0
  %557 = vmatprep.subr.mxu0 0.0
  %558 = vmatpush1.msra.mxu0 0.0
  %559 = vmatprep.subr.mxu0 0.0
  %560 = vmatpush1.msra.mxu0 0.0
  %561 = vmatprep.subr.mxu0 0.0
  %562 = vmatpush1.msra.mxu0 0.0
  %563 = vmatprep.subr.mxu0 0.0
  %564 = vmatpush1.msra.mxu0 0.0
  %565 = vmatprep.subr.mxu0 0.0
  %566 = vmatpush1.msra.mxu0 0.0
  %567 = vmatprep.mubr.f32.mxu0 0.0
  %568 = vmatmul.mubr.f32.gmra.mrb[0].mxu0 %v492
  %v569 = vpop.f32.mrb[0].mxu0
  %v570 = vadd.f32 0.0, %v569
  %v571 = vpop.f32.mrb[0].mxu0
  %572 = vmatprep.mubr.f32.mxu0 0.0
  %573 = vmatmul.mubr.f32.gmra.mrb[0].mxu0 %v495
  %v574 = vpop.f32.mrb[0].mxu0
  %v575 = vadd.f32 0.0, %v574
  %v576 = vpop.f32.mrb[0].mxu0
  %577 = vmatprep.mubr.f32.mxu0 0.0
  %578 = vmatmul.mubr.f32.gmra.mrb[0].mxu0 %v498
  %v579 = vpop.f32.mrb[0].mxu0
  %v580 = vadd.f32 0.0, %v579
  %v581 = vpop.f32.mrb[0].mxu0
  %582 = vmatprep.mubr.f32.mxu0 0.0
  %583 = vmatmul.mubr.f32.gmra.mrb[0].mxu0 %v501
  %v584 = vpop.f32.mrb[0].mxu0
  %v585 = vadd.f32 0.0, %v584
  %v586 = vpop.f32.mrb[0].mxu0
  %587 = vdwg.mxu0
  %v589 = vsel %vm490, %v373, 0
  %v592 = vsel %vm490, %v378, 0
  %v595 = vsel %vm490, %v383, 0
  %v598 = vsel %vm490, %v388, 0
  %600 = vmatprep.subr.mxu0 0.0
  %601 = vmatpush1.msra.mxu0 %v391
  %602 = vmatprep.subr.mxu0 0.0
  %603 = vmatpush1.msra.mxu0 %v392
  %604 = vmatprep.subr.mxu0 0.0
  %605 = vmatpush1.msra.mxu0 %v393
  %606 = vmatprep.subr.mxu0 0.0
  %607 = vmatpush1.msra.mxu0 %v394
  %608 = vmatprep.subr.mxu0 0.0
  %609 = vmatpush1.msra.mxu0 0.0
  %610 = vmatprep.subr.mxu0 0.0
  %611 = vmatpush1.msra.mxu0 0.0
  %612 = vmatprep.subr.mxu0 0.0
  %613 = vmatpush1.msra.mxu0 0.0
  %614 = vmatprep.subr.mxu0 0.0
  %615 = vmatpush1.msra.mxu0 0.0
  %616 = vmatprep.subr.mxu0 0.0
  %617 = vmatpush1.msra.mxu0 0.0
  %618 = vmatprep.subr.mxu0 0.0
  %619 = vmatpush1.msra.mxu0 0.0
  %620 = vmatprep.subr.mxu0 0.0
  %621 = vmatpush1.msra.mxu0 0.0
  %622 = vmatprep.subr.mxu0 0.0
  %623 = vmatpush1.msra.mxu0 0.0
  %624 = vmatprep.subr.mxu0 0.0
  %625 = vmatpush1.msra.mxu0 0.0
  %626 = vmatprep.subr.mxu0 0.0
  %627 = vmatpush1.msra.mxu0 0.0
  %628 = vmatprep.subr.mxu0 0.0
  %629 = vmatpush1.msra.mxu0 0.0
  %630 = vmatprep.subr.mxu0 0.0
  %631 = vmatpush1.msra.mxu0 0.0
  %632 = vmatprep.subr.mxu0 0.0
  %633 = vmatpush1.msra.mxu0 0.0
  %634 = vmatprep.subr.mxu0 0.0
  %635 = vmatpush1.msra.mxu0 0.0
  %636 = vmatprep.subr.mxu0 0.0
  %637 = vmatpush1.msra.mxu0 0.0
  %638 = vmatprep.subr.mxu0 0.0
  %639 = vmatpush1.msra.mxu0 0.0
  %640 = vmatprep.subr.mxu0 0.0
  %641 = vmatpush1.msra.mxu0 0.0
  %642 = vmatprep.subr.mxu0 0.0
  %643 = vmatpush1.msra.mxu0 0.0
  %644 = vmatprep.subr.mxu0 0.0
  %645 = vmatpush1.msra.mxu0 0.0
  %646 = vmatprep.subr.mxu0 0.0
  %647 = vmatpush1.msra.mxu0 0.0
  %648 = vmatprep.subr.mxu0 0.0
  %649 = vmatpush1.msra.mxu0 0.0
  %650 = vmatprep.subr.mxu0 0.0
  %651 = vmatpush1.msra.mxu0 0.0
  %652 = vmatprep.subr.mxu0 0.0
  %653 = vmatpush1.msra.mxu0 0.0
  %654 = vmatprep.subr.mxu0 0.0
  %655 = vmatpush1.msra.mxu0 0.0
  %656 = vmatprep.subr.mxu0 0.0
  %657 = vmatpush1.msra.mxu0 0.0
  %658 = vmatprep.subr.mxu0 0.0
  %659 = vmatpush1.msra.mxu0 0.0
  %660 = vmatprep.subr.mxu0 0.0
  %661 = vmatpush1.msra.mxu0 0.0
  %662 = vmatprep.subr.mxu0 0.0
  %663 = vmatpush1.msra.mxu0 0.0
  %664 = vmatprep.mubr.f32.mxu0 0.0
  %665 = vmatmul.mubr.f32.gmra.mrb[0].mxu0 %v589
  %v666 = vpop.f32.mrb[0].mxu0
  %v667 = vadd.f32 %v570, %v666
  %v668 = vpop.f32.mrb[0].mxu0
  %669 = vmatprep.mubr.f32.mxu0 0.0
  %670 = vmatmul.mubr.f32.gmra.mrb[0].mxu0 %v592
  %v671 = vpop.f32.mrb[0].mxu0
  %v672 = vadd.f32 %v575, %v671
  %v673 = vpop.f32.mrb[0].mxu0
  %674 = vmatprep.mubr.f32.mxu0 0.0
  %675 = vmatmul.mubr.f32.gmra.mrb[0].mxu0 %v595
  %v676 = vpop.f32.mrb[0].mxu0
  %v677 = vadd.f32 %v580, %v676
  %v678 = vpop.f32.mrb[0].mxu0
  %679 = vmatprep.mubr.f32.mxu0 0.0
  %680 = vmatmul.mubr.f32.gmra.mrb[0].mxu0 %v598
  %v681 = vpop.f32.mrb[0].mxu0
  %v682 = vadd.f32 %v585, %v681
  %v683 = vpop.f32.mrb[0].mxu0
  %684 = vdwg.mxu0
  %s685 = scalar_lea.vmem %s4, 64
  %v686 = vld [vmem:[%s685] sm:$0xff]
  %v687 = vld [vmem:[%s685 + $0x8] sm:$0xff]
  %v688 = vld [vmem:[%s685 + $0x10] sm:$0xff]
  %v689 = vld [vmem:[%s685 + $0x18] sm:$0xff]
  %690 = vmatprep.subr.mxu0 0.0
  %691 = vmatpush1.msra.mxu0 %v286
  %692 = vmatprep.subr.mxu0 0.0
  %693 = vmatpush1.msra.mxu0 %v287
  %694 = vmatprep.subr.mxu0 0.0
  %695 = vmatpush1.msra.mxu0 %v288
  %696 = vmatprep.subr.mxu0 0.0
  %697 = vmatpush1.msra.mxu0 %v289
  %698 = vmatprep.subr.mxu0 0.0
  %699 = vmatpush1.msra.mxu0 %v290
  %700 = vmatprep.subr.mxu0 0.0
  %701 = vmatpush1.msra.mxu0 %v291
  %702 = vmatprep.subr.mxu0 0.0
  %703 = vmatpush1.msra.mxu0 %v292
  %704 = vmatprep.subr.mxu0 0.0
  %705 = vmatpush1.msra.mxu0 %v293
  %706 = vmatprep.subr.mxu0 0.0
  %707 = vmatpush1.msra.mxu0 %v294
  %708 = vmatprep.subr.mxu0 0.0
  %709 = vmatpush1.msra.mxu0 %v295
  %710 = vmatprep.subr.mxu0 0.0
  %711 = vmatpush1.msra.mxu0 %v296
  %712 = vmatprep.subr.mxu0 0.0
  %713 = vmatpush1.msra.mxu0 %v297
  %714 = vmatprep.subr.mxu0 0.0
  %715 = vmatpush1.msra.mxu0 %v298
  %716 = vmatprep.subr.mxu0 0.0
  %717 = vmatpush1.msra.mxu0 %v299
  %718 = vmatprep.subr.mxu0 0.0
  %719 = vmatpush1.msra.mxu0 %v300
  %720 = vmatprep.subr.mxu0 0.0
  %721 = vmatpush1.msra.mxu0 %v301
  %722 = vmatprep.subr.mxu0 0.0
  %723 = vmatpush1.msra.mxu0 0.0
  %724 = vmatprep.subr.mxu0 0.0
  %725 = vmatpush1.msra.mxu0 0.0
  %726 = vmatprep.subr.mxu0 0.0
  %727 = vmatpush1.msra.mxu0 0.0
  %728 = vmatprep.subr.mxu0 0.0
  %729 = vmatpush1.msra.mxu0 0.0
  %730 = vmatprep.subr.mxu0 0.0
  %731 = vmatpush1.msra.mxu0 0.0
  %732 = vmatprep.subr.mxu0 0.0
  %733 = vmatpush1.msra.mxu0 0.0
  %734 = vmatprep.subr.mxu0 0.0
  %735 = vmatpush1.msra.mxu0 0.0
  %736 = vmatprep.subr.mxu0 0.0
  %737 = vmatpush1.msra.mxu0 0.0
  %738 = vmatprep.subr.mxu0 0.0
  %739 = vmatpush1.msra.mxu0 0.0
  %740 = vmatprep.subr.mxu0 0.0
  %741 = vmatpush1.msra.mxu0 0.0
  %742 = vmatprep.subr.mxu0 0.0
  %743 = vmatpush1.msra.mxu0 0.0
  %744 = vmatprep.subr.mxu0 0.0
  %745 = vmatpush1.msra.mxu0 0.0
  %746 = vmatprep.subr.mxu0 0.0
  %747 = vmatpush1.msra.mxu0 0.0
  %748 = vmatprep.subr.mxu0 0.0
  %749 = vmatpush1.msra.mxu0 0.0
  %750 = vmatprep.subr.mxu0 0.0
  %751 = vmatpush1.msra.mxu0 0.0
  %752 = vmatprep.subr.mxu0 0.0
  %753 = vmatpush1.msra.mxu0 0.0
  %754 = vmatprep.mubr.f32.mxu0 0.0
  %755 = vmatmul.mubr.f32.gmra.mrb[0].mxu0 %v686
  %v756 = vpop.f32.mrb[0].mxu0
  %v757 = vadd.f32 0.0, %v756
  %v758 = vpop.f32.mrb[0].mxu0
  %759 = vmatprep.mubr.f32.mxu0 0.0
  %760 = vmatmul.mubr.f32.gmra.mrb[0].mxu0 %v687
  %v761 = vpop.f32.mrb[0].mxu0
  %v762 = vadd.f32 0.0, %v761
  %v763 = vpop.f32.mrb[0].mxu0
  %764 = vmatprep.mubr.f32.mxu0 0.0
  %765 = vmatmul.mubr.f32.gmra.mrb[0].mxu0 %v688
  %v766 = vpop.f32.mrb[0].mxu0
  %v767 = vadd.f32 0.0, %v766
  %v768 = vpop.f32.mrb[0].mxu0
  %769 = vmatprep.mubr.f32.mxu0 0.0
  %770 = vmatmul.mubr.f32.gmra.mrb[0].mxu0 %v689
  %v771 = vpop.f32.mrb[0].mxu0
  %v772 = vadd.f32 0.0, %v771
  %v773 = vpop.f32.mrb[0].mxu0
  %774 = vdwg.mxu0
  %s775 = scalar_lea.vmem %s5, 64
  %v776 = vld [vmem:[%s775] sm:$0xff]
  %v777 = vld [vmem:[%s775 + $0x8] sm:$0xff]
  %v778 = vld [vmem:[%s775 + $0x10] sm:$0xff]
  %v779 = vld [vmem:[%s775 + $0x18] sm:$0xff]
  %v781 = vsel %vm490, %v757, 0
  %v784 = vsel %vm490, %v762, 0
  %v787 = vsel %vm490, %v767, 0
  %v790 = vsel %vm490, %v772, 0
  %792 = vmatprep.subr.mxu0 0.0
  %793 = vmatpush1.msra.mxu0 %v776
  %794 = vmatprep.subr.mxu0 0.0
  %795 = vmatpush1.msra.mxu0 %v777
  %796 = vmatprep.subr.mxu0 0.0
  %797 = vmatpush1.msra.mxu0 %v778
  %798 = vmatprep.subr.mxu0 0.0
  %799 = vmatpush1.msra.mxu0 %v779
  %800 = vmatprep.subr.mxu0 0.0
  %801 = vmatpush1.msra.mxu0 0.0
  %802 = vmatprep.subr.mxu0 0.0
  %803 = vmatpush1.msra.mxu0 0.0
  %804 = vmatprep.subr.mxu0 0.0
  %805 = vmatpush1.msra.mxu0 0.0
  %806 = vmatprep.subr.mxu0 0.0
  %807 = vmatpush1.msra.mxu0 0.0
  %808 = vmatprep.subr.mxu0 0.0
  %809 = vmatpush1.msra.mxu0 0.0
  %810 = vmatprep.subr.mxu0 0.0
  %811 = vmatpush1.msra.mxu0 0.0
  %812 = vmatprep.subr.mxu0 0.0
  %813 = vmatpush1.msra.mxu0 0.0
  %814 = vmatprep.subr.mxu0 0.0
  %815 = vmatpush1.msra.mxu0 0.0
  %816 = vmatprep.subr.mxu0 0.0
  %817 = vmatpush1.msra.mxu0 0.0
  %818 = vmatprep.subr.mxu0 0.0
  %819 = vmatpush1.msra.mxu0 0.0
  %820 = vmatprep.subr.mxu0 0.0
  %821 = vmatpush1.msra.mxu0 0.0
  %822 = vmatprep.subr.mxu0 0.0
  %823 = vmatpush1.msra.mxu0 0.0
  %824 = vmatprep.subr.mxu0 0.0
  %825 = vmatpush1.msra.mxu0 0.0
  %826 = vmatprep.subr.mxu0 0.0
  %827 = vmatpush1.msra.mxu0 0.0
  %828 = vmatprep.subr.mxu0 0.0
  %829 = vmatpush1.msra.mxu0 0.0
  %830 = vmatprep.subr.mxu0 0.0
  %831 = vmatpush1.msra.mxu0 0.0
  %832 = vmatprep.subr.mxu0 0.0
  %833 = vmatpush1.msra.mxu0 0.0
  %834 = vmatprep.subr.mxu0 0.0
  %835 = vmatpush1.msra.mxu0 0.0
  %836 = vmatprep.subr.mxu0 0.0
  %837 = vmatpush1.msra.mxu0 0.0
  %838 = vmatprep.subr.mxu0 0.0
  %839 = vmatpush1.msra.mxu0 0.0
  %840 = vmatprep.subr.mxu0 0.0
  %841 = vmatpush1.msra.mxu0 0.0
  %842 = vmatprep.subr.mxu0 0.0
  %843 = vmatpush1.msra.mxu0 0.0
  %844 = vmatprep.subr.mxu0 0.0
  %845 = vmatpush1.msra.mxu0 0.0
  %846 = vmatprep.subr.mxu0 0.0
  %847 = vmatpush1.msra.mxu0 0.0
  %848 = vmatprep.subr.mxu0 0.0
  %849 = vmatpush1.msra.mxu0 0.0
  %850 = vmatprep.subr.mxu0 0.0
  %851 = vmatpush1.msra.mxu0 0.0
  %852 = vmatprep.subr.mxu0 0.0
  %853 = vmatpush1.msra.mxu0 0.0
  %854 = vmatprep.subr.mxu0 0.0
  %855 = vmatpush1.msra.mxu0 0.0
  %856 = vmatprep.mubr.f32.mxu0 0.0
  %857 = vmatmul.mubr.f32.gmra.mrb[0].mxu0 %v781
  %v858 = vpop.f32.mrb[0].mxu0
  %v859 = vadd.f32 0.0, %v858
  %v860 = vpop.f32.mrb[0].mxu0
  %861 = vmatprep.mubr.f32.mxu0 0.0
  %862 = vmatmul.mubr.f32.gmra.mrb[0].mxu0 %v784
  %v863 = vpop.f32.mrb[0].mxu0
  %v864 = vadd.f32 0.0, %v863
  %v865 = vpop.f32.mrb[0].mxu0
  %866 = vmatprep.mubr.f32.mxu0 0.0
  %867 = vmatmul.mubr.f32.gmra.mrb[0].mxu0 %v787
  %v868 = vpop.f32.mrb[0].mxu0
  %v869 = vadd.f32 0.0, %v868
  %v870 = vpop.f32.mrb[0].mxu0
  %871 = vmatprep.mubr.f32.mxu0 0.0
  %872 = vmatmul.mubr.f32.gmra.mrb[0].mxu0 %v790
  %v873 = vpop.f32.mrb[0].mxu0
  %v874 = vadd.f32 0.0, %v873
  %v875 = vpop.f32.mrb[0].mxu0
  %876 = vdwg.mxu0
  %v877 = vadd.f32 %v667, %v859
  %v878 = vadd.f32 %v672, %v864
  %v879 = vadd.f32 %v677, %v869
  %v880 = vadd.f32 %v682, %v874
  %s881 = scalar_lea.vmem %s4, 96
  %v882 = vld [vmem:[%s881] sm:$0xff]
  %v883 = vld [vmem:[%s881 + $0x8] sm:$0xff]
  %v884 = vld [vmem:[%s881 + $0x10] sm:$0xff]
  %v885 = vld [vmem:[%s881 + $0x18] sm:$0xff]
  %886 = vmatprep.subr.mxu0 0.0
  %887 = vmatpush1.msra.mxu0 %v286
  %888 = vmatprep.subr.mxu0 0.0
  %889 = vmatpush1.msra.mxu0 %v287
  %890 = vmatprep.subr.mxu0 0.0
  %891 = vmatpush1.msra.mxu0 %v288
  %892 = vmatprep.subr.mxu0 0.0
  %893 = vmatpush1.msra.mxu0 %v289
  %894 = vmatprep.subr.mxu0 0.0
  %895 = vmatpush1.msra.mxu0 %v290
  %896 = vmatprep.subr.mxu0 0.0
  %897 = vmatpush1.msra.mxu0 %v291
  %898 = vmatprep.subr.mxu0 0.0
  %899 = vmatpush1.msra.mxu0 %v292
  %900 = vmatprep.subr.mxu0 0.0
  %901 = vmatpush1.msra.mxu0 %v293
  %902 = vmatprep.subr.mxu0 0.0
  %903 = vmatpush1.msra.mxu0 %v294
  %904 = vmatprep.subr.mxu0 0.0
  %905 = vmatpush1.msra.mxu0 %v295
  %906 = vmatprep.subr.mxu0 0.0
  %907 = vmatpush1.msra.mxu0 %v296
  %908 = vmatprep.subr.mxu0 0.0
  %909 = vmatpush1.msra.mxu0 %v297
  %910 = vmatprep.subr.mxu0 0.0
  %911 = vmatpush1.msra.mxu0 %v298
  %912 = vmatprep.subr.mxu0 0.0
  %913 = vmatpush1.msra.mxu0 %v299
  %914 = vmatprep.subr.mxu0 0.0
  %915 = vmatpush1.msra.mxu0 %v300
  %916 = vmatprep.subr.mxu0 0.0
  %917 = vmatpush1.msra.mxu0 %v301
  %918 = vmatprep.subr.mxu0 0.0
  %919 = vmatpush1.msra.mxu0 0.0
  %920 = vmatprep.subr.mxu0 0.0
  %921 = vmatpush1.msra.mxu0 0.0
  %922 = vmatprep.subr.mxu0 0.0
  %923 = vmatpush1.msra.mxu0 0.0
  %924 = vmatprep.subr.mxu0 0.0
  %925 = vmatpush1.msra.mxu0 0.0
  %926 = vmatprep.subr.mxu0 0.0
  %927 = vmatpush1.msra.mxu0 0.0
  %928 = vmatprep.subr.mxu0 0.0
  %929 = vmatpush1.msra.mxu0 0.0
  %930 = vmatprep.subr.mxu0 0.0
  %931 = vmatpush1.msra.mxu0 0.0
  %932 = vmatprep.subr.mxu0 0.0
  %933 = vmatpush1.msra.mxu0 0.0
  %934 = vmatprep.subr.mxu0 0.0
  %935 = vmatpush1.msra.mxu0 0.0
  %936 = vmatprep.subr.mxu0 0.0
  %937 = vmatpush1.msra.mxu0 0.0
  %938 = vmatprep.subr.mxu0 0.0
  %939 = vmatpush1.msra.mxu0 0.0
  %940 = vmatprep.subr.mxu0 0.0
  %941 = vmatpush1.msra.mxu0 0.0
  %942 = vmatprep.subr.mxu0 0.0
  %943 = vmatpush1.msra.mxu0 0.0
  %944 = vmatprep.subr.mxu0 0.0
  %945 = vmatpush1.msra.mxu0 0.0
  %946 = vmatprep.subr.mxu0 0.0
  %947 = vmatpush1.msra.mxu0 0.0
  %948 = vmatprep.subr.mxu0 0.0
  %949 = vmatpush1.msra.mxu0 0.0
  %950 = vmatprep.mubr.f32.mxu0 0.0
  %951 = vmatmul.mubr.f32.gmra.mrb[0].mxu0 %v882
  %v952 = vpop.f32.mrb[0].mxu0
  %v953 = vadd.f32 0.0, %v952
  %v954 = vpop.f32.mrb[0].mxu0
  %955 = vmatprep.mubr.f32.mxu0 0.0
  %956 = vmatmul.mubr.f32.gmra.mrb[0].mxu0 %v883
  %v957 = vpop.f32.mrb[0].mxu0
  %v958 = vadd.f32 0.0, %v957
  %v959 = vpop.f32.mrb[0].mxu0
  %960 = vmatprep.mubr.f32.mxu0 0.0
  %961 = vmatmul.mubr.f32.gmra.mrb[0].mxu0 %v884
  %v962 = vpop.f32.mrb[0].mxu0
  %v963 = vadd.f32 0.0, %v962
  %v964 = vpop.f32.mrb[0].mxu0
  %965 = vmatprep.mubr.f32.mxu0 0.0
  %966 = vmatmul.mubr.f32.gmra.mrb[0].mxu0 %v885
  %v967 = vpop.f32.mrb[0].mxu0
  %v968 = vadd.f32 0.0, %v967
  %v969 = vpop.f32.mrb[0].mxu0
  %970 = vdwg.mxu0
  %s971 = scalar_lea.vmem %s5, 96
  %v972 = vld [vmem:[%s971] sm:$0xff]
  %v973 = vld [vmem:[%s971 + $0x8] sm:$0xff]
  %v974 = vld [vmem:[%s971 + $0x10] sm:$0xff]
  %v975 = vld [vmem:[%s971 + $0x18] sm:$0xff]
  %v977 = vsel %vm490, %v953, 0
  %v980 = vsel %vm490, %v958, 0
  %v983 = vsel %vm490, %v963, 0
  %v986 = vsel %vm490, %v968, 0
  %988 = vmatprep.subr.mxu0 0.0
  %989 = vmatpush1.msra.mxu0 %v972
  %990 = vmatprep.subr.mxu0 0.0
  %991 = vmatpush1.msra.mxu0 %v973
  %992 = vmatprep.subr.mxu0 0.0
  %993 = vmatpush1.msra.mxu0 %v974
  %994 = vmatprep.subr.mxu0 0.0
  %995 = vmatpush1.msra.mxu0 %v975
  %996 = vmatprep.subr.mxu0 0.0
  %997 = vmatpush1.msra.mxu0 0.0
  %998 = vmatprep.subr.mxu0 0.0
  %999 = vmatpush1.msra.mxu0 0.0
  %1000 = vmatprep.subr.mxu0 0.0
  %1001 = vmatpush1.msra.mxu0 0.0
  %1002 = vmatprep.subr.mxu0 0.0
  %1003 = vmatpush1.msra.mxu0 0.0
  %1004 = vmatprep.subr.mxu0 0.0
  %1005 = vmatpush1.msra.mxu0 0.0
  %1006 = vmatprep.subr.mxu0 0.0
  %1007 = vmatpush1.msra.mxu0 0.0
  %1008 = vmatprep.subr.mxu0 0.0
  %1009 = vmatpush1.msra.mxu0 0.0
  %1010 = vmatprep.subr.mxu0 0.0
  %1011 = vmatpush1.msra.mxu0 0.0
  %1012 = vmatprep.subr.mxu0 0.0
  %1013 = vmatpush1.msra.mxu0 0.0
  %1014 = vmatprep.subr.mxu0 0.0
  %1015 = vmatpush1.msra.mxu0 0.0
  %1016 = vmatprep.subr.mxu0 0.0
  %1017 = vmatpush1.msra.mxu0 0.0
  %1018 = vmatprep.subr.mxu0 0.0
  %1019 = vmatpush1.msra.mxu0 0.0
  %1020 = vmatprep.subr.mxu0 0.0
  %1021 = vmatpush1.msra.mxu0 0.0
  %1022 = vmatprep.subr.mxu0 0.0
  %1023 = vmatpush1.msra.mxu0 0.0
  %1024 = vmatprep.subr.mxu0 0.0
  %1025 = vmatpush1.msra.mxu0 0.0
  %1026 = vmatprep.subr.mxu0 0.0
  %1027 = vmatpush1.msra.mxu0 0.0
  %1028 = vmatprep.subr.mxu0 0.0
  %1029 = vmatpush1.msra.mxu0 0.0
  %1030 = vmatprep.subr.mxu0 0.0
  %1031 = vmatpush1.msra.mxu0 0.0
  %1032 = vmatprep.subr.mxu0 0.0
  %1033 = vmatpush1.msra.mxu0 0.0
  %1034 = vmatprep.subr.mxu0 0.0
  %1035 = vmatpush1.msra.mxu0 0.0
  %1036 = vmatprep.subr.mxu0 0.0
  %1037 = vmatpush1.msra.mxu0 0.0
  %1038 = vmatprep.subr.mxu0 0.0
  %1039 = vmatpush1.msra.mxu0 0.0
  %1040 = vmatprep.subr.mxu0 0.0
  %1041 = vmatpush1.msra.mxu0 0.0
  %1042 = vmatprep.subr.mxu0 0.0
  %1043 = vmatpush1.msra.mxu0 0.0
  %1044 = vmatprep.subr.mxu0 0.0
  %1045 = vmatpush1.msra.mxu0 0.0
  %1046 = vmatprep.subr.mxu0 0.0
  %1047 = vmatpush1.msra.mxu0 0.0
  %1048 = vmatprep.subr.mxu0 0.0
  %1049 = vmatpush1.msra.mxu0 0.0
  %1050 = vmatprep.subr.mxu0 0.0
  %1051 = vmatpush1.msra.mxu0 0.0
  %1052 = vmatprep.mubr.f32.mxu0 0.0
  %1053 = vmatmul.mubr.f32.gmra.mrb[0].mxu0 %v977
  %v1054 = vpop.f32.mrb[0].mxu0
  %v1055 = vadd.f32 0.0, %v1054
  %v1056 = vpop.f32.mrb[0].mxu0
  %1057 = vmatprep.mubr.f32.mxu0 0.0
  %1058 = vmatmul.mubr.f32.gmra.mrb[0].mxu0 %v980
  %v1059 = vpop.f32.mrb[0].mxu0
  %v1060 = vadd.f32 0.0, %v1059
  %v1061 = vpop.f32.mrb[0].mxu0
  %1062 = vmatprep.mubr.f32.mxu0 0.0
  %1063 = vmatmul.mubr.f32.gmra.mrb[0].mxu0 %v983
  %v1064 = vpop.f32.mrb[0].mxu0
  %v1065 = vadd.f32 0.0, %v1064
  %v1066 = vpop.f32.mrb[0].mxu0
  %1067 = vmatprep.mubr.f32.mxu0 0.0
  %1068 = vmatmul.mubr.f32.gmra.mrb[0].mxu0 %v986
  %v1069 = vpop.f32.mrb[0].mxu0
  %v1070 = vadd.f32 0.0, %v1069
  %v1071 = vpop.f32.mrb[0].mxu0
  %1072 = vdwg.mxu0
  %v1073 = vadd.f32 %v877, %v1055
  %v1074 = vadd.f32 %v878, %v1060
  %v1075 = vadd.f32 %v879, %v1065
  %v1076 = vadd.f32 %v880, %v1070
  %s1077 = scalar_lea.vmem %s4, 128
  %v1078 = vld [vmem:[%s1077] sm:$0xff]
  %v1079 = vld [vmem:[%s1077 + $0x8] sm:$0xff]
  %v1080 = vld [vmem:[%s1077 + $0x10] sm:$0xff]
  %v1081 = vld [vmem:[%s1077 + $0x18] sm:$0xff]
  %1082 = vmatprep.subr.mxu0 0.0
  %1083 = vmatpush1.msra.mxu0 %v286
  %1084 = vmatprep.subr.mxu0 0.0
  %1085 = vmatpush1.msra.mxu0 %v287
  %1086 = vmatprep.subr.mxu0 0.0
  %1087 = vmatpush1.msra.mxu0 %v288
  %1088 = vmatprep.subr.mxu0 0.0
  %1089 = vmatpush1.msra.mxu0 %v289
  %1090 = vmatprep.subr.mxu0 0.0
  %1091 = vmatpush1.msra.mxu0 %v290
  %1092 = vmatprep.subr.mxu0 0.0
  %1093 = vmatpush1.msra.mxu0 %v291
  %1094 = vmatprep.subr.mxu0 0.0
  %1095 = vmatpush1.msra.mxu0 %v292
  %1096 = vmatprep.subr.mxu0 0.0
  %1097 = vmatpush1.msra.mxu0 %v293
  %1098 = vmatprep.subr.mxu0 0.0
  %1099 = vmatpush1.msra.mxu0 %v294
  %1100 = vmatprep.subr.mxu0 0.0
  %1101 = vmatpush1.msra.mxu0 %v295
  %1102 = vmatprep.subr.mxu0 0.0
  %1103 = vmatpush1.msra.mxu0 %v296
  %1104 = vmatprep.subr.mxu0 0.0
  %1105 = vmatpush1.msra.mxu0 %v297
  %1106 = vmatprep.subr.mxu0 0.0
  %1107 = vmatpush1.msra.mxu0 %v298
  %1108 = vmatprep.subr.mxu0 0.0
  %1109 = vmatpush1.msra.mxu0 %v299
  %1110 = vmatprep.subr.mxu0 0.0
  %1111 = vmatpush1.msra.mxu0 %v300
  %1112 = vmatprep.subr.mxu0 0.0
  %1113 = vmatpush1.msra.mxu0 %v301
  %1114 = vmatprep.subr.mxu0 0.0
  %1115 = vmatpush1.msra.mxu0 0.0
  %1116 = vmatprep.subr.mxu0 0.0
  %1117 = vmatpush1.msra.mxu0 0.0
  %1118 = vmatprep.subr.mxu0 0.0
  %1119 = vmatpush1.msra.mxu0 0.0
  %1120 = vmatprep.subr.mxu0 0.0
  %1121 = vmatpush1.msra.mxu0 0.0
  %1122 = vmatprep.subr.mxu0 0.0
  %1123 = vmatpush1.msra.mxu0 0.0
  %1124 = vmatprep.subr.mxu0 0.0
  %1125 = vmatpush1.msra.mxu0 0.0
  %1126 = vmatprep.subr.mxu0 0.0
  %1127 = vmatpush1.msra.mxu0 0.0
  %1128 = vmatprep.subr.mxu0 0.0
  %1129 = vmatpush1.msra.mxu0 0.0
  %1130 = vmatprep.subr.mxu0 0.0
  %1131 = vmatpush1.msra.mxu0 0.0
  %1132 = vmatprep.subr.mxu0 0.0
  %1133 = vmatpush1.msra.mxu0 0.0
  %1134 = vmatprep.subr.mxu0 0.0
  %1135 = vmatpush1.msra.mxu0 0.0
  %1136 = vmatprep.subr.mxu0 0.0
  %1137 = vmatpush1.msra.mxu0 0.0
  %1138 = vmatprep.subr.mxu0 0.0
  %1139 = vmatpush1.msra.mxu0 0.0
  %1140 = vmatprep.subr.mxu0 0.0
  %1141 = vmatpush1.msra.mxu0 0.0
  %1142 = vmatprep.subr.mxu0 0.0
  %1143 = vmatpush1.msra.mxu0 0.0
  %1144 = vmatprep.subr.mxu0 0.0
  %1145 = vmatpush1.msra.mxu0 0.0
  %1146 = vmatprep.mubr.f32.mxu0 0.0
  %1147 = vmatmul.mubr.f32.gmra.mrb[0].mxu0 %v1078
  %v1148 = vpop.f32.mrb[0].mxu0
  %v1149 = vadd.f32 0.0, %v1148
  %v1150 = vpop.f32.mrb[0].mxu0
  %1151 = vmatprep.mubr.f32.mxu0 0.0
  %1152 = vmatmul.mubr.f32.gmra.mrb[0].mxu0 %v1079
  %v1153 = vpop.f32.mrb[0].mxu0
  %v1154 = vadd.f32 0.0, %v1153
  %v1155 = vpop.f32.mrb[0].mxu0
  %1156 = vmatprep.mubr.f32.mxu0 0.0
  %1157 = vmatmul.mubr.f32.gmra.mrb[0].mxu0 %v1080
  %v1158 = vpop.f32.mrb[0].mxu0
  %v1159 = vadd.f32 0.0, %v1158
  %v1160 = vpop.f32.mrb[0].mxu0
  %1161 = vmatprep.mubr.f32.mxu0 0.0
  %1162 = vmatmul.mubr.f32.gmra.mrb[0].mxu0 %v1081
  %v1163 = vpop.f32.mrb[0].mxu0
  %v1164 = vadd.f32 0.0, %v1163
  %v1165 = vpop.f32.mrb[0].mxu0
  %1166 = vdwg.mxu0
  %s1167 = scalar_lea.vmem %s5, 128
  %v1168 = vld [vmem:[%s1167] sm:$0xff]
  %v1169 = vld [vmem:[%s1167 + $0x8] sm:$0xff]
  %v1170 = vld [vmem:[%s1167 + $0x10] sm:$0xff]
  %v1171 = vld [vmem:[%s1167 + $0x18] sm:$0xff]
  %v1173 = vsel %vm490, %v1149, 0
  %v1176 = vsel %vm490, %v1154, 0
  %v1179 = vsel %vm490, %v1159, 0
  %v1182 = vsel %vm490, %v1164, 0
  %1184 = vmatprep.subr.mxu0 0.0
  %1185 = vmatpush1.msra.mxu0 %v1168
  %1186 = vmatprep.subr.mxu0 0.0
  %1187 = vmatpush1.msra.mxu0 %v1169
  %1188 = vmatprep.subr.mxu0 0.0
  %1189 = vmatpush1.msra.mxu0 %v1170
  %1190 = vmatprep.subr.mxu0 0.0
  %1191 = vmatpush1.msra.mxu0 %v1171
  %1192 = vmatprep.subr.mxu0 0.0
  %1193 = vmatpush1.msra.mxu0 0.0
  %1194 = vmatprep.subr.mxu0 0.0
  %1195 = vmatpush1.msra.mxu0 0.0
  %1196 = vmatprep.subr.mxu0 0.0
  %1197 = vmatpush1.msra.mxu0 0.0
  %1198 = vmatprep.subr.mxu0 0.0
  %1199 = vmatpush1.msra.mxu0 0.0
  %1200 = vmatprep.subr.mxu0 0.0
  %1201 = vmatpush1.msra.mxu0 0.0
  %1202 = vmatprep.subr.mxu0 0.0
  %1203 = vmatpush1.msra.mxu0 0.0
  %1204 = vmatprep.subr.mxu0 0.0
  %1205 = vmatpush1.msra.mxu0 0.0
  %1206 = vmatprep.subr.mxu0 0.0
  %1207 = vmatpush1.msra.mxu0 0.0
  %1208 = vmatprep.subr.mxu0 0.0
  %1209 = vmatpush1.msra.mxu0 0.0
  %1210 = vmatprep.subr.mxu0 0.0
  %1211 = vmatpush1.msra.mxu0 0.0
  %1212 = vmatprep.subr.mxu0 0.0
  %1213 = vmatpush1.msra.mxu0 0.0
  %1214 = vmatprep.subr.mxu0 0.0
  %1215 = vmatpush1.msra.mxu0 0.0
  %1216 = vmatprep.subr.mxu0 0.0
  %1217 = vmatpush1.msra.mxu0 0.0
  %1218 = vmatprep.subr.mxu0 0.0
  %1219 = vmatpush1.msra.mxu0 0.0
  %1220 = vmatprep.subr.mxu0 0.0
  %1221 = vmatpush1.msra.mxu0 0.0
  %1222 = vmatprep.subr.mxu0 0.0
  %1223 = vmatpush1.msra.mxu0 0.0
  %1224 = vmatprep.subr.mxu0 0.0
  %1225 = vmatpush1.msra.mxu0 0.0
  %1226 = vmatprep.subr.mxu0 0.0
  %1227 = vmatpush1.msra.mxu0 0.0
  %1228 = vmatprep.subr.mxu0 0.0
  %1229 = vmatpush1.msra.mxu0 0.0
  %1230 = vmatprep.subr.mxu0 0.0
  %1231 = vmatpush1.msra.mxu0 0.0
  %1232 = vmatprep.subr.mxu0 0.0
  %1233 = vmatpush1.msra.mxu0 0.0
  %1234 = vmatprep.subr.mxu0 0.0
  %1235 = vmatpush1.msra.mxu0 0.0
  %1236 = vmatprep.subr.mxu0 0.0
  %1237 = vmatpush1.msra.mxu0 0.0
  %1238 = vmatprep.subr.mxu0 0.0
  %1239 = vmatpush1.msra.mxu0 0.0
  %1240 = vmatprep.subr.mxu0 0.0
  %1241 = vmatpush1.msra.mxu0 0.0
  %1242 = vmatprep.subr.mxu0 0.0
  %1243 = vmatpush1.msra.mxu0 0.0
  %1244 = vmatprep.subr.mxu0 0.0
  %1245 = vmatpush1.msra.mxu0 0.0
  %1246 = vmatprep.subr.mxu0 0.0
  %1247 = vmatpush1.msra.mxu0 0.0
  %1248 = vmatprep.mubr.f32.mxu0 0.0
  %1249 = vmatmul.mubr.f32.gmra.mrb[0].mxu0 %v1173
  %v1250 = vpop.f32.mrb[0].mxu0
  %v1251 = vadd.f32 0.0, %v1250
  %v1252 = vpop.f32.mrb[0].mxu0
  %1253 = vmatprep.mubr.f32.mxu0 0.0
  %1254 = vmatmul.mubr.f32.gmra.mrb[0].mxu0 %v1176
  %v1255 = vpop.f32.mrb[0].mxu0
  %v1256 = vadd.f32 0.0, %v1255
  %v1257 = vpop.f32.mrb[0].mxu0
  %1258 = vmatprep.mubr.f32.mxu0 0.0
  %1259 = vmatmul.mubr.f32.gmra.mrb[0].mxu0 %v1179
  %v1260 = vpop.f32.mrb[0].mxu0
  %v1261 = vadd.f32 0.0, %v1260
  %v1262 = vpop.f32.mrb[0].mxu0
  %1263 = vmatprep.mubr.f32.mxu0 0.0
  %1264 = vmatmul.mubr.f32.gmra.mrb[0].mxu0 %v1182
  %v1265 = vpop.f32.mrb[0].mxu0
  %v1266 = vadd.f32 0.0, %v1265
  %v1267 = vpop.f32.mrb[0].mxu0
  %1268 = vdwg.mxu0
  %v1269 = vadd.f32 %v1073, %v1251
  %v1270 = vadd.f32 %v1074, %v1256
  %v1271 = vadd.f32 %v1075, %v1261
  %v1272 = vadd.f32 %v1076, %v1266
  %s1273 = scalar_lea.vmem %s4, 160
  %v1274 = vld [vmem:[%s1273] sm:$0xff]
  %v1275 = vld [vmem:[%s1273 + $0x8] sm:$0xff]
  %v1276 = vld [vmem:[%s1273 + $0x10] sm:$0xff]
  %v1277 = vld [vmem:[%s1273 + $0x18] sm:$0xff]
  %1278 = vmatprep.subr.mxu0 0.0
  %1279 = vmatpush1.msra.mxu0 %v286
  %1280 = vmatprep.subr.mxu0 0.0
  %1281 = vmatpush1.msra.mxu0 %v287
  %1282 = vmatprep.subr.mxu0 0.0
  %1283 = vmatpush1.msra.mxu0 %v288
  %1284 = vmatprep.subr.mxu0 0.0
  %1285 = vmatpush1.msra.mxu0 %v289
  %1286 = vmatprep.subr.mxu0 0.0
  %1287 = vmatpush1.msra.mxu0 %v290
  %1288 = vmatprep.subr.mxu0 0.0
  %1289 = vmatpush1.msra.mxu0 %v291
  %1290 = vmatprep.subr.mxu0 0.0
  %1291 = vmatpush1.msra.mxu0 %v292
  %1292 = vmatprep.subr.mxu0 0.0
  %1293 = vmatpush1.msra.mxu0 %v293
  %1294 = vmatprep.subr.mxu0 0.0
  %1295 = vmatpush1.msra.mxu0 %v294
  %1296 = vmatprep.subr.mxu0 0.0
  %1297 = vmatpush1.msra.mxu0 %v295
  %1298 = vmatprep.subr.mxu0 0.0
  %1299 = vmatpush1.msra.mxu0 %v296
  %1300 = vmatprep.subr.mxu0 0.0
  %1301 = vmatpush1.msra.mxu0 %v297
  %1302 = vmatprep.subr.mxu0 0.0
  %1303 = vmatpush1.msra.mxu0 %v298
  %1304 = vmatprep.subr.mxu0 0.0
  %1305 = vmatpush1.msra.mxu0 %v299
  %1306 = vmatprep.subr.mxu0 0.0
  %1307 = vmatpush1.msra.mxu0 %v300
  %1308 = vmatprep.subr.mxu0 0.0
  %1309 = vmatpush1.msra.mxu0 %v301
  %1310 = vmatprep.subr.mxu0 0.0
  %1311 = vmatpush1.msra.mxu0 0.0
  %1312 = vmatprep.subr.mxu0 0.0
  %1313 = vmatpush1.msra.mxu0 0.0
  %1314 = vmatprep.subr.mxu0 0.0
  %1315 = vmatpush1.msra.mxu0 0.0
  %1316 = vmatprep.subr.mxu0 0.0
  %1317 = vmatpush1.msra.mxu0 0.0
  %1318 = vmatprep.subr.mxu0 0.0
  %1319 = vmatpush1.msra.mxu0 0.0
  %1320 = vmatprep.subr.mxu0 0.0
  %1321 = vmatpush1.msra.mxu0 0.0
  %1322 = vmatprep.subr.mxu0 0.0
  %1323 = vmatpush1.msra.mxu0 0.0
  %1324 = vmatprep.subr.mxu0 0.0
  %1325 = vmatpush1.msra.mxu0 0.0
  %1326 = vmatprep.subr.mxu0 0.0
  %1327 = vmatpush1.msra.mxu0 0.0
  %1328 = vmatprep.subr.mxu0 0.0
  %1329 = vmatpush1.msra.mxu0 0.0
  %1330 = vmatprep.subr.mxu0 0.0
  %1331 = vmatpush1.msra.mxu0 0.0
  %1332 = vmatprep.subr.mxu0 0.0
  %1333 = vmatpush1.msra.mxu0 0.0
  %1334 = vmatprep.subr.mxu0 0.0
  %1335 = vmatpush1.msra.mxu0 0.0
  %1336 = vmatprep.subr.mxu0 0.0
  %1337 = vmatpush1.msra.mxu0 0.0
  %1338 = vmatprep.subr.mxu0 0.0
  %1339 = vmatpush1.msra.mxu0 0.0
  %1340 = vmatprep.subr.mxu0 0.0
  %1341 = vmatpush1.msra.mxu0 0.0
  %1342 = vmatprep.mubr.f32.mxu0 0.0
  %1343 = vmatmul.mubr.f32.gmra.mrb[0].mxu0 %v1274
  %v1344 = vpop.f32.mrb[0].mxu0
  %v1345 = vadd.f32 0.0, %v1344
  %v1346 = vpop.f32.mrb[0].mxu0
  %1347 = vmatprep.mubr.f32.mxu0 0.0
  %1348 = vmatmul.mubr.f32.gmra.mrb[0].mxu0 %v1275
  %v1349 = vpop.f32.mrb[0].mxu0
  %v1350 = vadd.f32 0.0, %v1349
  %v1351 = vpop.f32.mrb[0].mxu0
  %1352 = vmatprep.mubr.f32.mxu0 0.0
  %1353 = vmatmul.mubr.f32.gmra.mrb[0].mxu0 %v1276
  %v1354 = vpop.f32.mrb[0].mxu0
  %v1355 = vadd.f32 0.0, %v1354
  %v1356 = vpop.f32.mrb[0].mxu0
  %1357 = vmatprep.mubr.f32.mxu0 0.0
  %1358 = vmatmul.mubr.f32.gmra.mrb[0].mxu0 %v1277
  %v1359 = vpop.f32.mrb[0].mxu0
  %v1360 = vadd.f32 0.0, %v1359
  %v1361 = vpop.f32.mrb[0].mxu0
  %1362 = vdwg.mxu0
  %s1363 = scalar_lea.vmem %s5, 160
  %v1364 = vld [vmem:[%s1363] sm:$0xff]
  %v1365 = vld [vmem:[%s1363 + $0x8] sm:$0xff]
  %v1366 = vld [vmem:[%s1363 + $0x10] sm:$0xff]
  %v1367 = vld [vmem:[%s1363 + $0x18] sm:$0xff]
  %v1369 = vsel %vm490, %v1345, 0
  %v1372 = vsel %vm490, %v1350, 0
  %v1375 = vsel %vm490, %v1355, 0
  %v1378 = vsel %vm490, %v1360, 0
  %1380 = vmatprep.subr.mxu0 0.0
  %1381 = vmatpush1.msra.mxu0 %v1364
  %1382 = vmatprep.subr.mxu0 0.0
  %1383 = vmatpush1.msra.mxu0 %v1365
  %1384 = vmatprep.subr.mxu0 0.0
  %1385 = vmatpush1.msra.mxu0 %v1366
  %1386 = vmatprep.subr.mxu0 0.0
  %1387 = vmatpush1.msra.mxu0 %v1367
  %1388 = vmatprep.subr.mxu0 0.0
  %1389 = vmatpush1.msra.mxu0 0.0
  %1390 = vmatprep.subr.mxu0 0.0
  %1391 = vmatpush1.msra.mxu0 0.0
  %1392 = vmatprep.subr.mxu0 0.0
  %1393 = vmatpush1.msra.mxu0 0.0
  %1394 = vmatprep.subr.mxu0 0.0
  %1395 = vmatpush1.msra.mxu0 0.0
  %1396 = vmatprep.subr.mxu0 0.0
  %1397 = vmatpush1.msra.mxu0 0.0
  %1398 = vmatprep.subr.mxu0 0.0
  %1399 = vmatpush1.msra.mxu0 0.0
  %1400 = vmatprep.subr.mxu0 0.0
  %1401 = vmatpush1.msra.mxu0 0.0
  %1402 = vmatprep.subr.mxu0 0.0
  %1403 = vmatpush1.msra.mxu0 0.0
  %1404 = vmatprep.subr.mxu0 0.0
  %1405 = vmatpush1.msra.mxu0 0.0
  %1406 = vmatprep.subr.mxu0 0.0
  %1407 = vmatpush1.msra.mxu0 0.0
  %1408 = vmatprep.subr.mxu0 0.0
  %1409 = vmatpush1.msra.mxu0 0.0
  %1410 = vmatprep.subr.mxu0 0.0
  %1411 = vmatpush1.msra.mxu0 0.0
  %1412 = vmatprep.subr.mxu0 0.0
  %1413 = vmatpush1.msra.mxu0 0.0
  %1414 = vmatprep.subr.mxu0 0.0
  %1415 = vmatpush1.msra.mxu0 0.0
  %1416 = vmatprep.subr.mxu0 0.0
  %1417 = vmatpush1.msra.mxu0 0.0
  %1418 = vmatprep.subr.mxu0 0.0
  %1419 = vmatpush1.msra.mxu0 0.0
  %1420 = vmatprep.subr.mxu0 0.0
  %1421 = vmatpush1.msra.mxu0 0.0
  %1422 = vmatprep.subr.mxu0 0.0
  %1423 = vmatpush1.msra.mxu0 0.0
  %1424 = vmatprep.subr.mxu0 0.0
  %1425 = vmatpush1.msra.mxu0 0.0
  %1426 = vmatprep.subr.mxu0 0.0
  %1427 = vmatpush1.msra.mxu0 0.0
  %1428 = vmatprep.subr.mxu0 0.0
  %1429 = vmatpush1.msra.mxu0 0.0
  %1430 = vmatprep.subr.mxu0 0.0
  %1431 = vmatpush1.msra.mxu0 0.0
  %1432 = vmatprep.subr.mxu0 0.0
  %1433 = vmatpush1.msra.mxu0 0.0
  %1434 = vmatprep.subr.mxu0 0.0
  %1435 = vmatpush1.msra.mxu0 0.0
  %1436 = vmatprep.subr.mxu0 0.0
  %1437 = vmatpush1.msra.mxu0 0.0
  %1438 = vmatprep.subr.mxu0 0.0
  %1439 = vmatpush1.msra.mxu0 0.0
  %1440 = vmatprep.subr.mxu0 0.0
  %1441 = vmatpush1.msra.mxu0 0.0
  %1442 = vmatprep.subr.mxu0 0.0
  %1443 = vmatpush1.msra.mxu0 0.0
  %1444 = vmatprep.mubr.f32.mxu0 0.0
  %1445 = vmatmul.mubr.f32.gmra.mrb[0].mxu0 %v1369
  %v1446 = vpop.f32.mrb[0].mxu0
  %v1447 = vadd.f32 0.0, %v1446
  %v1448 = vpop.f32.mrb[0].mxu0
  %1449 = vmatprep.mubr.f32.mxu0 0.0
  %1450 = vmatmul.mubr.f32.gmra.mrb[0].mxu0 %v1372
  %v1451 = vpop.f32.mrb[0].mxu0
  %v1452 = vadd.f32 0.0, %v1451
  %v1453 = vpop.f32.mrb[0].mxu0
  %1454 = vmatprep.mubr.f32.mxu0 0.0
  %1455 = vmatmul.mubr.f32.gmra.mrb[0].mxu0 %v1375
  %v1456 = vpop.f32.mrb[0].mxu0
  %v1457 = vadd.f32 0.0, %v1456
  %v1458 = vpop.f32.mrb[0].mxu0
  %1459 = vmatprep.mubr.f32.mxu0 0.0
  %1460 = vmatmul.mubr.f32.gmra.mrb[0].mxu0 %v1378
  %v1461 = vpop.f32.mrb[0].mxu0
  %v1462 = vadd.f32 0.0, %v1461
  %v1463 = vpop.f32.mrb[0].mxu0
  %1464 = vdwg.mxu0
  %v1465 = vadd.f32 %v1269, %v1447
  %v1466 = vadd.f32 %v1270, %v1452
  %v1467 = vadd.f32 %v1271, %v1457
  %v1468 = vadd.f32 %v1272, %v1462
  %s1469 = scalar_lea.vmem %s4, 192
  %v1470 = vld [vmem:[%s1469] sm:$0xff]
  %v1471 = vld [vmem:[%s1469 + $0x8] sm:$0xff]
  %v1472 = vld [vmem:[%s1469 + $0x10] sm:$0xff]
  %v1473 = vld [vmem:[%s1469 + $0x18] sm:$0xff]
  %1474 = vmatprep.subr.mxu0 0.0
  %1475 = vmatpush1.msra.mxu0 %v286
  %1476 = vmatprep.subr.mxu0 0.0
  %1477 = vmatpush1.msra.mxu0 %v287
  %1478 = vmatprep.subr.mxu0 0.0
  %1479 = vmatpush1.msra.mxu0 %v288
  %1480 = vmatprep.subr.mxu0 0.0
  %1481 = vmatpush1.msra.mxu0 %v289
  %1482 = vmatprep.subr.mxu0 0.0
  %1483 = vmatpush1.msra.mxu0 %v290
  %1484 = vmatprep.subr.mxu0 0.0
  %1485 = vmatpush1.msra.mxu0 %v291
  %1486 = vmatprep.subr.mxu0 0.0
  %1487 = vmatpush1.msra.mxu0 %v292
  %1488 = vmatprep.subr.mxu0 0.0
  %1489 = vmatpush1.msra.mxu0 %v293
  %1490 = vmatprep.subr.mxu0 0.0
  %1491 = vmatpush1.msra.mxu0 %v294
  %1492 = vmatprep.subr.mxu0 0.0
  %1493 = vmatpush1.msra.mxu0 %v295
  %1494 = vmatprep.subr.mxu0 0.0
  %1495 = vmatpush1.msra.mxu0 %v296
  %1496 = vmatprep.subr.mxu0 0.0
  %1497 = vmatpush1.msra.mxu0 %v297
  %1498 = vmatprep.subr.mxu0 0.0
  %1499 = vmatpush1.msra.mxu0 %v298
  %1500 = vmatprep.subr.mxu0 0.0
  %1501 = vmatpush1.msra.mxu0 %v299
  %1502 = vmatprep.subr.mxu0 0.0
  %1503 = vmatpush1.msra.mxu0 %v300
  %1504 = vmatprep.subr.mxu0 0.0
  %1505 = vmatpush1.msra.mxu0 %v301
  %1506 = vmatprep.subr.mxu0 0.0
  %1507 = vmatpush1.msra.mxu0 0.0
  %1508 = vmatprep.subr.mxu0 0.0
  %1509 = vmatpush1.msra.mxu0 0.0
  %1510 = vmatprep.subr.mxu0 0.0
  %1511 = vmatpush1.msra.mxu0 0.0
  %1512 = vmatprep.subr.mxu0 0.0
  %1513 = vmatpush1.msra.mxu0 0.0
  %1514 = vmatprep.subr.mxu0 0.0
  %1515 = vmatpush1.msra.mxu0 0.0
  %1516 = vmatprep.subr.mxu0 0.0
  %1517 = vmatpush1.msra.mxu0 0.0
  %1518 = vmatprep.subr.mxu0 0.0
  %1519 = vmatpush1.msra.mxu0 0.0
  %1520 = vmatprep.subr.mxu0 0.0
  %1521 = vmatpush1.msra.mxu0 0.0
  %1522 = vmatprep.subr.mxu0 0.0
  %1523 = vmatpush1.msra.mxu0 0.0
  %1524 = vmatprep.subr.mxu0 0.0
  %1525 = vmatpush1.msra.mxu0 0.0
  %1526 = vmatprep.subr.mxu0 0.0
  %1527 = vmatpush1.msra.mxu0 0.0
  %1528 = vmatprep.subr.mxu0 0.0
  %1529 = vmatpush1.msra.mxu0 0.0
  %1530 = vmatprep.subr.mxu0 0.0
  %1531 = vmatpush1.msra.mxu0 0.0
  %1532 = vmatprep.subr.mxu0 0.0
  %1533 = vmatpush1.msra.mxu0 0.0
  %1534 = vmatprep.subr.mxu0 0.0
  %1535 = vmatpush1.msra.mxu0 0.0
  %1536 = vmatprep.subr.mxu0 0.0
  %1537 = vmatpush1.msra.mxu0 0.0
  %1538 = vmatprep.mubr.f32.mxu0 0.0
  %1539 = vmatmul.mubr.f32.gmra.mrb[0].mxu0 %v1470
  %v1540 = vpop.f32.mrb[0].mxu0
  %v1541 = vadd.f32 0.0, %v1540
  %v1542 = vpop.f32.mrb[0].mxu0
  %1543 = vmatprep.mubr.f32.mxu0 0.0
  %1544 = vmatmul.mubr.f32.gmra.mrb[0].mxu0 %v1471
  %v1545 = vpop.f32.mrb[0].mxu0
  %v1546 = vadd.f32 0.0, %v1545
  %v1547 = vpop.f32.mrb[0].mxu0
  %1548 = vmatprep.mubr.f32.mxu0 0.0
  %1549 = vmatmul.mubr.f32.gmra.mrb[0].mxu0 %v1472
  %v1550 = vpop.f32.mrb[0].mxu0
  %v1551 = vadd.f32 0.0, %v1550
  %v1552 = vpop.f32.mrb[0].mxu0
  %1553 = vmatprep.mubr.f32.mxu0 0.0
  %1554 = vmatmul.mubr.f32.gmra.mrb[0].mxu0 %v1473
  %v1555 = vpop.f32.mrb[0].mxu0
  %v1556 = vadd.f32 0.0, %v1555
  %v1557 = vpop.f32.mrb[0].mxu0
  %1558 = vdwg.mxu0
  %s1559 = scalar_lea.vmem %s5, 192
  %v1560 = vld [vmem:[%s1559] sm:$0xff]
  %v1561 = vld [vmem:[%s1559 + $0x8] sm:$0xff]
  %v1562 = vld [vmem:[%s1559 + $0x10] sm:$0xff]
  %v1563 = vld [vmem:[%s1559 + $0x18] sm:$0xff]
  %v1565 = vsel %vm490, %v1541, 0
  %v1568 = vsel %vm490, %v1546, 0
  %v1571 = vsel %vm490, %v1551, 0
  %v1574 = vsel %vm490, %v1556, 0
  %1576 = vmatprep.subr.mxu0 0.0
  %1577 = vmatpush1.msra.mxu0 %v1560
  %1578 = vmatprep.subr.mxu0 0.0
  %1579 = vmatpush1.msra.mxu0 %v1561
  %1580 = vmatprep.subr.mxu0 0.0
  %1581 = vmatpush1.msra.mxu0 %v1562
  %1582 = vmatprep.subr.mxu0 0.0
  %1583 = vmatpush1.msra.mxu0 %v1563
  %1584 = vmatprep.subr.mxu0 0.0
  %1585 = vmatpush1.msra.mxu0 0.0
  %1586 = vmatprep.subr.mxu0 0.0
  %1587 = vmatpush1.msra.mxu0 0.0
  %1588 = vmatprep.subr.mxu0 0.0
  %1589 = vmatpush1.msra.mxu0 0.0
  %1590 = vmatprep.subr.mxu0 0.0
  %1591 = vmatpush1.msra.mxu0 0.0
  %1592 = vmatprep.subr.mxu0 0.0
  %1593 = vmatpush1.msra.mxu0 0.0
  %1594 = vmatprep.subr.mxu0 0.0
  %1595 = vmatpush1.msra.mxu0 0.0
  %1596 = vmatprep.subr.mxu0 0.0
  %1597 = vmatpush1.msra.mxu0 0.0
  %1598 = vmatprep.subr.mxu0 0.0
  %1599 = vmatpush1.msra.mxu0 0.0
  %1600 = vmatprep.subr.mxu0 0.0
  %1601 = vmatpush1.msra.mxu0 0.0
  %1602 = vmatprep.subr.mxu0 0.0
  %1603 = vmatpush1.msra.mxu0 0.0
  %1604 = vmatprep.subr.mxu0 0.0
  %1605 = vmatpush1.msra.mxu0 0.0
  %1606 = vmatprep.subr.mxu0 0.0
  %1607 = vmatpush1.msra.mxu0 0.0
  %1608 = vmatprep.subr.mxu0 0.0
  %1609 = vmatpush1.msra.mxu0 0.0
  %1610 = vmatprep.subr.mxu0 0.0
  %1611 = vmatpush1.msra.mxu0 0.0
  %1612 = vmatprep.subr.mxu0 0.0
  %1613 = vmatpush1.msra.mxu0 0.0
  %1614 = vmatprep.subr.mxu0 0.0
  %1615 = vmatpush1.msra.mxu0 0.0
  %1616 = vmatprep.subr.mxu0 0.0
  %1617 = vmatpush1.msra.mxu0 0.0
  %1618 = vmatprep.subr.mxu0 0.0
  %1619 = vmatpush1.msra.mxu0 0.0
  %1620 = vmatprep.subr.mxu0 0.0
  %1621 = vmatpush1.msra.mxu0 0.0
  %1622 = vmatprep.subr.mxu0 0.0
  %1623 = vmatpush1.msra.mxu0 0.0
  %1624 = vmatprep.subr.mxu0 0.0
  %1625 = vmatpush1.msra.mxu0 0.0
  %1626 = vmatprep.subr.mxu0 0.0
  %1627 = vmatpush1.msra.mxu0 0.0
  %1628 = vmatprep.subr.mxu0 0.0
  %1629 = vmatpush1.msra.mxu0 0.0
  %1630 = vmatprep.subr.mxu0 0.0
  %1631 = vmatpush1.msra.mxu0 0.0
  %1632 = vmatprep.subr.mxu0 0.0
  %1633 = vmatpush1.msra.mxu0 0.0
  %1634 = vmatprep.subr.mxu0 0.0
  %1635 = vmatpush1.msra.mxu0 0.0
  %1636 = vmatprep.subr.mxu0 0.0
  %1637 = vmatpush1.msra.mxu0 0.0
  %1638 = vmatprep.subr.mxu0 0.0
  %1639 = vmatpush1.msra.mxu0 0.0
  %1640 = vmatprep.mubr.f32.mxu0 0.0
  %1641 = vmatmul.mubr.f32.gmra.mrb[0].mxu0 %v1565
  %v1642 = vpop.f32.mrb[0].mxu0
  %v1643 = vadd.f32 0.0, %v1642
  %v1644 = vpop.f32.mrb[0].mxu0
  %1645 = vmatprep.mubr.f32.mxu0 0.0
  %1646 = vmatmul.mubr.f32.gmra.mrb[0].mxu0 %v1568
  %v1647 = vpop.f32.mrb[0].mxu0
  %v1648 = vadd.f32 0.0, %v1647
  %v1649 = vpop.f32.mrb[0].mxu0
  %1650 = vmatprep.mubr.f32.mxu0 0.0
  %1651 = vmatmul.mubr.f32.gmra.mrb[0].mxu0 %v1571
  %v1652 = vpop.f32.mrb[0].mxu0
  %v1653 = vadd.f32 0.0, %v1652
  %v1654 = vpop.f32.mrb[0].mxu0
  %1655 = vmatprep.mubr.f32.mxu0 0.0
  %1656 = vmatmul.mubr.f32.gmra.mrb[0].mxu0 %v1574
  %v1657 = vpop.f32.mrb[0].mxu0
  %v1658 = vadd.f32 0.0, %v1657
  %v1659 = vpop.f32.mrb[0].mxu0
  %1660 = vdwg.mxu0
  %v1661 = vadd.f32 %v1465, %v1643
  %v1662 = vadd.f32 %v1466, %v1648
  %v1663 = vadd.f32 %v1467, %v1653
  %v1664 = vadd.f32 %v1468, %v1658
  %s1665 = scalar_lea.vmem %s4, 224
  %v1666 = vld [vmem:[%s1665] sm:$0xff]
  %v1667 = vld [vmem:[%s1665 + $0x8] sm:$0xff]
  %v1668 = vld [vmem:[%s1665 + $0x10] sm:$0xff]
  %v1669 = vld [vmem:[%s1665 + $0x18] sm:$0xff]
  %1670 = vmatprep.subr.mxu0 0.0
  %1671 = vmatpush1.msra.mxu0 %v286
  %1672 = vmatprep.subr.mxu0 0.0
  %1673 = vmatpush1.msra.mxu0 %v287
  %1674 = vmatprep.subr.mxu0 0.0
  %1675 = vmatpush1.msra.mxu0 %v288
  %1676 = vmatprep.subr.mxu0 0.0
  %1677 = vmatpush1.msra.mxu0 %v289
  %1678 = vmatprep.subr.mxu0 0.0
  %1679 = vmatpush1.msra.mxu0 %v290
  %1680 = vmatprep.subr.mxu0 0.0
  %1681 = vmatpush1.msra.mxu0 %v291
  %1682 = vmatprep.subr.mxu0 0.0
  %1683 = vmatpush1.msra.mxu0 %v292
  %1684 = vmatprep.subr.mxu0 0.0
  %1685 = vmatpush1.msra.mxu0 %v293
  %1686 = vmatprep.subr.mxu0 0.0
  %1687 = vmatpush1.msra.mxu0 %v294
  %1688 = vmatprep.subr.mxu0 0.0
  %1689 = vmatpush1.msra.mxu0 %v295
  %1690 = vmatprep.subr.mxu0 0.0
  %1691 = vmatpush1.msra.mxu0 %v296
  %1692 = vmatprep.subr.mxu0 0.0
  %1693 = vmatpush1.msra.mxu0 %v297
  %1694 = vmatprep.subr.mxu0 0.0
  %1695 = vmatpush1.msra.mxu0 %v298
  %1696 = vmatprep.subr.mxu0 0.0
  %1697 = vmatpush1.msra.mxu0 %v299
  %1698 = vmatprep.subr.mxu0 0.0
  %1699 = vmatpush1.msra.mxu0 %v300
  %1700 = vmatprep.subr.mxu0 0.0
  %1701 = vmatpush1.msra.mxu0 %v301
  %1702 = vmatprep.subr.mxu0 0.0
  %1703 = vmatpush1.msra.mxu0 0.0
  %1704 = vmatprep.subr.mxu0 0.0
  %1705 = vmatpush1.msra.mxu0 0.0
  %1706 = vmatprep.subr.mxu0 0.0
  %1707 = vmatpush1.msra.mxu0 0.0
  %1708 = vmatprep.subr.mxu0 0.0
  %1709 = vmatpush1.msra.mxu0 0.0
  %1710 = vmatprep.subr.mxu0 0.0
  %1711 = vmatpush1.msra.mxu0 0.0
  %1712 = vmatprep.subr.mxu0 0.0
  %1713 = vmatpush1.msra.mxu0 0.0
  %1714 = vmatprep.subr.mxu0 0.0
  %1715 = vmatpush1.msra.mxu0 0.0
  %1716 = vmatprep.subr.mxu0 0.0
  %1717 = vmatpush1.msra.mxu0 0.0
  %1718 = vmatprep.subr.mxu0 0.0
  %1719 = vmatpush1.msra.mxu0 0.0
  %1720 = vmatprep.subr.mxu0 0.0
  %1721 = vmatpush1.msra.mxu0 0.0
  %1722 = vmatprep.subr.mxu0 0.0
  %1723 = vmatpush1.msra.mxu0 0.0
  %1724 = vmatprep.subr.mxu0 0.0
  %1725 = vmatpush1.msra.mxu0 0.0
  %1726 = vmatprep.subr.mxu0 0.0
  %1727 = vmatpush1.msra.mxu0 0.0
  %1728 = vmatprep.subr.mxu0 0.0
  %1729 = vmatpush1.msra.mxu0 0.0
  %1730 = vmatprep.subr.mxu0 0.0
  %1731 = vmatpush1.msra.mxu0 0.0
  %1732 = vmatprep.subr.mxu0 0.0
  %1733 = vmatpush1.msra.mxu0 0.0
  %1734 = vmatprep.mubr.f32.mxu0 0.0
  %1735 = vmatmul.mubr.f32.gmra.mrb[0].mxu0 %v1666
  %v1736 = vpop.f32.mrb[0].mxu0
  %v1737 = vadd.f32 0.0, %v1736
  %v1738 = vpop.f32.mrb[0].mxu0
  %1739 = vmatprep.mubr.f32.mxu0 0.0
  %1740 = vmatmul.mubr.f32.gmra.mrb[0].mxu0 %v1667
  %v1741 = vpop.f32.mrb[0].mxu0
  %v1742 = vadd.f32 0.0, %v1741
  %v1743 = vpop.f32.mrb[0].mxu0
  %1744 = vmatprep.mubr.f32.mxu0 0.0
  %1745 = vmatmul.mubr.f32.gmra.mrb[0].mxu0 %v1668
  %v1746 = vpop.f32.mrb[0].mxu0
  %v1747 = vadd.f32 0.0, %v1746
  %v1748 = vpop.f32.mrb[0].mxu0
  %1749 = vmatprep.mubr.f32.mxu0 0.0
  %1750 = vmatmul.mubr.f32.gmra.mrb[0].mxu0 %v1669
  %v1751 = vpop.f32.mrb[0].mxu0
  %v1752 = vadd.f32 0.0, %v1751
  %v1753 = vpop.f32.mrb[0].mxu0
  %1754 = vdwg.mxu0
  %s1755 = scalar_lea.vmem %s5, 224
  %v1756 = vld [vmem:[%s1755] sm:$0xff]
  %v1757 = vld [vmem:[%s1755 + $0x8] sm:$0xff]
  %v1758 = vld [vmem:[%s1755 + $0x10] sm:$0xff]
  %v1759 = vld [vmem:[%s1755 + $0x18] sm:$0xff]
  %v1761 = vsel %vm490, %v1737, 0
  %v1764 = vsel %vm490, %v1742, 0
  %v1767 = vsel %vm490, %v1747, 0
  %v1770 = vsel %vm490, %v1752, 0
  %1772 = vmatprep.subr.mxu0 0.0
  %1773 = vmatpush1.msra.mxu0 %v1756
  %1774 = vmatprep.subr.mxu0 0.0
  %1775 = vmatpush1.msra.mxu0 %v1757
  %1776 = vmatprep.subr.mxu0 0.0
  %1777 = vmatpush1.msra.mxu0 %v1758
  %1778 = vmatprep.subr.mxu0 0.0
  %1779 = vmatpush1.msra.mxu0 %v1759
  %1780 = vmatprep.subr.mxu0 0.0
  %1781 = vmatpush1.msra.mxu0 0.0
  %1782 = vmatprep.subr.mxu0 0.0
  %1783 = vmatpush1.msra.mxu0 0.0
  %1784 = vmatprep.subr.mxu0 0.0
  %1785 = vmatpush1.msra.mxu0 0.0
  %1786 = vmatprep.subr.mxu0 0.0
  %1787 = vmatpush1.msra.mxu0 0.0
  %1788 = vmatprep.subr.mxu0 0.0
  %1789 = vmatpush1.msra.mxu0 0.0
  %1790 = vmatprep.subr.mxu0 0.0
  %1791 = vmatpush1.msra.mxu0 0.0
  %1792 = vmatprep.subr.mxu0 0.0
  %1793 = vmatpush1.msra.mxu0 0.0
  %1794 = vmatprep.subr.mxu0 0.0
  %1795 = vmatpush1.msra.mxu0 0.0
  %1796 = vmatprep.subr.mxu0 0.0
  %1797 = vmatpush1.msra.mxu0 0.0
  %1798 = vmatprep.subr.mxu0 0.0
  %1799 = vmatpush1.msra.mxu0 0.0
  %1800 = vmatprep.subr.mxu0 0.0
  %1801 = vmatpush1.msra.mxu0 0.0
  %1802 = vmatprep.subr.mxu0 0.0
  %1803 = vmatpush1.msra.mxu0 0.0
  %1804 = vmatprep.subr.mxu0 0.0
  %1805 = vmatpush1.msra.mxu0 0.0
  %1806 = vmatprep.subr.mxu0 0.0
  %1807 = vmatpush1.msra.mxu0 0.0
  %1808 = vmatprep.subr.mxu0 0.0
  %1809 = vmatpush1.msra.mxu0 0.0
  %1810 = vmatprep.subr.mxu0 0.0
  %1811 = vmatpush1.msra.mxu0 0.0
  %1812 = vmatprep.subr.mxu0 0.0
  %1813 = vmatpush1.msra.mxu0 0.0
  %1814 = vmatprep.subr.mxu0 0.0
  %1815 = vmatpush1.msra.mxu0 0.0
  %1816 = vmatprep.subr.mxu0 0.0
  %1817 = vmatpush1.msra.mxu0 0.0
  %1818 = vmatprep.subr.mxu0 0.0
  %1819 = vmatpush1.msra.mxu0 0.0
  %1820 = vmatprep.subr.mxu0 0.0
  %1821 = vmatpush1.msra.mxu0 0.0
  %1822 = vmatprep.subr.mxu0 0.0
  %1823 = vmatpush1.msra.mxu0 0.0
  %1824 = vmatprep.subr.mxu0 0.0
  %1825 = vmatpush1.msra.mxu0 0.0
  %1826 = vmatprep.subr.mxu0 0.0
  %1827 = vmatpush1.msra.mxu0 0.0
  %1828 = vmatprep.subr.mxu0 0.0
  %1829 = vmatpush1.msra.mxu0 0.0
  %1830 = vmatprep.subr.mxu0 0.0
  %1831 = vmatpush1.msra.mxu0 0.0
  %1832 = vmatprep.subr.mxu0 0.0
  %1833 = vmatpush1.msra.mxu0 0.0
  %1834 = vmatprep.subr.mxu0 0.0
  %1835 = vmatpush1.msra.mxu0 0.0
  %1836 = vmatprep.mubr.f32.mxu0 0.0
  %1837 = vmatmul.mubr.f32.gmra.mrb[0].mxu0 %v1761
  %v1838 = vpop.f32.mrb[0].mxu0
  %v1839 = vadd.f32 0.0, %v1838
  %v1840 = vpop.f32.mrb[0].mxu0
  %1841 = vmatprep.mubr.f32.mxu0 0.0
  %1842 = vmatmul.mubr.f32.gmra.mrb[0].mxu0 %v1764
  %v1843 = vpop.f32.mrb[0].mxu0
  %v1844 = vadd.f32 0.0, %v1843
  %v1845 = vpop.f32.mrb[0].mxu0
  %1846 = vmatprep.mubr.f32.mxu0 0.0
  %1847 = vmatmul.mubr.f32.gmra.mrb[0].mxu0 %v1767
  %v1848 = vpop.f32.mrb[0].mxu0
  %v1849 = vadd.f32 0.0, %v1848
  %v1850 = vpop.f32.mrb[0].mxu0
  %1851 = vmatprep.mubr.f32.mxu0 0.0
  %1852 = vmatmul.mubr.f32.gmra.mrb[0].mxu0 %v1770
  %v1853 = vpop.f32.mrb[0].mxu0
  %v1854 = vadd.f32 0.0, %v1853
  %v1855 = vpop.f32.mrb[0].mxu0
  %1856 = vdwg.mxu0
  %v1857 = vadd.f32 %v1661, %v1839
  %v1858 = vadd.f32 %v1662, %v1844
  %v1859 = vadd.f32 %v1663, %v1849
  %v1860 = vadd.f32 %v1664, %v1854
  %s1861 = scalar_lea.vmem %s4, 256
  %v1862 = vld [vmem:[%s1861] sm:$0xff]
  %v1863 = vld [vmem:[%s1861 + $0x8] sm:$0xff]
  %v1864 = vld [vmem:[%s1861 + $0x10] sm:$0xff]
  %v1865 = vld [vmem:[%s1861 + $0x18] sm:$0xff]
  %1866 = vmatprep.subr.mxu0 0.0
  %1867 = vmatpush1.msra.mxu0 %v286
  %1868 = vmatprep.subr.mxu0 0.0
  %1869 = vmatpush1.msra.mxu0 %v287
  %1870 = vmatprep.subr.mxu0 0.0
  %1871 = vmatpush1.msra.mxu0 %v288
  %1872 = vmatprep.subr.mxu0 0.0
  %1873 = vmatpush1.msra.mxu0 %v289
  %1874 = vmatprep.subr.mxu0 0.0
  %1875 = vmatpush1.msra.mxu0 %v290
  %1876 = vmatprep.subr.mxu0 0.0
  %1877 = vmatpush1.msra.mxu0 %v291
  %1878 = vmatprep.subr.mxu0 0.0
  %1879 = vmatpush1.msra.mxu0 %v292
  %1880 = vmatprep.subr.mxu0 0.0
  %1881 = vmatpush1.msra.mxu0 %v293
  %1882 = vmatprep.subr.mxu0 0.0
  %1883 = vmatpush1.msra.mxu0 %v294
  %1884 = vmatprep.subr.mxu0 0.0
  %1885 = vmatpush1.msra.mxu0 %v295
  %1886 = vmatprep.subr.mxu0 0.0
  %1887 = vmatpush1.msra.mxu0 %v296
  %1888 = vmatprep.subr.mxu0 0.0
  %1889 = vmatpush1.msra.mxu0 %v297
  %1890 = vmatprep.subr.mxu0 0.0
  %1891 = vmatpush1.msra.mxu0 %v298
  %1892 = vmatprep.subr.mxu0 0.0
  %1893 = vmatpush1.msra.mxu0 %v299
  %1894 = vmatprep.subr.mxu0 0.0
  %1895 = vmatpush1.msra.mxu0 %v300
  %1896 = vmatprep.subr.mxu0 0.0
  %1897 = vmatpush1.msra.mxu0 %v301
  %1898 = vmatprep.subr.mxu0 0.0
  %1899 = vmatpush1.msra.mxu0 0.0
  %1900 = vmatprep.subr.mxu0 0.0
  %1901 = vmatpush1.msra.mxu0 0.0
  %1902 = vmatprep.subr.mxu0 0.0
  %1903 = vmatpush1.msra.mxu0 0.0
  %1904 = vmatprep.subr.mxu0 0.0
  %1905 = vmatpush1.msra.mxu0 0.0
  %1906 = vmatprep.subr.mxu0 0.0
  %1907 = vmatpush1.msra.mxu0 0.0
  %1908 = vmatprep.subr.mxu0 0.0
  %1909 = vmatpush1.msra.mxu0 0.0
  %1910 = vmatprep.subr.mxu0 0.0
  %1911 = vmatpush1.msra.mxu0 0.0
  %1912 = vmatprep.subr.mxu0 0.0
  %1913 = vmatpush1.msra.mxu0 0.0
  %1914 = vmatprep.subr.mxu0 0.0
  %1915 = vmatpush1.msra.mxu0 0.0
  %1916 = vmatprep.subr.mxu0 0.0
  %1917 = vmatpush1.msra.mxu0 0.0
  %1918 = vmatprep.subr.mxu0 0.0
  %1919 = vmatpush1.msra.mxu0 0.0
  %1920 = vmatprep.subr.mxu0 0.0
  %1921 = vmatpush1.msra.mxu0 0.0
  %1922 = vmatprep.subr.mxu0 0.0
  %1923 = vmatpush1.msra.mxu0 0.0
  %1924 = vmatprep.subr.mxu0 0.0
  %1925 = vmatpush1.msra.mxu0 0.0
  %1926 = vmatprep.subr.mxu0 0.0
  %1927 = vmatpush1.msra.mxu0 0.0
  %1928 = vmatprep.subr.mxu0 0.0
  %1929 = vmatpush1.msra.mxu0 0.0
  %1930 = vmatprep.mubr.f32.mxu0 0.0
  %1931 = vmatmul.mubr.f32.gmra.mrb[0].mxu0 %v1862
  %v1932 = vpop.f32.mrb[0].mxu0
  %v1933 = vadd.f32 0.0, %v1932
  %v1934 = vpop.f32.mrb[0].mxu0
  %1935 = vmatprep.mubr.f32.mxu0 0.0
  %1936 = vmatmul.mubr.f32.gmra.mrb[0].mxu0 %v1863
  %v1937 = vpop.f32.mrb[0].mxu0
  %v1938 = vadd.f32 0.0, %v1937
  %v1939 = vpop.f32.mrb[0].mxu0
  %1940 = vmatprep.mubr.f32.mxu0 0.0
  %1941 = vmatmul.mubr.f32.gmra.mrb[0].mxu0 %v1864
  %v1942 = vpop.f32.mrb[0].mxu0
  %v1943 = vadd.f32 0.0, %v1942
  %v1944 = vpop.f32.mrb[0].mxu0
  %1945 = vmatprep.mubr.f32.mxu0 0.0
  %1946 = vmatmul.mubr.f32.gmra.mrb[0].mxu0 %v1865
  %v1947 = vpop.f32.mrb[0].mxu0
  %v1948 = vadd.f32 0.0, %v1947
  %v1949 = vpop.f32.mrb[0].mxu0
  %1950 = vdwg.mxu0
  %s1951 = scalar_lea.vmem %s5, 256
  %v1952 = vld [vmem:[%s1951] sm:$0xff]
  %v1953 = vld [vmem:[%s1951 + $0x8] sm:$0xff]
  %v1954 = vld [vmem:[%s1951 + $0x10] sm:$0xff]
  %v1955 = vld [vmem:[%s1951 + $0x18] sm:$0xff]
  %v1957 = vsel %vm490, %v1933, 0
  %v1960 = vsel %vm490, %v1938, 0
  %v1963 = vsel %vm490, %v1943, 0
  %v1966 = vsel %vm490, %v1948, 0
  %1968 = vmatprep.subr.mxu0 0.0
  %1969 = vmatpush1.msra.mxu0 %v1952
  %1970 = vmatprep.subr.mxu0 0.0
  %1971 = vmatpush1.msra.mxu0 %v1953
  %1972 = vmatprep.subr.mxu0 0.0
  %1973 = vmatpush1.msra.mxu0 %v1954
  %1974 = vmatprep.subr.mxu0 0.0
  %1975 = vmatpush1.msra.mxu0 %v1955
  %1976 = vmatprep.subr.mxu0 0.0
  %1977 = vmatpush1.msra.mxu0 0.0
  %1978 = vmatprep.subr.mxu0 0.0
  %1979 = vmatpush1.msra.mxu0 0.0
  %1980 = vmatprep.subr.mxu0 0.0
  %1981 = vmatpush1.msra.mxu0 0.0
  %1982 = vmatprep.subr.mxu0 0.0
  %1983 = vmatpush1.msra.mxu0 0.0
  %1984 = vmatprep.subr.mxu0 0.0
  %1985 = vmatpush1.msra.mxu0 0.0
  %1986 = vmatprep.subr.mxu0 0.0
  %1987 = vmatpush1.msra.mxu0 0.0
  %1988 = vmatprep.subr.mxu0 0.0
  %1989 = vmatpush1.msra.mxu0 0.0
  %1990 = vmatprep.subr.mxu0 0.0
  %1991 = vmatpush1.msra.mxu0 0.0
  %1992 = vmatprep.subr.mxu0 0.0
  %1993 = vmatpush1.msra.mxu0 0.0
  %1994 = vmatprep.subr.mxu0 0.0
  %1995 = vmatpush1.msra.mxu0 0.0
  %1996 = vmatprep.subr.mxu0 0.0
  %1997 = vmatpush1.msra.mxu0 0.0
  %1998 = vmatprep.subr.mxu0 0.0
  %1999 = vmatpush1.msra.mxu0 0.0
  %2000 = vmatprep.subr.mxu0 0.0
  %2001 = vmatpush1.msra.mxu0 0.0
  %2002 = vmatprep.subr.mxu0 0.0
  %2003 = vmatpush1.msra.mxu0 0.0
  %2004 = vmatprep.subr.mxu0 0.0
  %2005 = vmatpush1.msra.mxu0 0.0
  %2006 = vmatprep.subr.mxu0 0.0
  %2007 = vmatpush1.msra.mxu0 0.0
  %2008 = vmatprep.subr.mxu0 0.0
  %2009 = vmatpush1.msra.mxu0 0.0
  %2010 = vmatprep.subr.mxu0 0.0
  %2011 = vmatpush1.msra.mxu0 0.0
  %2012 = vmatprep.subr.mxu0 0.0
  %2013 = vmatpush1.msra.mxu0 0.0
  %2014 = vmatprep.subr.mxu0 0.0
  %2015 = vmatpush1.msra.mxu0 0.0
  %2016 = vmatprep.subr.mxu0 0.0
  %2017 = vmatpush1.msra.mxu0 0.0
  %2018 = vmatprep.subr.mxu0 0.0
  %2019 = vmatpush1.msra.mxu0 0.0
  %2020 = vmatprep.subr.mxu0 0.0
  %2021 = vmatpush1.msra.mxu0 0.0
  %2022 = vmatprep.subr.mxu0 0.0
  %2023 = vmatpush1.msra.mxu0 0.0
  %2024 = vmatprep.subr.mxu0 0.0
  %2025 = vmatpush1.msra.mxu0 0.0
  %2026 = vmatprep.subr.mxu0 0.0
  %2027 = vmatpush1.msra.mxu0 0.0
  %2028 = vmatprep.subr.mxu0 0.0
  %2029 = vmatpush1.msra.mxu0 0.0
  %2030 = vmatprep.subr.mxu0 0.0
  %2031 = vmatpush1.msra.mxu0 0.0
  %2032 = vmatprep.mubr.f32.mxu0 0.0
  %2033 = vmatmul.mubr.f32.gmra.mrb[0].mxu0 %v1957
  %v2034 = vpop.f32.mrb[0].mxu0
  %v2035 = vadd.f32 0.0, %v2034
  %v2036 = vpop.f32.mrb[0].mxu0
  %2037 = vmatprep.mubr.f32.mxu0 0.0
  %2038 = vmatmul.mubr.f32.gmra.mrb[0].mxu0 %v1960
  %v2039 = vpop.f32.mrb[0].mxu0
  %v2040 = vadd.f32 0.0, %v2039
  %v2041 = vpop.f32.mrb[0].mxu0
  %2042 = vmatprep.mubr.f32.mxu0 0.0
  %2043 = vmatmul.mubr.f32.gmra.mrb[0].mxu0 %v1963
  %v2044 = vpop.f32.mrb[0].mxu0
  %v2045 = vadd.f32 0.0, %v2044
  %v2046 = vpop.f32.mrb[0].mxu0
  %2047 = vmatprep.mubr.f32.mxu0 0.0
  %2048 = vmatmul.mubr.f32.gmra.mrb[0].mxu0 %v1966
  %v2049 = vpop.f32.mrb[0].mxu0
  %v2050 = vadd.f32 0.0, %v2049
  %v2051 = vpop.f32.mrb[0].mxu0
  %2052 = vdwg.mxu0
  %v2053 = vadd.f32 %v1857, %v2035
  %v2054 = vadd.f32 %v1858, %v2040
  %v2055 = vadd.f32 %v1859, %v2045
  %v2056 = vadd.f32 %v1860, %v2050
  %s2057 = scalar_lea.vmem %s4, 288
  %v2058 = vld [vmem:[%s2057] sm:$0xff]
  %v2059 = vld [vmem:[%s2057 + $0x8] sm:$0xff]
  %v2060 = vld [vmem:[%s2057 + $0x10] sm:$0xff]
  %v2061 = vld [vmem:[%s2057 + $0x18] sm:$0xff]
  %2062 = vmatprep.subr.mxu0 0.0
  %2063 = vmatpush1.msra.mxu0 %v286
  %2064 = vmatprep.subr.mxu0 0.0
  %2065 = vmatpush1.msra.mxu0 %v287
  %2066 = vmatprep.subr.mxu0 0.0
  %2067 = vmatpush1.msra.mxu0 %v288
  %2068 = vmatprep.subr.mxu0 0.0
  %2069 = vmatpush1.msra.mxu0 %v289
  %2070 = vmatprep.subr.mxu0 0.0
  %2071 = vmatpush1.msra.mxu0 %v290
  %2072 = vmatprep.subr.mxu0 0.0
  %2073 = vmatpush1.msra.mxu0 %v291
  %2074 = vmatprep.subr.mxu0 0.0
  %2075 = vmatpush1.msra.mxu0 %v292
  %2076 = vmatprep.subr.mxu0 0.0
  %2077 = vmatpush1.msra.mxu0 %v293
  %2078 = vmatprep.subr.mxu0 0.0
  %2079 = vmatpush1.msra.mxu0 %v294
  %2080 = vmatprep.subr.mxu0 0.0
  %2081 = vmatpush1.msra.mxu0 %v295
  %2082 = vmatprep.subr.mxu0 0.0
  %2083 = vmatpush1.msra.mxu0 %v296
  %2084 = vmatprep.subr.mxu0 0.0
  %2085 = vmatpush1.msra.mxu0 %v297
  %2086 = vmatprep.subr.mxu0 0.0
  %2087 = vmatpush1.msra.mxu0 %v298
  %2088 = vmatprep.subr.mxu0 0.0
  %2089 = vmatpush1.msra.mxu0 %v299
  %2090 = vmatprep.subr.mxu0 0.0
  %2091 = vmatpush1.msra.mxu0 %v300
  %2092 = vmatprep.subr.mxu0 0.0
  %2093 = vmatpush1.msra.mxu0 %v301
  %2094 = vmatprep.subr.mxu0 0.0
  %2095 = vmatpush1.msra.mxu0 0.0
  %2096 = vmatprep.subr.mxu0 0.0
  %2097 = vmatpush1.msra.mxu0 0.0
  %2098 = vmatprep.subr.mxu0 0.0
  %2099 = vmatpush1.msra.mxu0 0.0
  %2100 = vmatprep.subr.mxu0 0.0
  %2101 = vmatpush1.msra.mxu0 0.0
  %2102 = vmatprep.subr.mxu0 0.0
  %2103 = vmatpush1.msra.mxu0 0.0
  %2104 = vmatprep.subr.mxu0 0.0
  %2105 = vmatpush1.msra.mxu0 0.0
  %2106 = vmatprep.subr.mxu0 0.0
  %2107 = vmatpush1.msra.mxu0 0.0
  %2108 = vmatprep.subr.mxu0 0.0
  %2109 = vmatpush1.msra.mxu0 0.0
  %2110 = vmatprep.subr.mxu0 0.0
  %2111 = vmatpush1.msra.mxu0 0.0
  %2112 = vmatprep.subr.mxu0 0.0
  %2113 = vmatpush1.msra.mxu0 0.0
  %2114 = vmatprep.subr.mxu0 0.0
  %2115 = vmatpush1.msra.mxu0 0.0
  %2116 = vmatprep.subr.mxu0 0.0
  %2117 = vmatpush1.msra.mxu0 0.0
  %2118 = vmatprep.subr.mxu0 0.0
  %2119 = vmatpush1.msra.mxu0 0.0
  %2120 = vmatprep.subr.mxu0 0.0
  %2121 = vmatpush1.msra.mxu0 0.0
  %2122 = vmatprep.subr.mxu0 0.0
  %2123 = vmatpush1.msra.mxu0 0.0
  %2124 = vmatprep.subr.mxu0 0.0
  %2125 = vmatpush1.msra.mxu0 0.0
  %2126 = vmatprep.mubr.f32.mxu0 0.0
  %2127 = vmatmul.mubr.f32.gmra.mrb[0].mxu0 %v2058
  %v2128 = vpop.f32.mrb[0].mxu0
  %v2129 = vadd.f32 0.0, %v2128
  %v2130 = vpop.f32.mrb[0].mxu0
  %2131 = vmatprep.mubr.f32.mxu0 0.0
  %2132 = vmatmul.mubr.f32.gmra.mrb[0].mxu0 %v2059
  %v2133 = vpop.f32.mrb[0].mxu0
  %v2134 = vadd.f32 0.0, %v2133
  %v2135 = vpop.f32.mrb[0].mxu0
  %2136 = vmatprep.mubr.f32.mxu0 0.0
  %2137 = vmatmul.mubr.f32.gmra.mrb[0].mxu0 %v2060
  %v2138 = vpop.f32.mrb[0].mxu0
  %v2139 = vadd.f32 0.0, %v2138
  %v2140 = vpop.f32.mrb[0].mxu0
  %2141 = vmatprep.mubr.f32.mxu0 0.0
  %2142 = vmatmul.mubr.f32.gmra.mrb[0].mxu0 %v2061
  %v2143 = vpop.f32.mrb[0].mxu0
  %v2144 = vadd.f32 0.0, %v2143
  %v2145 = vpop.f32.mrb[0].mxu0
  %2146 = vdwg.mxu0
  %s2147 = scalar_lea.vmem %s5, 288
  %v2148 = vld [vmem:[%s2147] sm:$0xff]
  %v2149 = vld [vmem:[%s2147 + $0x8] sm:$0xff]
  %v2150 = vld [vmem:[%s2147 + $0x10] sm:$0xff]
  %v2151 = vld [vmem:[%s2147 + $0x18] sm:$0xff]
  %v2153 = vsel %vm490, %v2129, 0
  %v2156 = vsel %vm490, %v2134, 0
  %v2159 = vsel %vm490, %v2139, 0
  %v2162 = vsel %vm490, %v2144, 0
  %2164 = vmatprep.subr.mxu0 0.0
  %2165 = vmatpush1.msra.mxu0 %v2148
  %2166 = vmatprep.subr.mxu0 0.0
  %2167 = vmatpush1.msra.mxu0 %v2149
  %2168 = vmatprep.subr.mxu0 0.0
  %2169 = vmatpush1.msra.mxu0 %v2150
  %2170 = vmatprep.subr.mxu0 0.0
  %2171 = vmatpush1.msra.mxu0 %v2151
  %2172 = vmatprep.subr.mxu0 0.0
  %2173 = vmatpush1.msra.mxu0 0.0
  %2174 = vmatprep.subr.mxu0 0.0
  %2175 = vmatpush1.msra.mxu0 0.0
  %2176 = vmatprep.subr.mxu0 0.0
  %2177 = vmatpush1.msra.mxu0 0.0
  %2178 = vmatprep.subr.mxu0 0.0
  %2179 = vmatpush1.msra.mxu0 0.0
  %2180 = vmatprep.subr.mxu0 0.0
  %2181 = vmatpush1.msra.mxu0 0.0
  %2182 = vmatprep.subr.mxu0 0.0
  %2183 = vmatpush1.msra.mxu0 0.0
  %2184 = vmatprep.subr.mxu0 0.0
  %2185 = vmatpush1.msra.mxu0 0.0
  %2186 = vmatprep.subr.mxu0 0.0
  %2187 = vmatpush1.msra.mxu0 0.0
  %2188 = vmatprep.subr.mxu0 0.0
  %2189 = vmatpush1.msra.mxu0 0.0
  %2190 = vmatprep.subr.mxu0 0.0
  %2191 = vmatpush1.msra.mxu0 0.0
  %2192 = vmatprep.subr.mxu0 0.0
  %2193 = vmatpush1.msra.mxu0 0.0
  %2194 = vmatprep.subr.mxu0 0.0
  %2195 = vmatpush1.msra.mxu0 0.0
  %2196 = vmatprep.subr.mxu0 0.0
  %2197 = vmatpush1.msra.mxu0 0.0
  %2198 = vmatprep.subr.mxu0 0.0
  %2199 = vmatpush1.msra.mxu0 0.0
  %2200 = vmatprep.subr.mxu0 0.0
  %2201 = vmatpush1.msra.mxu0 0.0
  %2202 = vmatprep.subr.mxu0 0.0
  %2203 = vmatpush1.msra.mxu0 0.0
  %2204 = vmatprep.subr.mxu0 0.0
  %2205 = vmatpush1.msra.mxu0 0.0
  %2206 = vmatprep.subr.mxu0 0.0
  %2207 = vmatpush1.msra.mxu0 0.0
  %2208 = vmatprep.subr.mxu0 0.0
  %2209 = vmatpush1.msra.mxu0 0.0
  %2210 = vmatprep.subr.mxu0 0.0
  %2211 = vmatpush1.msra.mxu0 0.0
  %2212 = vmatprep.subr.mxu0 0.0
  %2213 = vmatpush1.msra.mxu0 0.0
  %2214 = vmatprep.subr.mxu0 0.0
  %2215 = vmatpush1.msra.mxu0 0.0
  %2216 = vmatprep.subr.mxu0 0.0
  %2217 = vmatpush1.msra.mxu0 0.0
  %2218 = vmatprep.subr.mxu0 0.0
  %2219 = vmatpush1.msra.mxu0 0.0
  %2220 = vmatprep.subr.mxu0 0.0
  %2221 = vmatpush1.msra.mxu0 0.0
  %2222 = vmatprep.subr.mxu0 0.0
  %2223 = vmatpush1.msra.mxu0 0.0
  %2224 = vmatprep.subr.mxu0 0.0
  %2225 = vmatpush1.msra.mxu0 0.0
  %2226 = vmatprep.subr.mxu0 0.0
  %2227 = vmatpush1.msra.mxu0 0.0
  %2228 = vmatprep.mubr.f32.mxu0 0.0
  %2229 = vmatmul.mubr.f32.gmra.mrb[0].mxu0 %v2153
  %v2230 = vpop.f32.mrb[0].mxu0
  %v2231 = vadd.f32 0.0, %v2230
  %v2232 = vpop.f32.mrb[0].mxu0
  %2233 = vmatprep.mubr.f32.mxu0 0.0
  %2234 = vmatmul.mubr.f32.gmra.mrb[0].mxu0 %v2156
  %v2235 = vpop.f32.mrb[0].mxu0
  %v2236 = vadd.f32 0.0, %v2235
  %v2237 = vpop.f32.mrb[0].mxu0
  %2238 = vmatprep.mubr.f32.mxu0 0.0
  %2239 = vmatmul.mubr.f32.gmra.mrb[0].mxu0 %v2159
  %v2240 = vpop.f32.mrb[0].mxu0
  %v2241 = vadd.f32 0.0, %v2240
  %v2242 = vpop.f32.mrb[0].mxu0
  %2243 = vmatprep.mubr.f32.mxu0 0.0
  %2244 = vmatmul.mubr.f32.gmra.mrb[0].mxu0 %v2162
  %v2245 = vpop.f32.mrb[0].mxu0
  %v2246 = vadd.f32 0.0, %v2245
  %v2247 = vpop.f32.mrb[0].mxu0
  %2248 = vdwg.mxu0
  %v2249 = vadd.f32 %v2053, %v2231
  %v2250 = vadd.f32 %v2054, %v2236
  %v2251 = vadd.f32 %v2055, %v2241
  %v2252 = vadd.f32 %v2056, %v2246
  %s2253 = scalar_lea.vmem %s4, 320
  %v2254 = vld [vmem:[%s2253] sm:$0xff]
  %v2255 = vld [vmem:[%s2253 + $0x8] sm:$0xff]
  %v2256 = vld [vmem:[%s2253 + $0x10] sm:$0xff]
  %v2257 = vld [vmem:[%s2253 + $0x18] sm:$0xff]
  %2258 = vmatprep.subr.mxu0 0.0
  %2259 = vmatpush1.msra.mxu0 %v286
  %2260 = vmatprep.subr.mxu0 0.0
  %2261 = vmatpush1.msra.mxu0 %v287
  %2262 = vmatprep.subr.mxu0 0.0
  %2263 = vmatpush1.msra.mxu0 %v288
  %2264 = vmatprep.subr.mxu0 0.0
  %2265 = vmatpush1.msra.mxu0 %v289
  %2266 = vmatprep.subr.mxu0 0.0
  %2267 = vmatpush1.msra.mxu0 %v290
  %2268 = vmatprep.subr.mxu0 0.0
  %2269 = vmatpush1.msra.mxu0 %v291
  %2270 = vmatprep.subr.mxu0 0.0
  %2271 = vmatpush1.msra.mxu0 %v292
  %2272 = vmatprep.subr.mxu0 0.0
  %2273 = vmatpush1.msra.mxu0 %v293
  %2274 = vmatprep.subr.mxu0 0.0
  %2275 = vmatpush1.msra.mxu0 %v294
  %2276 = vmatprep.subr.mxu0 0.0
  %2277 = vmatpush1.msra.mxu0 %v295
  %2278 = vmatprep.subr.mxu0 0.0
  %2279 = vmatpush1.msra.mxu0 %v296
  %2280 = vmatprep.subr.mxu0 0.0
  %2281 = vmatpush1.msra.mxu0 %v297
  %2282 = vmatprep.subr.mxu0 0.0
  %2283 = vmatpush1.msra.mxu0 %v298
  %2284 = vmatprep.subr.mxu0 0.0
  %2285 = vmatpush1.msra.mxu0 %v299
  %2286 = vmatprep.subr.mxu0 0.0
  %2287 = vmatpush1.msra.mxu0 %v300
  %2288 = vmatprep.subr.mxu0 0.0
  %2289 = vmatpush1.msra.mxu0 %v301
  %2290 = vmatprep.subr.mxu0 0.0
  %2291 = vmatpush1.msra.mxu0 0.0
  %2292 = vmatprep.subr.mxu0 0.0
  %2293 = vmatpush1.msra.mxu0 0.0
  %2294 = vmatprep.subr.mxu0 0.0
  %2295 = vmatpush1.msra.mxu0 0.0
  %2296 = vmatprep.subr.mxu0 0.0
  %2297 = vmatpush1.msra.mxu0 0.0
  %2298 = vmatprep.subr.mxu0 0.0
  %2299 = vmatpush1.msra.mxu0 0.0
  %2300 = vmatprep.subr.mxu0 0.0
  %2301 = vmatpush1.msra.mxu0 0.0
  %2302 = vmatprep.subr.mxu0 0.0
  %2303 = vmatpush1.msra.mxu0 0.0
  %2304 = vmatprep.subr.mxu0 0.0
  %2305 = vmatpush1.msra.mxu0 0.0
  %2306 = vmatprep.subr.mxu0 0.0
  %2307 = vmatpush1.msra.mxu0 0.0
  %2308 = vmatprep.subr.mxu0 0.0
  %2309 = vmatpush1.msra.mxu0 0.0
  %2310 = vmatprep.subr.mxu0 0.0
  %2311 = vmatpush1.msra.mxu0 0.0
  %2312 = vmatprep.subr.mxu0 0.0
  %2313 = vmatpush1.msra.mxu0 0.0
  %2314 = vmatprep.subr.mxu0 0.0
  %2315 = vmatpush1.msra.mxu0 0.0
  %2316 = vmatprep.subr.mxu0 0.0
  %2317 = vmatpush1.msra.mxu0 0.0
  %2318 = vmatprep.subr.mxu0 0.0
  %2319 = vmatpush1.msra.mxu0 0.0
  %2320 = vmatprep.subr.mxu0 0.0
  %2321 = vmatpush1.msra.mxu0 0.0
  %2322 = vmatprep.mubr.f32.mxu0 0.0
  %2323 = vmatmul.mubr.f32.gmra.mrb[0].mxu0 %v2254
  %v2324 = vpop.f32.mrb[0].mxu0
  %v2325 = vadd.f32 0.0, %v2324
  %v2326 = vpop.f32.mrb[0].mxu0
  %2327 = vmatprep.mubr.f32.mxu0 0.0
  %2328 = vmatmul.mubr.f32.gmra.mrb[0].mxu0 %v2255
  %v2329 = vpop.f32.mrb[0].mxu0
  %v2330 = vadd.f32 0.0, %v2329
  %v2331 = vpop.f32.mrb[0].mxu0
  %2332 = vmatprep.mubr.f32.mxu0 0.0
  %2333 = vmatmul.mubr.f32.gmra.mrb[0].mxu0 %v2256
  %v2334 = vpop.f32.mrb[0].mxu0
  %v2335 = vadd.f32 0.0, %v2334
  %v2336 = vpop.f32.mrb[0].mxu0
  %2337 = vmatprep.mubr.f32.mxu0 0.0
  %2338 = vmatmul.mubr.f32.gmra.mrb[0].mxu0 %v2257
  %v2339 = vpop.f32.mrb[0].mxu0
  %v2340 = vadd.f32 0.0, %v2339
  %v2341 = vpop.f32.mrb[0].mxu0
  %2342 = vdwg.mxu0
  %s2343 = scalar_lea.vmem %s5, 320
  %v2344 = vld [vmem:[%s2343] sm:$0xff]
  %v2345 = vld [vmem:[%s2343 + $0x8] sm:$0xff]
  %v2346 = vld [vmem:[%s2343 + $0x10] sm:$0xff]
  %v2347 = vld [vmem:[%s2343 + $0x18] sm:$0xff]
  %v2349 = vsel %vm490, %v2325, 0
  %v2352 = vsel %vm490, %v2330, 0
  %v2355 = vsel %vm490, %v2335, 0
  %v2358 = vsel %vm490, %v2340, 0
  %2360 = vmatprep.subr.mxu0 0.0
  %2361 = vmatpush1.msra.mxu0 %v2344
  %2362 = vmatprep.subr.mxu0 0.0
  %2363 = vmatpush1.msra.mxu0 %v2345
  %2364 = vmatprep.subr.mxu0 0.0
  %2365 = vmatpush1.msra.mxu0 %v2346
  %2366 = vmatprep.subr.mxu0 0.0
  %2367 = vmatpush1.msra.mxu0 %v2347
  %2368 = vmatprep.subr.mxu0 0.0
  %2369 = vmatpush1.msra.mxu0 0.0
  %2370 = vmatprep.subr.mxu0 0.0
  %2371 = vmatpush1.msra.mxu0 0.0
  %2372 = vmatprep.subr.mxu0 0.0
  %2373 = vmatpush1.msra.mxu0 0.0
  %2374 = vmatprep.subr.mxu0 0.0
  %2375 = vmatpush1.msra.mxu0 0.0
  %2376 = vmatprep.subr.mxu0 0.0
  %2377 = vmatpush1.msra.mxu0 0.0
  %2378 = vmatprep.subr.mxu0 0.0
  %2379 = vmatpush1.msra.mxu0 0.0
  %2380 = vmatprep.subr.mxu0 0.0
  %2381 = vmatpush1.msra.mxu0 0.0
  %2382 = vmatprep.subr.mxu0 0.0
  %2383 = vmatpush1.msra.mxu0 0.0
  %2384 = vmatprep.subr.mxu0 0.0
  %2385 = vmatpush1.msra.mxu0 0.0
  %2386 = vmatprep.subr.mxu0 0.0
  %2387 = vmatpush1.msra.mxu0 0.0
  %2388 = vmatprep.subr.mxu0 0.0
  %2389 = vmatpush1.msra.mxu0 0.0
  %2390 = vmatprep.subr.mxu0 0.0
  %2391 = vmatpush1.msra.mxu0 0.0
  %2392 = vmatprep.subr.mxu0 0.0
  %2393 = vmatpush1.msra.mxu0 0.0
  %2394 = vmatprep.subr.mxu0 0.0
  %2395 = vmatpush1.msra.mxu0 0.0
  %2396 = vmatprep.subr.mxu0 0.0
  %2397 = vmatpush1.msra.mxu0 0.0
  %2398 = vmatprep.subr.mxu0 0.0
  %2399 = vmatpush1.msra.mxu0 0.0
  %2400 = vmatprep.subr.mxu0 0.0
  %2401 = vmatpush1.msra.mxu0 0.0
  %2402 = vmatprep.subr.mxu0 0.0
  %2403 = vmatpush1.msra.mxu0 0.0
  %2404 = vmatprep.subr.mxu0 0.0
  %2405 = vmatpush1.msra.mxu0 0.0
  %2406 = vmatprep.subr.mxu0 0.0
  %2407 = vmatpush1.msra.mxu0 0.0
  %2408 = vmatprep.subr.mxu0 0.0
  %2409 = vmatpush1.msra.mxu0 0.0
  %2410 = vmatprep.subr.mxu0 0.0
  %2411 = vmatpush1.msra.mxu0 0.0
  %2412 = vmatprep.subr.mxu0 0.0
  %2413 = vmatpush1.msra.mxu0 0.0
  %2414 = vmatprep.subr.mxu0 0.0
  %2415 = vmatpush1.msra.mxu0 0.0
  %2416 = vmatprep.subr.mxu0 0.0
  %2417 = vmatpush1.msra.mxu0 0.0
  %2418 = vmatprep.subr.mxu0 0.0
  %2419 = vmatpush1.msra.mxu0 0.0
  %2420 = vmatprep.subr.mxu0 0.0
  %2421 = vmatpush1.msra.mxu0 0.0
  %2422 = vmatprep.subr.mxu0 0.0
  %2423 = vmatpush1.msra.mxu0 0.0
  %2424 = vmatprep.mubr.f32.mxu0 0.0
  %2425 = vmatmul.mubr.f32.gmra.mrb[0].mxu0 %v2349
  %v2426 = vpop.f32.mrb[0].mxu0
  %v2427 = vadd.f32 0.0, %v2426
  %v2428 = vpop.f32.mrb[0].mxu0
  %2429 = vmatprep.mubr.f32.mxu0 0.0
  %2430 = vmatmul.mubr.f32.gmra.mrb[0].mxu0 %v2352
  %v2431 = vpop.f32.mrb[0].mxu0
  %v2432 = vadd.f32 0.0, %v2431
  %v2433 = vpop.f32.mrb[0].mxu0
  %2434 = vmatprep.mubr.f32.mxu0 0.0
  %2435 = vmatmul.mubr.f32.gmra.mrb[0].mxu0 %v2355
  %v2436 = vpop.f32.mrb[0].mxu0
  %v2437 = vadd.f32 0.0, %v2436
  %v2438 = vpop.f32.mrb[0].mxu0
  %2439 = vmatprep.mubr.f32.mxu0 0.0
  %2440 = vmatmul.mubr.f32.gmra.mrb[0].mxu0 %v2358
  %v2441 = vpop.f32.mrb[0].mxu0
  %v2442 = vadd.f32 0.0, %v2441
  %v2443 = vpop.f32.mrb[0].mxu0
  %2444 = vdwg.mxu0
  %v2445 = vadd.f32 %v2249, %v2427
  %v2446 = vadd.f32 %v2250, %v2432
  %v2447 = vadd.f32 %v2251, %v2437
  %v2448 = vadd.f32 %v2252, %v2442
  %s2449 = scalar_lea.vmem %s4, 352
  %v2450 = vld [vmem:[%s2449] sm:$0xff]
  %v2451 = vld [vmem:[%s2449 + $0x8] sm:$0xff]
  %v2452 = vld [vmem:[%s2449 + $0x10] sm:$0xff]
  %v2453 = vld [vmem:[%s2449 + $0x18] sm:$0xff]
  %2454 = vmatprep.subr.mxu0 0.0
  %2455 = vmatpush1.msra.mxu0 %v286
  %2456 = vmatprep.subr.mxu0 0.0
  %2457 = vmatpush1.msra.mxu0 %v287
  %2458 = vmatprep.subr.mxu0 0.0
  %2459 = vmatpush1.msra.mxu0 %v288
  %2460 = vmatprep.subr.mxu0 0.0
  %2461 = vmatpush1.msra.mxu0 %v289
  %2462 = vmatprep.subr.mxu0 0.0
  %2463 = vmatpush1.msra.mxu0 %v290
  %2464 = vmatprep.subr.mxu0 0.0
  %2465 = vmatpush1.msra.mxu0 %v291
  %2466 = vmatprep.subr.mxu0 0.0
  %2467 = vmatpush1.msra.mxu0 %v292
  %2468 = vmatprep.subr.mxu0 0.0
  %2469 = vmatpush1.msra.mxu0 %v293
  %2470 = vmatprep.subr.mxu0 0.0
  %2471 = vmatpush1.msra.mxu0 %v294
  %2472 = vmatprep.subr.mxu0 0.0
  %2473 = vmatpush1.msra.mxu0 %v295
  %2474 = vmatprep.subr.mxu0 0.0
  %2475 = vmatpush1.msra.mxu0 %v296
  %2476 = vmatprep.subr.mxu0 0.0
  %2477 = vmatpush1.msra.mxu0 %v297
  %2478 = vmatprep.subr.mxu0 0.0
  %2479 = vmatpush1.msra.mxu0 %v298
  %2480 = vmatprep.subr.mxu0 0.0
  %2481 = vmatpush1.msra.mxu0 %v299
  %2482 = vmatprep.subr.mxu0 0.0
  %2483 = vmatpush1.msra.mxu0 %v300
  %2484 = vmatprep.subr.mxu0 0.0
  %2485 = vmatpush1.msra.mxu0 %v301
  %2486 = vmatprep.subr.mxu0 0.0
  %2487 = vmatpush1.msra.mxu0 0.0
  %2488 = vmatprep.subr.mxu0 0.0
  %2489 = vmatpush1.msra.mxu0 0.0
  %2490 = vmatprep.subr.mxu0 0.0
  %2491 = vmatpush1.msra.mxu0 0.0
  %2492 = vmatprep.subr.mxu0 0.0
  %2493 = vmatpush1.msra.mxu0 0.0
  %2494 = vmatprep.subr.mxu0 0.0
  %2495 = vmatpush1.msra.mxu0 0.0
  %2496 = vmatprep.subr.mxu0 0.0
  %2497 = vmatpush1.msra.mxu0 0.0
  %2498 = vmatprep.subr.mxu0 0.0
  %2499 = vmatpush1.msra.mxu0 0.0
  %2500 = vmatprep.subr.mxu0 0.0
  %2501 = vmatpush1.msra.mxu0 0.0
  %2502 = vmatprep.subr.mxu0 0.0
  %2503 = vmatpush1.msra.mxu0 0.0
  %2504 = vmatprep.subr.mxu0 0.0
  %2505 = vmatpush1.msra.mxu0 0.0
  %2506 = vmatprep.subr.mxu0 0.0
  %2507 = vmatpush1.msra.mxu0 0.0
  %2508 = vmatprep.subr.mxu0 0.0
  %2509 = vmatpush1.msra.mxu0 0.0
  %2510 = vmatprep.subr.mxu0 0.0
  %2511 = vmatpush1.msra.mxu0 0.0
  %2512 = vmatprep.subr.mxu0 0.0
  %2513 = vmatpush1.msra.mxu0 0.0
  %2514 = vmatprep.subr.mxu0 0.0
  %2515 = vmatpush1.msra.mxu0 0.0
  %2516 = vmatprep.subr.mxu0 0.0
  %2517 = vmatpush1.msra.mxu0 0.0
  %2518 = vmatprep.mubr.f32.mxu0 0.0
  %2519 = vmatmul.mubr.f32.gmra.mrb[0].mxu0 %v2450
  %v2520 = vpop.f32.mrb[0].mxu0
  %v2521 = vadd.f32 0.0, %v2520
  %v2522 = vpop.f32.mrb[0].mxu0
  %2523 = vmatprep.mubr.f32.mxu0 0.0
  %2524 = vmatmul.mubr.f32.gmra.mrb[0].mxu0 %v2451
  %v2525 = vpop.f32.mrb[0].mxu0
  %v2526 = vadd.f32 0.0, %v2525
  %v2527 = vpop.f32.mrb[0].mxu0
  %2528 = vmatprep.mubr.f32.mxu0 0.0
  %2529 = vmatmul.mubr.f32.gmra.mrb[0].mxu0 %v2452
  %v2530 = vpop.f32.mrb[0].mxu0
  %v2531 = vadd.f32 0.0, %v2530
  %v2532 = vpop.f32.mrb[0].mxu0
  %2533 = vmatprep.mubr.f32.mxu0 0.0
  %2534 = vmatmul.mubr.f32.gmra.mrb[0].mxu0 %v2453
  %v2535 = vpop.f32.mrb[0].mxu0
  %v2536 = vadd.f32 0.0, %v2535
  %v2537 = vpop.f32.mrb[0].mxu0
  %2538 = vdwg.mxu0
  %s2539 = scalar_lea.vmem %s5, 352
  %v2540 = vld [vmem:[%s2539] sm:$0xff]
  %v2541 = vld [vmem:[%s2539 + $0x8] sm:$0xff]
  %v2542 = vld [vmem:[%s2539 + $0x10] sm:$0xff]
  %v2543 = vld [vmem:[%s2539 + $0x18] sm:$0xff]
  %v2545 = vsel %vm490, %v2521, 0
  %v2548 = vsel %vm490, %v2526, 0
  %v2551 = vsel %vm490, %v2531, 0
  %v2554 = vsel %vm490, %v2536, 0
  %2556 = vmatprep.subr.mxu0 0.0
  %2557 = vmatpush1.msra.mxu0 %v2540
  %2558 = vmatprep.subr.mxu0 0.0
  %2559 = vmatpush1.msra.mxu0 %v2541
  %2560 = vmatprep.subr.mxu0 0.0
  %2561 = vmatpush1.msra.mxu0 %v2542
  %2562 = vmatprep.subr.mxu0 0.0
  %2563 = vmatpush1.msra.mxu0 %v2543
  %2564 = vmatprep.subr.mxu0 0.0
  %2565 = vmatpush1.msra.mxu0 0.0
  %2566 = vmatprep.subr.mxu0 0.0
  %2567 = vmatpush1.msra.mxu0 0.0
  %2568 = vmatprep.subr.mxu0 0.0
  %2569 = vmatpush1.msra.mxu0 0.0
  %2570 = vmatprep.subr.mxu0 0.0
  %2571 = vmatpush1.msra.mxu0 0.0
  %2572 = vmatprep.subr.mxu0 0.0
  %2573 = vmatpush1.msra.mxu0 0.0
  %2574 = vmatprep.subr.mxu0 0.0
  %2575 = vmatpush1.msra.mxu0 0.0
  %2576 = vmatprep.subr.mxu0 0.0
  %2577 = vmatpush1.msra.mxu0 0.0
  %2578 = vmatprep.subr.mxu0 0.0
  %2579 = vmatpush1.msra.mxu0 0.0
  %2580 = vmatprep.subr.mxu0 0.0
  %2581 = vmatpush1.msra.mxu0 0.0
  %2582 = vmatprep.subr.mxu0 0.0
  %2583 = vmatpush1.msra.mxu0 0.0
  %2584 = vmatprep.subr.mxu0 0.0
  %2585 = vmatpush1.msra.mxu0 0.0
  %2586 = vmatprep.subr.mxu0 0.0
  %2587 = vmatpush1.msra.mxu0 0.0
  %2588 = vmatprep.subr.mxu0 0.0
  %2589 = vmatpush1.msra.mxu0 0.0
  %2590 = vmatprep.subr.mxu0 0.0
  %2591 = vmatpush1.msra.mxu0 0.0
  %2592 = vmatprep.subr.mxu0 0.0
  %2593 = vmatpush1.msra.mxu0 0.0
  %2594 = vmatprep.subr.mxu0 0.0
  %2595 = vmatpush1.msra.mxu0 0.0
  %2596 = vmatprep.subr.mxu0 0.0
  %2597 = vmatpush1.msra.mxu0 0.0
  %2598 = vmatprep.subr.mxu0 0.0
  %2599 = vmatpush1.msra.mxu0 0.0
  %2600 = vmatprep.subr.mxu0 0.0
  %2601 = vmatpush1.msra.mxu0 0.0
  %2602 = vmatprep.subr.mxu0 0.0
  %2603 = vmatpush1.msra.mxu0 0.0
  %2604 = vmatprep.subr.mxu0 0.0
  %2605 = vmatpush1.msra.mxu0 0.0
  %2606 = vmatprep.subr.mxu0 0.0
  %2607 = vmatpush1.msra.mxu0 0.0
  %2608 = vmatprep.subr.mxu0 0.0
  %2609 = vmatpush1.msra.mxu0 0.0
  %2610 = vmatprep.subr.mxu0 0.0
  %2611 = vmatpush1.msra.mxu0 0.0
  %2612 = vmatprep.subr.mxu0 0.0
  %2613 = vmatpush1.msra.mxu0 0.0
  %2614 = vmatprep.subr.mxu0 0.0
  %2615 = vmatpush1.msra.mxu0 0.0
  %2616 = vmatprep.subr.mxu0 0.0
  %2617 = vmatpush1.msra.mxu0 0.0
  %2618 = vmatprep.subr.mxu0 0.0
  %2619 = vmatpush1.msra.mxu0 0.0
  %2620 = vmatprep.mubr.f32.mxu0 0.0
  %2621 = vmatmul.mubr.f32.gmra.mrb[0].mxu0 %v2545
  %v2622 = vpop.f32.mrb[0].mxu0
  %v2623 = vadd.f32 0.0, %v2622
  %v2624 = vpop.f32.mrb[0].mxu0
  %2625 = vmatprep.mubr.f32.mxu0 0.0
  %2626 = vmatmul.mubr.f32.gmra.mrb[0].mxu0 %v2548
  %v2627 = vpop.f32.mrb[0].mxu0
  %v2628 = vadd.f32 0.0, %v2627
  %v2629 = vpop.f32.mrb[0].mxu0
  %2630 = vmatprep.mubr.f32.mxu0 0.0
  %2631 = vmatmul.mubr.f32.gmra.mrb[0].mxu0 %v2551
  %v2632 = vpop.f32.mrb[0].mxu0
  %v2633 = vadd.f32 0.0, %v2632
  %v2634 = vpop.f32.mrb[0].mxu0
  %2635 = vmatprep.mubr.f32.mxu0 0.0
  %2636 = vmatmul.mubr.f32.gmra.mrb[0].mxu0 %v2554
  %v2637 = vpop.f32.mrb[0].mxu0
  %v2638 = vadd.f32 0.0, %v2637
  %v2639 = vpop.f32.mrb[0].mxu0
  %2640 = vdwg.mxu0
  %v2641 = vadd.f32 %v2445, %v2623
  %v2642 = vadd.f32 %v2446, %v2628
  %v2643 = vadd.f32 %v2447, %v2633
  %v2644 = vadd.f32 %v2448, %v2638
  %s2645 = scalar_lea.vmem %s4, 384
  %v2646 = vld [vmem:[%s2645] sm:$0xff]
  %v2647 = vld [vmem:[%s2645 + $0x8] sm:$0xff]
  %v2648 = vld [vmem:[%s2645 + $0x10] sm:$0xff]
  %v2649 = vld [vmem:[%s2645 + $0x18] sm:$0xff]
  %2650 = vmatprep.subr.mxu0 0.0
  %2651 = vmatpush1.msra.mxu0 %v286
  %2652 = vmatprep.subr.mxu0 0.0
  %2653 = vmatpush1.msra.mxu0 %v287
  %2654 = vmatprep.subr.mxu0 0.0
  %2655 = vmatpush1.msra.mxu0 %v288
  %2656 = vmatprep.subr.mxu0 0.0
  %2657 = vmatpush1.msra.mxu0 %v289
  %2658 = vmatprep.subr.mxu0 0.0
  %2659 = vmatpush1.msra.mxu0 %v290
  %2660 = vmatprep.subr.mxu0 0.0
  %2661 = vmatpush1.msra.mxu0 %v291
  %2662 = vmatprep.subr.mxu0 0.0
  %2663 = vmatpush1.msra.mxu0 %v292
  %2664 = vmatprep.subr.mxu0 0.0
  %2665 = vmatpush1.msra.mxu0 %v293
  %2666 = vmatprep.subr.mxu0 0.0
  %2667 = vmatpush1.msra.mxu0 %v294
  %2668 = vmatprep.subr.mxu0 0.0
  %2669 = vmatpush1.msra.mxu0 %v295
  %2670 = vmatprep.subr.mxu0 0.0
  %2671 = vmatpush1.msra.mxu0 %v296
  %2672 = vmatprep.subr.mxu0 0.0
  %2673 = vmatpush1.msra.mxu0 %v297
  %2674 = vmatprep.subr.mxu0 0.0
  %2675 = vmatpush1.msra.mxu0 %v298
  %2676 = vmatprep.subr.mxu0 0.0
  %2677 = vmatpush1.msra.mxu0 %v299
  %2678 = vmatprep.subr.mxu0 0.0
  %2679 = vmatpush1.msra.mxu0 %v300
  %2680 = vmatprep.subr.mxu0 0.0
  %2681 = vmatpush1.msra.mxu0 %v301
  %2682 = vmatprep.subr.mxu0 0.0
  %2683 = vmatpush1.msra.mxu0 0.0
  %2684 = vmatprep.subr.mxu0 0.0
  %2685 = vmatpush1.msra.mxu0 0.0
  %2686 = vmatprep.subr.mxu0 0.0
  %2687 = vmatpush1.msra.mxu0 0.0
  %2688 = vmatprep.subr.mxu0 0.0
  %2689 = vmatpush1.msra.mxu0 0.0
  %2690 = vmatprep.subr.mxu0 0.0
  %2691 = vmatpush1.msra.mxu0 0.0
  %2692 = vmatprep.subr.mxu0 0.0
  %2693 = vmatpush1.msra.mxu0 0.0
  %2694 = vmatprep.subr.mxu0 0.0
  %2695 = vmatpush1.msra.mxu0 0.0
  %2696 = vmatprep.subr.mxu0 0.0
  %2697 = vmatpush1.msra.mxu0 0.0
  %2698 = vmatprep.subr.mxu0 0.0
  %2699 = vmatpush1.msra.mxu0 0.0
  %2700 = vmatprep.subr.mxu0 0.0
  %2701 = vmatpush1.msra.mxu0 0.0
  %2702 = vmatprep.subr.mxu0 0.0
  %2703 = vmatpush1.msra.mxu0 0.0
  %2704 = vmatprep.subr.mxu0 0.0
  %2705 = vmatpush1.msra.mxu0 0.0
  %2706 = vmatprep.subr.mxu0 0.0
  %2707 = vmatpush1.msra.mxu0 0.0
  %2708 = vmatprep.subr.mxu0 0.0
  %2709 = vmatpush1.msra.mxu0 0.0
  %2710 = vmatprep.subr.mxu0 0.0
  %2711 = vmatpush1.msra.mxu0 0.0
  %2712 = vmatprep.subr.mxu0 0.0
  %2713 = vmatpush1.msra.mxu0 0.0
  %2714 = vmatprep.mubr.f32.mxu0 0.0
  %2715 = vmatmul.mubr.f32.gmra.mrb[0].mxu0 %v2646
  %v2716 = vpop.f32.mrb[0].mxu0
  %v2717 = vadd.f32 0.0, %v2716
  %v2718 = vpop.f32.mrb[0].mxu0
  %2719 = vmatprep.mubr.f32.mxu0 0.0
  %2720 = vmatmul.mubr.f32.gmra.mrb[0].mxu0 %v2647
  %v2721 = vpop.f32.mrb[0].mxu0
  %v2722 = vadd.f32 0.0, %v2721
  %v2723 = vpop.f32.mrb[0].mxu0
  %2724 = vmatprep.mubr.f32.mxu0 0.0
  %2725 = vmatmul.mubr.f32.gmra.mrb[0].mxu0 %v2648
  %v2726 = vpop.f32.mrb[0].mxu0
  %v2727 = vadd.f32 0.0, %v2726
  %v2728 = vpop.f32.mrb[0].mxu0
  %2729 = vmatprep.mubr.f32.mxu0 0.0
  %2730 = vmatmul.mubr.f32.gmra.mrb[0].mxu0 %v2649
  %v2731 = vpop.f32.mrb[0].mxu0
  %v2732 = vadd.f32 0.0, %v2731
  %v2733 = vpop.f32.mrb[0].mxu0
  %2734 = vdwg.mxu0
  %s2735 = scalar_lea.vmem %s5, 384
  %v2736 = vld [vmem:[%s2735] sm:$0xff]
  %v2737 = vld [vmem:[%s2735 + $0x8] sm:$0xff]
  %v2738 = vld [vmem:[%s2735 + $0x10] sm:$0xff]
  %v2739 = vld [vmem:[%s2735 + $0x18] sm:$0xff]
  %v2741 = vsel %vm490, %v2717, 0
  %v2744 = vsel %vm490, %v2722, 0
  %v2747 = vsel %vm490, %v2727, 0
  %v2750 = vsel %vm490, %v2732, 0
  %2752 = vmatprep.subr.mxu0 0.0
  %2753 = vmatpush1.msra.mxu0 %v2736
  %2754 = vmatprep.subr.mxu0 0.0
  %2755 = vmatpush1.msra.mxu0 %v2737
  %2756 = vmatprep.subr.mxu0 0.0
  %2757 = vmatpush1.msra.mxu0 %v2738
  %2758 = vmatprep.subr.mxu0 0.0
  %2759 = vmatpush1.msra.mxu0 %v2739
  %2760 = vmatprep.subr.mxu0 0.0
  %2761 = vmatpush1.msra.mxu0 0.0
  %2762 = vmatprep.subr.mxu0 0.0
  %2763 = vmatpush1.msra.mxu0 0.0
  %2764 = vmatprep.subr.mxu0 0.0
  %2765 = vmatpush1.msra.mxu0 0.0
  %2766 = vmatprep.subr.mxu0 0.0
  %2767 = vmatpush1.msra.mxu0 0.0
  %2768 = vmatprep.subr.mxu0 0.0
  %2769 = vmatpush1.msra.mxu0 0.0
  %2770 = vmatprep.subr.mxu0 0.0
  %2771 = vmatpush1.msra.mxu0 0.0
  %2772 = vmatprep.subr.mxu0 0.0
  %2773 = vmatpush1.msra.mxu0 0.0
  %2774 = vmatprep.subr.mxu0 0.0
  %2775 = vmatpush1.msra.mxu0 0.0
  %2776 = vmatprep.subr.mxu0 0.0
  %2777 = vmatpush1.msra.mxu0 0.0
  %2778 = vmatprep.subr.mxu0 0.0
  %2779 = vmatpush1.msra.mxu0 0.0
  %2780 = vmatprep.subr.mxu0 0.0
  %2781 = vmatpush1.msra.mxu0 0.0
  %2782 = vmatprep.subr.mxu0 0.0
  %2783 = vmatpush1.msra.mxu0 0.0
  %2784 = vmatprep.subr.mxu0 0.0
  %2785 = vmatpush1.msra.mxu0 0.0
  %2786 = vmatprep.subr.mxu0 0.0
  %2787 = vmatpush1.msra.mxu0 0.0
  %2788 = vmatprep.subr.mxu0 0.0
  %2789 = vmatpush1.msra.mxu0 0.0
  %2790 = vmatprep.subr.mxu0 0.0
  %2791 = vmatpush1.msra.mxu0 0.0
  %2792 = vmatprep.subr.mxu0 0.0
  %2793 = vmatpush1.msra.mxu0 0.0
  %2794 = vmatprep.subr.mxu0 0.0
  %2795 = vmatpush1.msra.mxu0 0.0
  %2796 = vmatprep.subr.mxu0 0.0
  %2797 = vmatpush1.msra.mxu0 0.0
  %2798 = vmatprep.subr.mxu0 0.0
  %2799 = vmatpush1.msra.mxu0 0.0
  %2800 = vmatprep.subr.mxu0 0.0
  %2801 = vmatpush1.msra.mxu0 0.0
  %2802 = vmatprep.subr.mxu0 0.0
  %2803 = vmatpush1.msra.mxu0 0.0
  %2804 = vmatprep.subr.mxu0 0.0
  %2805 = vmatpush1.msra.mxu0 0.0
  %2806 = vmatprep.subr.mxu0 0.0
  %2807 = vmatpush1.msra.mxu0 0.0
  %2808 = vmatprep.subr.mxu0 0.0
  %2809 = vmatpush1.msra.mxu0 0.0
  %2810 = vmatprep.subr.mxu0 0.0
  %2811 = vmatpush1.msra.mxu0 0.0
  %2812 = vmatprep.subr.mxu0 0.0
  %2813 = vmatpush1.msra.mxu0 0.0
  %2814 = vmatprep.subr.mxu0 0.0
  %2815 = vmatpush1.msra.mxu0 0.0
  %2816 = vmatprep.mubr.f32.mxu0 0.0
  %2817 = vmatmul.mubr.f32.gmra.mrb[0].mxu0 %v2741
  %v2818 = vpop.f32.mrb[0].mxu0
  %v2819 = vadd.f32 0.0, %v2818
  %v2820 = vpop.f32.mrb[0].mxu0
  %2821 = vmatprep.mubr.f32.mxu0 0.0
  %2822 = vmatmul.mubr.f32.gmra.mrb[0].mxu0 %v2744
  %v2823 = vpop.f32.mrb[0].mxu0
  %v2824 = vadd.f32 0.0, %v2823
  %v2825 = vpop.f32.mrb[0].mxu0
  %2826 = vmatprep.mubr.f32.mxu0 0.0
  %2827 = vmatmul.mubr.f32.gmra.mrb[0].mxu0 %v2747
  %v2828 = vpop.f32.mrb[0].mxu0
  %v2829 = vadd.f32 0.0, %v2828
  %v2830 = vpop.f32.mrb[0].mxu0
  %2831 = vmatprep.mubr.f32.mxu0 0.0
  %2832 = vmatmul.mubr.f32.gmra.mrb[0].mxu0 %v2750
  %v2833 = vpop.f32.mrb[0].mxu0
  %v2834 = vadd.f32 0.0, %v2833
  %v2835 = vpop.f32.mrb[0].mxu0
  %2836 = vdwg.mxu0
  %v2837 = vadd.f32 %v2641, %v2819
  %v2838 = vadd.f32 %v2642, %v2824
  %v2839 = vadd.f32 %v2643, %v2829
  %v2840 = vadd.f32 %v2644, %v2834
  %s2841 = scalar_lea.vmem %s4, 416
  %v2842 = vld [vmem:[%s2841] sm:$0xff]
  %v2843 = vld [vmem:[%s2841 + $0x8] sm:$0xff]
  %v2844 = vld [vmem:[%s2841 + $0x10] sm:$0xff]
  %v2845 = vld [vmem:[%s2841 + $0x18] sm:$0xff]
  %2846 = vmatprep.subr.mxu0 0.0
  %2847 = vmatpush1.msra.mxu0 %v286
  %2848 = vmatprep.subr.mxu0 0.0
  %2849 = vmatpush1.msra.mxu0 %v287
  %2850 = vmatprep.subr.mxu0 0.0
  %2851 = vmatpush1.msra.mxu0 %v288
  %2852 = vmatprep.subr.mxu0 0.0
  %2853 = vmatpush1.msra.mxu0 %v289
  %2854 = vmatprep.subr.mxu0 0.0
  %2855 = vmatpush1.msra.mxu0 %v290
  %2856 = vmatprep.subr.mxu0 0.0
  %2857 = vmatpush1.msra.mxu0 %v291
  %2858 = vmatprep.subr.mxu0 0.0
  %2859 = vmatpush1.msra.mxu0 %v292
  %2860 = vmatprep.subr.mxu0 0.0
  %2861 = vmatpush1.msra.mxu0 %v293
  %2862 = vmatprep.subr.mxu0 0.0
  %2863 = vmatpush1.msra.mxu0 %v294
  %2864 = vmatprep.subr.mxu0 0.0
  %2865 = vmatpush1.msra.mxu0 %v295
  %2866 = vmatprep.subr.mxu0 0.0
  %2867 = vmatpush1.msra.mxu0 %v296
  %2868 = vmatprep.subr.mxu0 0.0
  %2869 = vmatpush1.msra.mxu0 %v297
  %2870 = vmatprep.subr.mxu0 0.0
  %2871 = vmatpush1.msra.mxu0 %v298
  %2872 = vmatprep.subr.mxu0 0.0
  %2873 = vmatpush1.msra.mxu0 %v299
  %2874 = vmatprep.subr.mxu0 0.0
  %2875 = vmatpush1.msra.mxu0 %v300
  %2876 = vmatprep.subr.mxu0 0.0
  %2877 = vmatpush1.msra.mxu0 %v301
  %2878 = vmatprep.subr.mxu0 0.0
  %2879 = vmatpush1.msra.mxu0 0.0
  %2880 = vmatprep.subr.mxu0 0.0
  %2881 = vmatpush1.msra.mxu0 0.0
  %2882 = vmatprep.subr.mxu0 0.0
  %2883 = vmatpush1.msra.mxu0 0.0
  %2884 = vmatprep.subr.mxu0 0.0
  %2885 = vmatpush1.msra.mxu0 0.0
  %2886 = vmatprep.subr.mxu0 0.0
  %2887 = vmatpush1.msra.mxu0 0.0
  %2888 = vmatprep.subr.mxu0 0.0
  %2889 = vmatpush1.msra.mxu0 0.0
  %2890 = vmatprep.subr.mxu0 0.0
  %2891 = vmatpush1.msra.mxu0 0.0
  %2892 = vmatprep.subr.mxu0 0.0
  %2893 = vmatpush1.msra.mxu0 0.0
  %2894 = vmatprep.subr.mxu0 0.0
  %2895 = vmatpush1.msra.mxu0 0.0
  %2896 = vmatprep.subr.mxu0 0.0
  %2897 = vmatpush1.msra.mxu0 0.0
  %2898 = vmatprep.subr.mxu0 0.0
  %2899 = vmatpush1.msra.mxu0 0.0
  %2900 = vmatprep.subr.mxu0 0.0
  %2901 = vmatpush1.msra.mxu0 0.0
  %2902 = vmatprep.subr.mxu0 0.0
  %2903 = vmatpush1.msra.mxu0 0.0
  %2904 = vmatprep.subr.mxu0 0.0
  %2905 = vmatpush1.msra.mxu0 0.0
  %2906 = vmatprep.subr.mxu0 0.0
  %2907 = vmatpush1.msra.mxu0 0.0
  %2908 = vmatprep.subr.mxu0 0.0
  %2909 = vmatpush1.msra.mxu0 0.0
  %2910 = vmatprep.mubr.f32.mxu0 0.0
  %2911 = vmatmul.mubr.f32.gmra.mrb[0].mxu0 %v2842
  %v2912 = vpop.f32.mrb[0].mxu0
  %v2913 = vadd.f32 0.0, %v2912
  %v2914 = vpop.f32.mrb[0].mxu0
  %2915 = vmatprep.mubr.f32.mxu0 0.0
  %2916 = vmatmul.mubr.f32.gmra.mrb[0].mxu0 %v2843
  %v2917 = vpop.f32.mrb[0].mxu0
  %v2918 = vadd.f32 0.0, %v2917
  %v2919 = vpop.f32.mrb[0].mxu0
  %2920 = vmatprep.mubr.f32.mxu0 0.0
  %2921 = vmatmul.mubr.f32.gmra.mrb[0].mxu0 %v2844
  %v2922 = vpop.f32.mrb[0].mxu0
  %v2923 = vadd.f32 0.0, %v2922
  %v2924 = vpop.f32.mrb[0].mxu0
  %2925 = vmatprep.mubr.f32.mxu0 0.0
  %2926 = vmatmul.mubr.f32.gmra.mrb[0].mxu0 %v2845
  %v2927 = vpop.f32.mrb[0].mxu0
  %v2928 = vadd.f32 0.0, %v2927
  %v2929 = vpop.f32.mrb[0].mxu0
  %2930 = vdwg.mxu0
  %s2931 = scalar_lea.vmem %s5, 416
  %v2932 = vld [vmem:[%s2931] sm:$0xff]
  %v2933 = vld [vmem:[%s2931 + $0x8] sm:$0xff]
  %v2934 = vld [vmem:[%s2931 + $0x10] sm:$0xff]
  %v2935 = vld [vmem:[%s2931 + $0x18] sm:$0xff]
  %v2937 = vsel %vm490, %v2913, 0
  %v2940 = vsel %vm490, %v2918, 0
  %v2943 = vsel %vm490, %v2923, 0
  %v2946 = vsel %vm490, %v2928, 0
  %2948 = vmatprep.subr.mxu0 0.0
  %2949 = vmatpush1.msra.mxu0 %v2932
  %2950 = vmatprep.subr.mxu0 0.0
  %2951 = vmatpush1.msra.mxu0 %v2933
  %2952 = vmatprep.subr.mxu0 0.0
  %2953 = vmatpush1.msra.mxu0 %v2934
  %2954 = vmatprep.subr.mxu0 0.0
  %2955 = vmatpush1.msra.mxu0 %v2935
  %2956 = vmatprep.subr.mxu0 0.0
  %2957 = vmatpush1.msra.mxu0 0.0
  %2958 = vmatprep.subr.mxu0 0.0
  %2959 = vmatpush1.msra.mxu0 0.0
  %2960 = vmatprep.subr.mxu0 0.0
  %2961 = vmatpush1.msra.mxu0 0.0
  %2962 = vmatprep.subr.mxu0 0.0
  %2963 = vmatpush1.msra.mxu0 0.0
  %2964 = vmatprep.subr.mxu0 0.0
  %2965 = vmatpush1.msra.mxu0 0.0
  %2966 = vmatprep.subr.mxu0 0.0
  %2967 = vmatpush1.msra.mxu0 0.0
  %2968 = vmatprep.subr.mxu0 0.0
  %2969 = vmatpush1.msra.mxu0 0.0
  %2970 = vmatprep.subr.mxu0 0.0
  %2971 = vmatpush1.msra.mxu0 0.0
  %2972 = vmatprep.subr.mxu0 0.0
  %2973 = vmatpush1.msra.mxu0 0.0
  %2974 = vmatprep.subr.mxu0 0.0
  %2975 = vmatpush1.msra.mxu0 0.0
  %2976 = vmatprep.subr.mxu0 0.0
  %2977 = vmatpush1.msra.mxu0 0.0
  %2978 = vmatprep.subr.mxu0 0.0
  %2979 = vmatpush1.msra.mxu0 0.0
  %2980 = vmatprep.subr.mxu0 0.0
  %2981 = vmatpush1.msra.mxu0 0.0
  %2982 = vmatprep.subr.mxu0 0.0
  %2983 = vmatpush1.msra.mxu0 0.0
  %2984 = vmatprep.subr.mxu0 0.0
  %2985 = vmatpush1.msra.mxu0 0.0
  %2986 = vmatprep.subr.mxu0 0.0
  %2987 = vmatpush1.msra.mxu0 0.0
  %2988 = vmatprep.subr.mxu0 0.0
  %2989 = vmatpush1.msra.mxu0 0.0
  %2990 = vmatprep.subr.mxu0 0.0
  %2991 = vmatpush1.msra.mxu0 0.0
  %2992 = vmatprep.subr.mxu0 0.0
  %2993 = vmatpush1.msra.mxu0 0.0
  %2994 = vmatprep.subr.mxu0 0.0
  %2995 = vmatpush1.msra.mxu0 0.0
  %2996 = vmatprep.subr.mxu0 0.0
  %2997 = vmatpush1.msra.mxu0 0.0
  %2998 = vmatprep.subr.mxu0 0.0
  %2999 = vmatpush1.msra.mxu0 0.0
  %3000 = vmatprep.subr.mxu0 0.0
  %3001 = vmatpush1.msra.mxu0 0.0
  %3002 = vmatprep.subr.mxu0 0.0
  %3003 = vmatpush1.msra.mxu0 0.0
  %3004 = vmatprep.subr.mxu0 0.0
  %3005 = vmatpush1.msra.mxu0 0.0
  %3006 = vmatprep.subr.mxu0 0.0
  %3007 = vmatpush1.msra.mxu0 0.0
  %3008 = vmatprep.subr.mxu0 0.0
  %3009 = vmatpush1.msra.mxu0 0.0
  %3010 = vmatprep.subr.mxu0 0.0
  %3011 = vmatpush1.msra.mxu0 0.0
  %3012 = vmatprep.mubr.f32.mxu0 0.0
  %3013 = vmatmul.mubr.f32.gmra.mrb[0].mxu0 %v2937
  %v3014 = vpop.f32.mrb[0].mxu0
  %v3015 = vadd.f32 0.0, %v3014
  %v3016 = vpop.f32.mrb[0].mxu0
  %3017 = vmatprep.mubr.f32.mxu0 0.0
  %3018 = vmatmul.mubr.f32.gmra.mrb[0].mxu0 %v2940
  %v3019 = vpop.f32.mrb[0].mxu0
  %v3020 = vadd.f32 0.0, %v3019
  %v3021 = vpop.f32.mrb[0].mxu0
  %3022 = vmatprep.mubr.f32.mxu0 0.0
  %3023 = vmatmul.mubr.f32.gmra.mrb[0].mxu0 %v2943
  %v3024 = vpop.f32.mrb[0].mxu0
  %v3025 = vadd.f32 0.0, %v3024
  %v3026 = vpop.f32.mrb[0].mxu0
  %3027 = vmatprep.mubr.f32.mxu0 0.0
  %3028 = vmatmul.mubr.f32.gmra.mrb[0].mxu0 %v2946
  %v3029 = vpop.f32.mrb[0].mxu0
  %v3030 = vadd.f32 0.0, %v3029
  %v3031 = vpop.f32.mrb[0].mxu0
  %3032 = vdwg.mxu0
  %v3033 = vadd.f32 %v2837, %v3015
  %v3034 = vadd.f32 %v2838, %v3020
  %v3035 = vadd.f32 %v2839, %v3025
  %v3036 = vadd.f32 %v2840, %v3030
  %s3037 = scalar_lea.vmem %s4, 448
  %v3038 = vld [vmem:[%s3037] sm:$0xff]
  %v3039 = vld [vmem:[%s3037 + $0x8] sm:$0xff]
  %v3040 = vld [vmem:[%s3037 + $0x10] sm:$0xff]
  %v3041 = vld [vmem:[%s3037 + $0x18] sm:$0xff]
  %3042 = vmatprep.subr.mxu0 0.0
  %3043 = vmatpush1.msra.mxu0 %v286
  %3044 = vmatprep.subr.mxu0 0.0
  %3045 = vmatpush1.msra.mxu0 %v287
  %3046 = vmatprep.subr.mxu0 0.0
  %3047 = vmatpush1.msra.mxu0 %v288
  %3048 = vmatprep.subr.mxu0 0.0
  %3049 = vmatpush1.msra.mxu0 %v289
  %3050 = vmatprep.subr.mxu0 0.0
  %3051 = vmatpush1.msra.mxu0 %v290
  %3052 = vmatprep.subr.mxu0 0.0
  %3053 = vmatpush1.msra.mxu0 %v291
  %3054 = vmatprep.subr.mxu0 0.0
  %3055 = vmatpush1.msra.mxu0 %v292
  %3056 = vmatprep.subr.mxu0 0.0
  %3057 = vmatpush1.msra.mxu0 %v293
  %3058 = vmatprep.subr.mxu0 0.0
  %3059 = vmatpush1.msra.mxu0 %v294
  %3060 = vmatprep.subr.mxu0 0.0
  %3061 = vmatpush1.msra.mxu0 %v295
  %3062 = vmatprep.subr.mxu0 0.0
  %3063 = vmatpush1.msra.mxu0 %v296
  %3064 = vmatprep.subr.mxu0 0.0
  %3065 = vmatpush1.msra.mxu0 %v297
  %3066 = vmatprep.subr.mxu0 0.0
  %3067 = vmatpush1.msra.mxu0 %v298
  %3068 = vmatprep.subr.mxu0 0.0
  %3069 = vmatpush1.msra.mxu0 %v299
  %3070 = vmatprep.subr.mxu0 0.0
  %3071 = vmatpush1.msra.mxu0 %v300
  %3072 = vmatprep.subr.mxu0 0.0
  %3073 = vmatpush1.msra.mxu0 %v301
  %3074 = vmatprep.subr.mxu0 0.0
  %3075 = vmatpush1.msra.mxu0 0.0
  %3076 = vmatprep.subr.mxu0 0.0
  %3077 = vmatpush1.msra.mxu0 0.0
  %3078 = vmatprep.subr.mxu0 0.0
  %3079 = vmatpush1.msra.mxu0 0.0
  %3080 = vmatprep.subr.mxu0 0.0
  %3081 = vmatpush1.msra.mxu0 0.0
  %3082 = vmatprep.subr.mxu0 0.0
  %3083 = vmatpush1.msra.mxu0 0.0
  %3084 = vmatprep.subr.mxu0 0.0
  %3085 = vmatpush1.msra.mxu0 0.0
  %3086 = vmatprep.subr.mxu0 0.0
  %3087 = vmatpush1.msra.mxu0 0.0
  %3088 = vmatprep.subr.mxu0 0.0
  %3089 = vmatpush1.msra.mxu0 0.0
  %3090 = vmatprep.subr.mxu0 0.0
  %3091 = vmatpush1.msra.mxu0 0.0
  %3092 = vmatprep.subr.mxu0 0.0
  %3093 = vmatpush1.msra.mxu0 0.0
  %3094 = vmatprep.subr.mxu0 0.0
  %3095 = vmatpush1.msra.mxu0 0.0
  %3096 = vmatprep.subr.mxu0 0.0
  %3097 = vmatpush1.msra.mxu0 0.0
  %3098 = vmatprep.subr.mxu0 0.0
  %3099 = vmatpush1.msra.mxu0 0.0
  %3100 = vmatprep.subr.mxu0 0.0
  %3101 = vmatpush1.msra.mxu0 0.0
  %3102 = vmatprep.subr.mxu0 0.0
  %3103 = vmatpush1.msra.mxu0 0.0
  %3104 = vmatprep.subr.mxu0 0.0
  %3105 = vmatpush1.msra.mxu0 0.0
  %3106 = vmatprep.mubr.f32.mxu0 0.0
  %3107 = vmatmul.mubr.f32.gmra.mrb[0].mxu0 %v3038
  %v3108 = vpop.f32.mrb[0].mxu0
  %v3109 = vadd.f32 0.0, %v3108
  %v3110 = vpop.f32.mrb[0].mxu0
  %3111 = vmatprep.mubr.f32.mxu0 0.0
  %3112 = vmatmul.mubr.f32.gmra.mrb[0].mxu0 %v3039
  %v3113 = vpop.f32.mrb[0].mxu0
  %v3114 = vadd.f32 0.0, %v3113
  %v3115 = vpop.f32.mrb[0].mxu0
  %3116 = vmatprep.mubr.f32.mxu0 0.0
  %3117 = vmatmul.mubr.f32.gmra.mrb[0].mxu0 %v3040
  %v3118 = vpop.f32.mrb[0].mxu0
  %v3119 = vadd.f32 0.0, %v3118
  %v3120 = vpop.f32.mrb[0].mxu0
  %3121 = vmatprep.mubr.f32.mxu0 0.0
  %3122 = vmatmul.mubr.f32.gmra.mrb[0].mxu0 %v3041
  %v3123 = vpop.f32.mrb[0].mxu0
  %v3124 = vadd.f32 0.0, %v3123
  %v3125 = vpop.f32.mrb[0].mxu0
  %3126 = vdwg.mxu0
  %s3127 = scalar_lea.vmem %s5, 448
  %v3128 = vld [vmem:[%s3127] sm:$0xff]
  %v3129 = vld [vmem:[%s3127 + $0x8] sm:$0xff]
  %v3130 = vld [vmem:[%s3127 + $0x10] sm:$0xff]
  %v3131 = vld [vmem:[%s3127 + $0x18] sm:$0xff]
  %v3133 = vsel %vm490, %v3109, 0
  %v3136 = vsel %vm490, %v3114, 0
  %v3139 = vsel %vm490, %v3119, 0
  %v3142 = vsel %vm490, %v3124, 0
  %3144 = vmatprep.subr.mxu0 0.0
  %3145 = vmatpush1.msra.mxu0 %v3128
  %3146 = vmatprep.subr.mxu0 0.0
  %3147 = vmatpush1.msra.mxu0 %v3129
  %3148 = vmatprep.subr.mxu0 0.0
  %3149 = vmatpush1.msra.mxu0 %v3130
  %3150 = vmatprep.subr.mxu0 0.0
  %3151 = vmatpush1.msra.mxu0 %v3131
  %3152 = vmatprep.subr.mxu0 0.0
  %3153 = vmatpush1.msra.mxu0 0.0
  %3154 = vmatprep.subr.mxu0 0.0
  %3155 = vmatpush1.msra.mxu0 0.0
  %3156 = vmatprep.subr.mxu0 0.0
  %3157 = vmatpush1.msra.mxu0 0.0
  %3158 = vmatprep.subr.mxu0 0.0
  %3159 = vmatpush1.msra.mxu0 0.0
  %3160 = vmatprep.subr.mxu0 0.0
  %3161 = vmatpush1.msra.mxu0 0.0
  %3162 = vmatprep.subr.mxu0 0.0
  %3163 = vmatpush1.msra.mxu0 0.0
  %3164 = vmatprep.subr.mxu0 0.0
  %3165 = vmatpush1.msra.mxu0 0.0
  %3166 = vmatprep.subr.mxu0 0.0
  %3167 = vmatpush1.msra.mxu0 0.0
  %3168 = vmatprep.subr.mxu0 0.0
  %3169 = vmatpush1.msra.mxu0 0.0
  %3170 = vmatprep.subr.mxu0 0.0
  %3171 = vmatpush1.msra.mxu0 0.0
  %3172 = vmatprep.subr.mxu0 0.0
  %3173 = vmatpush1.msra.mxu0 0.0
  %3174 = vmatprep.subr.mxu0 0.0
  %3175 = vmatpush1.msra.mxu0 0.0
  %3176 = vmatprep.subr.mxu0 0.0
  %3177 = vmatpush1.msra.mxu0 0.0
  %3178 = vmatprep.subr.mxu0 0.0
  %3179 = vmatpush1.msra.mxu0 0.0
  %3180 = vmatprep.subr.mxu0 0.0
  %3181 = vmatpush1.msra.mxu0 0.0
  %3182 = vmatprep.subr.mxu0 0.0
  %3183 = vmatpush1.msra.mxu0 0.0
  %3184 = vmatprep.subr.mxu0 0.0
  %3185 = vmatpush1.msra.mxu0 0.0
  %3186 = vmatprep.subr.mxu0 0.0
  %3187 = vmatpush1.msra.mxu0 0.0
  %3188 = vmatprep.subr.mxu0 0.0
  %3189 = vmatpush1.msra.mxu0 0.0
  %3190 = vmatprep.subr.mxu0 0.0
  %3191 = vmatpush1.msra.mxu0 0.0
  %3192 = vmatprep.subr.mxu0 0.0
  %3193 = vmatpush1.msra.mxu0 0.0
  %3194 = vmatprep.subr.mxu0 0.0
  %3195 = vmatpush1.msra.mxu0 0.0
  %3196 = vmatprep.subr.mxu0 0.0
  %3197 = vmatpush1.msra.mxu0 0.0
  %3198 = vmatprep.subr.mxu0 0.0
  %3199 = vmatpush1.msra.mxu0 0.0
  %3200 = vmatprep.subr.mxu0 0.0
  %3201 = vmatpush1.msra.mxu0 0.0
  %3202 = vmatprep.subr.mxu0 0.0
  %3203 = vmatpush1.msra.mxu0 0.0
  %3204 = vmatprep.subr.mxu0 0.0
  %3205 = vmatpush1.msra.mxu0 0.0
  %3206 = vmatprep.subr.mxu0 0.0
  %3207 = vmatpush1.msra.mxu0 0.0
  %3208 = vmatprep.mubr.f32.mxu0 0.0
  %3209 = vmatmul.mubr.f32.gmra.mrb[0].mxu0 %v3133
  %v3210 = vpop.f32.mrb[0].mxu0
  %v3211 = vadd.f32 0.0, %v3210
  %v3212 = vpop.f32.mrb[0].mxu0
  %3213 = vmatprep.mubr.f32.mxu0 0.0
  %3214 = vmatmul.mubr.f32.gmra.mrb[0].mxu0 %v3136
  %v3215 = vpop.f32.mrb[0].mxu0
  %v3216 = vadd.f32 0.0, %v3215
  %v3217 = vpop.f32.mrb[0].mxu0
  %3218 = vmatprep.mubr.f32.mxu0 0.0
  %3219 = vmatmul.mubr.f32.gmra.mrb[0].mxu0 %v3139
  %v3220 = vpop.f32.mrb[0].mxu0
  %v3221 = vadd.f32 0.0, %v3220
  %v3222 = vpop.f32.mrb[0].mxu0
  %3223 = vmatprep.mubr.f32.mxu0 0.0
  %3224 = vmatmul.mubr.f32.gmra.mrb[0].mxu0 %v3142
  %v3225 = vpop.f32.mrb[0].mxu0
  %v3226 = vadd.f32 0.0, %v3225
  %v3227 = vpop.f32.mrb[0].mxu0
  %3228 = vdwg.mxu0
  %v3229 = vadd.f32 %v3033, %v3211
  %v3230 = vadd.f32 %v3034, %v3216
  %v3231 = vadd.f32 %v3035, %v3221
  %v3232 = vadd.f32 %v3036, %v3226
  %s3233 = scalar_lea.vmem %s4, 480
  %v3234 = vld [vmem:[%s3233] sm:$0xff]
  %v3235 = vld [vmem:[%s3233 + $0x8] sm:$0xff]
  %v3236 = vld [vmem:[%s3233 + $0x10] sm:$0xff]
  %v3237 = vld [vmem:[%s3233 + $0x18] sm:$0xff]
  %3238 = vmatprep.subr.mxu0 0.0
  %3239 = vmatpush1.msra.mxu0 %v286
  %3240 = vmatprep.subr.mxu0 0.0
  %3241 = vmatpush1.msra.mxu0 %v287
  %3242 = vmatprep.subr.mxu0 0.0
  %3243 = vmatpush1.msra.mxu0 %v288
  %3244 = vmatprep.subr.mxu0 0.0
  %3245 = vmatpush1.msra.mxu0 %v289
  %3246 = vmatprep.subr.mxu0 0.0
  %3247 = vmatpush1.msra.mxu0 %v290
  %3248 = vmatprep.subr.mxu0 0.0
  %3249 = vmatpush1.msra.mxu0 %v291
  %3250 = vmatprep.subr.mxu0 0.0
  %3251 = vmatpush1.msra.mxu0 %v292
  %3252 = vmatprep.subr.mxu0 0.0
  %3253 = vmatpush1.msra.mxu0 %v293
  %3254 = vmatprep.subr.mxu0 0.0
  %3255 = vmatpush1.msra.mxu0 %v294
  %3256 = vmatprep.subr.mxu0 0.0
  %3257 = vmatpush1.msra.mxu0 %v295
  %3258 = vmatprep.subr.mxu0 0.0
  %3259 = vmatpush1.msra.mxu0 %v296
  %3260 = vmatprep.subr.mxu0 0.0
  %3261 = vmatpush1.msra.mxu0 %v297
  %3262 = vmatprep.subr.mxu0 0.0
  %3263 = vmatpush1.msra.mxu0 %v298
  %3264 = vmatprep.subr.mxu0 0.0
  %3265 = vmatpush1.msra.mxu0 %v299
  %3266 = vmatprep.subr.mxu0 0.0
  %3267 = vmatpush1.msra.mxu0 %v300
  %3268 = vmatprep.subr.mxu0 0.0
  %3269 = vmatpush1.msra.mxu0 %v301
  %3270 = vmatprep.subr.mxu0 0.0
  %3271 = vmatpush1.msra.mxu0 0.0
  %3272 = vmatprep.subr.mxu0 0.0
  %3273 = vmatpush1.msra.mxu0 0.0
  %3274 = vmatprep.subr.mxu0 0.0
  %3275 = vmatpush1.msra.mxu0 0.0
  %3276 = vmatprep.subr.mxu0 0.0
  %3277 = vmatpush1.msra.mxu0 0.0
  %3278 = vmatprep.subr.mxu0 0.0
  %3279 = vmatpush1.msra.mxu0 0.0
  %3280 = vmatprep.subr.mxu0 0.0
  %3281 = vmatpush1.msra.mxu0 0.0
  %3282 = vmatprep.subr.mxu0 0.0
  %3283 = vmatpush1.msra.mxu0 0.0
  %3284 = vmatprep.subr.mxu0 0.0
  %3285 = vmatpush1.msra.mxu0 0.0
  %3286 = vmatprep.subr.mxu0 0.0
  %3287 = vmatpush1.msra.mxu0 0.0
  %3288 = vmatprep.subr.mxu0 0.0
  %3289 = vmatpush1.msra.mxu0 0.0
  %3290 = vmatprep.subr.mxu0 0.0
  %3291 = vmatpush1.msra.mxu0 0.0
  %3292 = vmatprep.subr.mxu0 0.0
  %3293 = vmatpush1.msra.mxu0 0.0
  %3294 = vmatprep.subr.mxu0 0.0
  %3295 = vmatpush1.msra.mxu0 0.0
  %3296 = vmatprep.subr.mxu0 0.0
  %3297 = vmatpush1.msra.mxu0 0.0
  %3298 = vmatprep.subr.mxu0 0.0
  %3299 = vmatpush1.msra.mxu0 0.0
  %3300 = vmatprep.subr.mxu0 0.0
  %3301 = vmatpush1.msra.mxu0 0.0
  %3302 = vmatprep.mubr.f32.mxu0 0.0
  %3303 = vmatmul.mubr.f32.gmra.mrb[0].mxu0 %v3234
  %v3304 = vpop.f32.mrb[0].mxu0
  %v3305 = vadd.f32 0.0, %v3304
  %v3306 = vpop.f32.mrb[0].mxu0
  %3307 = vmatprep.mubr.f32.mxu0 0.0
  %3308 = vmatmul.mubr.f32.gmra.mrb[0].mxu0 %v3235
  %v3309 = vpop.f32.mrb[0].mxu0
  %v3310 = vadd.f32 0.0, %v3309
  %v3311 = vpop.f32.mrb[0].mxu0
  %3312 = vmatprep.mubr.f32.mxu0 0.0
  %3313 = vmatmul.mubr.f32.gmra.mrb[0].mxu0 %v3236
  %v3314 = vpop.f32.mrb[0].mxu0
  %v3315 = vadd.f32 0.0, %v3314
  %v3316 = vpop.f32.mrb[0].mxu0
  %3317 = vmatprep.mubr.f32.mxu0 0.0
  %3318 = vmatmul.mubr.f32.gmra.mrb[0].mxu0 %v3237
  %v3319 = vpop.f32.mrb[0].mxu0
  %v3320 = vadd.f32 0.0, %v3319
  %v3321 = vpop.f32.mrb[0].mxu0
  %3322 = vdwg.mxu0
  %s3323 = scalar_lea.vmem %s5, 480
  %v3324 = vld [vmem:[%s3323] sm:$0xff]
  %v3325 = vld [vmem:[%s3323 + $0x8] sm:$0xff]
  %v3326 = vld [vmem:[%s3323 + $0x10] sm:$0xff]
  %v3327 = vld [vmem:[%s3323 + $0x18] sm:$0xff]
  %v3329 = vsel %vm490, %v3305, 0
  %v3332 = vsel %vm490, %v3310, 0
  %v3335 = vsel %vm490, %v3315, 0
  %v3338 = vsel %vm490, %v3320, 0
  %3340 = vmatprep.subr.mxu0 0.0
  %3341 = vmatpush1.msra.mxu0 %v3324
  %3342 = vmatprep.subr.mxu0 0.0
  %3343 = vmatpush1.msra.mxu0 %v3325
  %3344 = vmatprep.subr.mxu0 0.0
  %3345 = vmatpush1.msra.mxu0 %v3326
  %3346 = vmatprep.subr.mxu0 0.0
  %3347 = vmatpush1.msra.mxu0 %v3327
  %3348 = vmatprep.subr.mxu0 0.0
  %3349 = vmatpush1.msra.mxu0 0.0
  %3350 = vmatprep.subr.mxu0 0.0
  %3351 = vmatpush1.msra.mxu0 0.0
  %3352 = vmatprep.subr.mxu0 0.0
  %3353 = vmatpush1.msra.mxu0 0.0
  %3354 = vmatprep.subr.mxu0 0.0
  %3355 = vmatpush1.msra.mxu0 0.0
  %3356 = vmatprep.subr.mxu0 0.0
  %3357 = vmatpush1.msra.mxu0 0.0
  %3358 = vmatprep.subr.mxu0 0.0
  %3359 = vmatpush1.msra.mxu0 0.0
  %3360 = vmatprep.subr.mxu0 0.0
  %3361 = vmatpush1.msra.mxu0 0.0
  %3362 = vmatprep.subr.mxu0 0.0
  %3363 = vmatpush1.msra.mxu0 0.0
  %3364 = vmatprep.subr.mxu0 0.0
  %3365 = vmatpush1.msra.mxu0 0.0
  %3366 = vmatprep.subr.mxu0 0.0
  %3367 = vmatpush1.msra.mxu0 0.0
  %3368 = vmatprep.subr.mxu0 0.0
  %3369 = vmatpush1.msra.mxu0 0.0
  %3370 = vmatprep.subr.mxu0 0.0
  %3371 = vmatpush1.msra.mxu0 0.0
  %3372 = vmatprep.subr.mxu0 0.0
  %3373 = vmatpush1.msra.mxu0 0.0
  %3374 = vmatprep.subr.mxu0 0.0
  %3375 = vmatpush1.msra.mxu0 0.0
  %3376 = vmatprep.subr.mxu0 0.0
  %3377 = vmatpush1.msra.mxu0 0.0
  %3378 = vmatprep.subr.mxu0 0.0
  %3379 = vmatpush1.msra.mxu0 0.0
  %3380 = vmatprep.subr.mxu0 0.0
  %3381 = vmatpush1.msra.mxu0 0.0
  %3382 = vmatprep.subr.mxu0 0.0
  %3383 = vmatpush1.msra.mxu0 0.0
  %3384 = vmatprep.subr.mxu0 0.0
  %3385 = vmatpush1.msra.mxu0 0.0
  %3386 = vmatprep.subr.mxu0 0.0
  %3387 = vmatpush1.msra.mxu0 0.0
  %3388 = vmatprep.subr.mxu0 0.0
  %3389 = vmatpush1.msra.mxu0 0.0
  %3390 = vmatprep.subr.mxu0 0.0
  %3391 = vmatpush1.msra.mxu0 0.0
  %3392 = vmatprep.subr.mxu0 0.0
  %3393 = vmatpush1.msra.mxu0 0.0
  %3394 = vmatprep.subr.mxu0 0.0
  %3395 = vmatpush1.msra.mxu0 0.0
  %3396 = vmatprep.subr.mxu0 0.0
  %3397 = vmatpush1.msra.mxu0 0.0
  %3398 = vmatprep.subr.mxu0 0.0
  %3399 = vmatpush1.msra.mxu0 0.0
  %3400 = vmatprep.subr.mxu0 0.0
  %3401 = vmatpush1.msra.mxu0 0.0
  %3402 = vmatprep.subr.mxu0 0.0
  %3403 = vmatpush1.msra.mxu0 0.0
  %3404 = vmatprep.mubr.f32.mxu0 0.0
  %3405 = vmatmul.mubr.f32.gmra.mrb[0].mxu0 %v3329
  %v3406 = vpop.f32.mrb[0].mxu0
  %v3407 = vadd.f32 0.0, %v3406
  %v3408 = vpop.f32.mrb[0].mxu0
  %3409 = vmatprep.mubr.f32.mxu0 0.0
  %3410 = vmatmul.mubr.f32.gmra.mrb[0].mxu0 %v3332
  %v3411 = vpop.f32.mrb[0].mxu0
  %v3412 = vadd.f32 0.0, %v3411
  %v3413 = vpop.f32.mrb[0].mxu0
  %3414 = vmatprep.mubr.f32.mxu0 0.0
  %3415 = vmatmul.mubr.f32.gmra.mrb[0].mxu0 %v3335
  %v3416 = vpop.f32.mrb[0].mxu0
  %v3417 = vadd.f32 0.0, %v3416
  %v3418 = vpop.f32.mrb[0].mxu0
  %3419 = vmatprep.mubr.f32.mxu0 0.0
  %3420 = vmatmul.mubr.f32.gmra.mrb[0].mxu0 %v3338
  %v3421 = vpop.f32.mrb[0].mxu0
  %v3422 = vadd.f32 0.0, %v3421
  %v3423 = vpop.f32.mrb[0].mxu0
  %3424 = vdwg.mxu0
  %v3425 = vadd.f32 %v3229, %v3407
  %v3426 = vadd.f32 %v3230, %v3412
  %v3427 = vadd.f32 %v3231, %v3417
  %v3428 = vadd.f32 %v3232, %v3422
  %v3429 = vld [vmem:[%s6] sm:$0x1]
  %v3431 = vlaneseq
  %v3432 = vshrl.u32 %v3431, 7
  %v3433 = vsub.s32 0, %v3432
  %v3434 = vrot.slane %v3429, %v3433
  %v3436 = vadd.f32 %v3425, %v3434
  %v3437 = vadd.f32 %v3426, %v3434
  %v3438 = vadd.f32 %v3427, %v3434
  %v3439 = vadd.f32 %v3428, %v3434
  %v3440 = vmax.f32 %v3436, 0.0
  %v3441 = vmax.f32 %v3437, 0.0
  %v3442 = vmax.f32 %v3438, 0.0
  %v3443 = vmax.f32 %v3439, 0.0
  %v3444 = vld [vmem:[%s7] sm:$0xff]
  %v3445 = vld [vmem:[%s7 + $0x8] sm:$0xff]
  %v3446 = vld [vmem:[%s7 + $0x10] sm:$0xff]
  %v3447 = vld [vmem:[%s7 + $0x18] sm:$0xff]
  %s3448 = scalar_lea.vmem %s7, 32
  %v3449 = vld [vmem:[%s3448] sm:$0xff]
  %v3450 = vld [vmem:[%s3448 + $0x8] sm:$0xff]
  %v3451 = vld [vmem:[%s3448 + $0x10] sm:$0xff]
  %v3452 = vld [vmem:[%s3448 + $0x18] sm:$0xff]
  %v3454 = vrot.slane %v3440, 2
  %v3455 = vsel %vm490, %v3454, 0
  %3457 = vmatprep.subr.mxu0 0.0
  %3458 = vmatpush1.msra.mxu0 %v3449
  %3459 = vmatprep.subr.mxu0 0.0
  %3460 = vmatpush1.msra.mxu0 %v3450
  %3461 = vmatprep.subr.mxu0 0.0
  %3462 = vmatpush1.msra.mxu0 %v3451
  %3463 = vmatprep.subr.mxu0 0.0
  %3464 = vmatpush1.msra.mxu0 %v3452
  %3465 = vmatprep.subr.mxu0 0.0
  %3466 = vmatpush1.msra.mxu0 0.0
  %3467 = vmatprep.subr.mxu0 0.0
  %3468 = vmatpush1.msra.mxu0 0.0
  %3469 = vmatprep.subr.mxu0 0.0
  %3470 = vmatpush1.msra.mxu0 0.0
  %3471 = vmatprep.subr.mxu0 0.0
  %3472 = vmatpush1.msra.mxu0 0.0
  %3473 = vmatprep.subr.mxu0 0.0
  %3474 = vmatpush1.msra.mxu0 0.0
  %3475 = vmatprep.subr.mxu0 0.0
  %3476 = vmatpush1.msra.mxu0 0.0
  %3477 = vmatprep.subr.mxu0 0.0
  %3478 = vmatpush1.msra.mxu0 0.0
  %3479 = vmatprep.subr.mxu0 0.0
  %3480 = vmatpush1.msra.mxu0 0.0
  %3481 = vmatprep.subr.mxu0 0.0
  %3482 = vmatpush1.msra.mxu0 0.0
  %3483 = vmatprep.subr.mxu0 0.0
  %3484 = vmatpush1.msra.mxu0 0.0
  %3485 = vmatprep.subr.mxu0 0.0
  %3486 = vmatpush1.msra.mxu0 0.0
  %3487 = vmatprep.subr.mxu0 0.0
  %3488 = vmatpush1.msra.mxu0 0.0
  %3489 = vmatprep.subr.mxu0 0.0
  %3490 = vmatpush1.msra.mxu0 0.0
  %3491 = vmatprep.subr.mxu0 0.0
  %3492 = vmatpush1.msra.mxu0 0.0
  %3493 = vmatprep.subr.mxu0 0.0
  %3494 = vmatpush1.msra.mxu0 0.0
  %3495 = vmatprep.subr.mxu0 0.0
  %3496 = vmatpush1.msra.mxu0 0.0
  %3497 = vmatprep.subr.mxu0 0.0
  %3498 = vmatpush1.msra.mxu0 0.0
  %3499 = vmatprep.subr.mxu0 0.0
  %3500 = vmatpush1.msra.mxu0 0.0
  %3501 = vmatprep.subr.mxu0 0.0
  %3502 = vmatpush1.msra.mxu0 0.0
  %3503 = vmatprep.subr.mxu0 0.0
  %3504 = vmatpush1.msra.mxu0 0.0
  %3505 = vmatprep.subr.mxu0 0.0
  %3506 = vmatpush1.msra.mxu0 0.0
  %3507 = vmatprep.subr.mxu0 0.0
  %3508 = vmatpush1.msra.mxu0 0.0
  %3509 = vmatprep.subr.mxu0 0.0
  %3510 = vmatpush1.msra.mxu0 0.0
  %3511 = vmatprep.subr.mxu0 0.0
  %3512 = vmatpush1.msra.mxu0 0.0
  %3513 = vmatprep.subr.mxu0 0.0
  %3514 = vmatpush1.msra.mxu0 0.0
  %3515 = vmatprep.subr.mxu0 0.0
  %3516 = vmatpush1.msra.mxu0 0.0
  %3517 = vmatprep.subr.mxu0 0.0
  %3518 = vmatpush1.msra.mxu0 0.0
  %3519 = vmatprep.subr.mxu0 0.0
  %3520 = vmatpush1.msra.mxu0 0.0
  %3521 = vmatprep.mubr.f32.mxu0 0.0
  %3522 = vmatmul.mubr.f32.gmra.mrb[0].mxu0 %v3455
  %v3523 = vpop.f32.mrb[0].mxu0
  %v3524 = vadd.f32 0.0, %v3523
  %v3525 = vpop.f32.mrb[0].mxu0
  %3526 = vdwg.mxu0
  %v3527 = vsel %vm490, %v3440, 0
  %3529 = vmatprep.subr.mxu0 0.0
  %3530 = vmatpush1.msra.mxu0 %v3444
  %3531 = vmatprep.subr.mxu0 0.0
  %3532 = vmatpush1.msra.mxu0 %v3445
  %3533 = vmatprep.subr.mxu0 0.0
  %3534 = vmatpush1.msra.mxu0 %v3446
  %3535 = vmatprep.subr.mxu0 0.0
  %3536 = vmatpush1.msra.mxu0 %v3447
  %3537 = vmatprep.subr.mxu0 0.0
  %3538 = vmatpush1.msra.mxu0 0.0
  %3539 = vmatprep.subr.mxu0 0.0
  %3540 = vmatpush1.msra.mxu0 0.0
  %3541 = vmatprep.subr.mxu0 0.0
  %3542 = vmatpush1.msra.mxu0 0.0
  %3543 = vmatprep.subr.mxu0 0.0
  %3544 = vmatpush1.msra.mxu0 0.0
  %3545 = vmatprep.subr.mxu0 0.0
  %3546 = vmatpush1.msra.mxu0 0.0
  %3547 = vmatprep.subr.mxu0 0.0
  %3548 = vmatpush1.msra.mxu0 0.0
  %3549 = vmatprep.subr.mxu0 0.0
  %3550 = vmatpush1.msra.mxu0 0.0
  %3551 = vmatprep.subr.mxu0 0.0
  %3552 = vmatpush1.msra.mxu0 0.0
  %3553 = vmatprep.subr.mxu0 0.0
  %3554 = vmatpush1.msra.mxu0 0.0
  %3555 = vmatprep.subr.mxu0 0.0
  %3556 = vmatpush1.msra.mxu0 0.0
  %3557 = vmatprep.subr.mxu0 0.0
  %3558 = vmatpush1.msra.mxu0 0.0
  %3559 = vmatprep.subr.mxu0 0.0
  %3560 = vmatpush1.msra.mxu0 0.0
  %3561 = vmatprep.subr.mxu0 0.0
  %3562 = vmatpush1.msra.mxu0 0.0
  %3563 = vmatprep.subr.mxu0 0.0
  %3564 = vmatpush1.msra.mxu0 0.0
  %3565 = vmatprep.subr.mxu0 0.0
  %3566 = vmatpush1.msra.mxu0 0.0
  %3567 = vmatprep.subr.mxu0 0.0
  %3568 = vmatpush1.msra.mxu0 0.0
  %3569 = vmatprep.subr.mxu0 0.0
  %3570 = vmatpush1.msra.mxu0 0.0
  %3571 = vmatprep.subr.mxu0 0.0
  %3572 = vmatpush1.msra.mxu0 0.0
  %3573 = vmatprep.subr.mxu0 0.0
  %3574 = vmatpush1.msra.mxu0 0.0
  %3575 = vmatprep.subr.mxu0 0.0
  %3576 = vmatpush1.msra.mxu0 0.0
  %3577 = vmatprep.subr.mxu0 0.0
  %3578 = vmatpush1.msra.mxu0 0.0
  %3579 = vmatprep.subr.mxu0 0.0
  %3580 = vmatpush1.msra.mxu0 0.0
  %3581 = vmatprep.subr.mxu0 0.0
  %3582 = vmatpush1.msra.mxu0 0.0
  %3583 = vmatprep.subr.mxu0 0.0
  %3584 = vmatpush1.msra.mxu0 0.0
  %3585 = vmatprep.subr.mxu0 0.0
  %3586 = vmatpush1.msra.mxu0 0.0
  %3587 = vmatprep.subr.mxu0 0.0
  %3588 = vmatpush1.msra.mxu0 0.0
  %3589 = vmatprep.subr.mxu0 0.0
  %3590 = vmatpush1.msra.mxu0 0.0
  %3591 = vmatprep.subr.mxu0 0.0
  %3592 = vmatpush1.msra.mxu0 0.0
  %3593 = vmatprep.mubr.f32.mxu0 0.0
  %3594 = vmatmul.mubr.f32.gmra.mrb[0].mxu0 %v3527
  %v3595 = vpop.f32.mrb[0].mxu0
  %v3596 = vadd.f32 %v3524, %v3595
  %v3597 = vpop.f32.mrb[0].mxu0
  %3598 = vdwg.mxu0
  %s3599 = scalar_lea.vmem %s7, 64
  %v3600 = vld [vmem:[%s3599] sm:$0xff]
  %v3601 = vld [vmem:[%s3599 + $0x8] sm:$0xff]
  %v3602 = vld [vmem:[%s3599 + $0x10] sm:$0xff]
  %v3603 = vld [vmem:[%s3599 + $0x18] sm:$0xff]
  %v3604 = vrot.slane %v3440, 4
  %v3605 = vsel %vm490, %v3604, 0
  %3607 = vmatprep.subr.mxu0 0.0
  %3608 = vmatpush1.msra.mxu0 %v3600
  %3609 = vmatprep.subr.mxu0 0.0
  %3610 = vmatpush1.msra.mxu0 %v3601
  %3611 = vmatprep.subr.mxu0 0.0
  %3612 = vmatpush1.msra.mxu0 %v3602
  %3613 = vmatprep.subr.mxu0 0.0
  %3614 = vmatpush1.msra.mxu0 %v3603
  %3615 = vmatprep.subr.mxu0 0.0
  %3616 = vmatpush1.msra.mxu0 0.0
  %3617 = vmatprep.subr.mxu0 0.0
  %3618 = vmatpush1.msra.mxu0 0.0
  %3619 = vmatprep.subr.mxu0 0.0
  %3620 = vmatpush1.msra.mxu0 0.0
  %3621 = vmatprep.subr.mxu0 0.0
  %3622 = vmatpush1.msra.mxu0 0.0
  %3623 = vmatprep.subr.mxu0 0.0
  %3624 = vmatpush1.msra.mxu0 0.0
  %3625 = vmatprep.subr.mxu0 0.0
  %3626 = vmatpush1.msra.mxu0 0.0
  %3627 = vmatprep.subr.mxu0 0.0
  %3628 = vmatpush1.msra.mxu0 0.0
  %3629 = vmatprep.subr.mxu0 0.0
  %3630 = vmatpush1.msra.mxu0 0.0
  %3631 = vmatprep.subr.mxu0 0.0
  %3632 = vmatpush1.msra.mxu0 0.0
  %3633 = vmatprep.subr.mxu0 0.0
  %3634 = vmatpush1.msra.mxu0 0.0
  %3635 = vmatprep.subr.mxu0 0.0
  %3636 = vmatpush1.msra.mxu0 0.0
  %3637 = vmatprep.subr.mxu0 0.0
  %3638 = vmatpush1.msra.mxu0 0.0
  %3639 = vmatprep.subr.mxu0 0.0
  %3640 = vmatpush1.msra.mxu0 0.0
  %3641 = vmatprep.subr.mxu0 0.0
  %3642 = vmatpush1.msra.mxu0 0.0
  %3643 = vmatprep.subr.mxu0 0.0
  %3644 = vmatpush1.msra.mxu0 0.0
  %3645 = vmatprep.subr.mxu0 0.0
  %3646 = vmatpush1.msra.mxu0 0.0
  %3647 = vmatprep.subr.mxu0 0.0
  %3648 = vmatpush1.msra.mxu0 0.0
  %3649 = vmatprep.subr.mxu0 0.0
  %3650 = vmatpush1.msra.mxu0 0.0
  %3651 = vmatprep.subr.mxu0 0.0
  %3652 = vmatpush1.msra.mxu0 0.0
  %3653 = vmatprep.subr.mxu0 0.0
  %3654 = vmatpush1.msra.mxu0 0.0
  %3655 = vmatprep.subr.mxu0 0.0
  %3656 = vmatpush1.msra.mxu0 0.0
  %3657 = vmatprep.subr.mxu0 0.0
  %3658 = vmatpush1.msra.mxu0 0.0
  %3659 = vmatprep.subr.mxu0 0.0
  %3660 = vmatpush1.msra.mxu0 0.0
  %3661 = vmatprep.subr.mxu0 0.0
  %3662 = vmatpush1.msra.mxu0 0.0
  %3663 = vmatprep.subr.mxu0 0.0
  %3664 = vmatpush1.msra.mxu0 0.0
  %3665 = vmatprep.subr.mxu0 0.0
  %3666 = vmatpush1.msra.mxu0 0.0
  %3667 = vmatprep.subr.mxu0 0.0
  %3668 = vmatpush1.msra.mxu0 0.0
  %3669 = vmatprep.subr.mxu0 0.0
  %3670 = vmatpush1.msra.mxu0 0.0
  %3671 = vmatprep.mubr.f32.mxu0 0.0
  %3672 = vmatmul.mubr.f32.gmra.mrb[0].mxu0 %v3605
  %v3673 = vpop.f32.mrb[0].mxu0
  %v3674 = vadd.f32 0.0, %v3673
  %v3675 = vpop.f32.mrb[0].mxu0
  %3676 = vdwg.mxu0
  %v3677 = vadd.f32 %v3596, %v3674
  %s3678 = scalar_lea.vmem %s7, 96
  %v3679 = vld [vmem:[%s3678] sm:$0xff]
  %v3680 = vld [vmem:[%s3678 + $0x8] sm:$0xff]
  %v3681 = vld [vmem:[%s3678 + $0x10] sm:$0xff]
  %v3682 = vld [vmem:[%s3678 + $0x18] sm:$0xff]
  %v3683 = vrot.slane %v3440, 6
  %v3684 = vsel %vm490, %v3683, 0
  %3686 = vmatprep.subr.mxu0 0.0
  %3687 = vmatpush1.msra.mxu0 %v3679
  %3688 = vmatprep.subr.mxu0 0.0
  %3689 = vmatpush1.msra.mxu0 %v3680
  %3690 = vmatprep.subr.mxu0 0.0
  %3691 = vmatpush1.msra.mxu0 %v3681
  %3692 = vmatprep.subr.mxu0 0.0
  %3693 = vmatpush1.msra.mxu0 %v3682
  %3694 = vmatprep.subr.mxu0 0.0
  %3695 = vmatpush1.msra.mxu0 0.0
  %3696 = vmatprep.subr.mxu0 0.0
  %3697 = vmatpush1.msra.mxu0 0.0
  %3698 = vmatprep.subr.mxu0 0.0
  %3699 = vmatpush1.msra.mxu0 0.0
  %3700 = vmatprep.subr.mxu0 0.0
  %3701 = vmatpush1.msra.mxu0 0.0
  %3702 = vmatprep.subr.mxu0 0.0
  %3703 = vmatpush1.msra.mxu0 0.0
  %3704 = vmatprep.subr.mxu0 0.0
  %3705 = vmatpush1.msra.mxu0 0.0
  %3706 = vmatprep.subr.mxu0 0.0
  %3707 = vmatpush1.msra.mxu0 0.0
  %3708 = vmatprep.subr.mxu0 0.0
  %3709 = vmatpush1.msra.mxu0 0.0
  %3710 = vmatprep.subr.mxu0 0.0
  %3711 = vmatpush1.msra.mxu0 0.0
  %3712 = vmatprep.subr.mxu0 0.0
  %3713 = vmatpush1.msra.mxu0 0.0
  %3714 = vmatprep.subr.mxu0 0.0
  %3715 = vmatpush1.msra.mxu0 0.0
  %3716 = vmatprep.subr.mxu0 0.0
  %3717 = vmatpush1.msra.mxu0 0.0
  %3718 = vmatprep.subr.mxu0 0.0
  %3719 = vmatpush1.msra.mxu0 0.0
  %3720 = vmatprep.subr.mxu0 0.0
  %3721 = vmatpush1.msra.mxu0 0.0
  %3722 = vmatprep.subr.mxu0 0.0
  %3723 = vmatpush1.msra.mxu0 0.0
  %3724 = vmatprep.subr.mxu0 0.0
  %3725 = vmatpush1.msra.mxu0 0.0
  %3726 = vmatprep.subr.mxu0 0.0
  %3727 = vmatpush1.msra.mxu0 0.0
  %3728 = vmatprep.subr.mxu0 0.0
  %3729 = vmatpush1.msra.mxu0 0.0
  %3730 = vmatprep.subr.mxu0 0.0
  %3731 = vmatpush1.msra.mxu0 0.0
  %3732 = vmatprep.subr.mxu0 0.0
  %3733 = vmatpush1.msra.mxu0 0.0
  %3734 = vmatprep.subr.mxu0 0.0
  %3735 = vmatpush1.msra.mxu0 0.0
  %3736 = vmatprep.subr.mxu0 0.0
  %3737 = vmatpush1.msra.mxu0 0.0
  %3738 = vmatprep.subr.mxu0 0.0
  %3739 = vmatpush1.msra.mxu0 0.0
  %3740 = vmatprep.subr.mxu0 0.0
  %3741 = vmatpush1.msra.mxu0 0.0
  %3742 = vmatprep.subr.mxu0 0.0
  %3743 = vmatpush1.msra.mxu0 0.0
  %3744 = vmatprep.subr.mxu0 0.0
  %3745 = vmatpush1.msra.mxu0 0.0
  %3746 = vmatprep.subr.mxu0 0.0
  %3747 = vmatpush1.msra.mxu0 0.0
  %3748 = vmatprep.subr.mxu0 0.0
  %3749 = vmatpush1.msra.mxu0 0.0
  %3750 = vmatprep.mubr.f32.mxu0 0.0
  %3751 = vmatmul.mubr.f32.gmra.mrb[0].mxu0 %v3684
  %v3752 = vpop.f32.mrb[0].mxu0
  %v3753 = vadd.f32 0.0, %v3752
  %v3754 = vpop.f32.mrb[0].mxu0
  %3755 = vdwg.mxu0
  %v3756 = vadd.f32 %v3677, %v3753
  %s3757 = scalar_lea.vmem %s7, 128
  %v3758 = vld [vmem:[%s3757] sm:$0xff]
  %v3759 = vld [vmem:[%s3757 + $0x8] sm:$0xff]
  %v3760 = vld [vmem:[%s3757 + $0x10] sm:$0xff]
  %v3761 = vld [vmem:[%s3757 + $0x18] sm:$0xff]
  %v3763 = vsel %vm490, %v3441, 0
  %3765 = vmatprep.subr.mxu0 0.0
  %3766 = vmatpush1.msra.mxu0 %v3758
  %3767 = vmatprep.subr.mxu0 0.0
  %3768 = vmatpush1.msra.mxu0 %v3759
  %3769 = vmatprep.subr.mxu0 0.0
  %3770 = vmatpush1.msra.mxu0 %v3760
  %3771 = vmatprep.subr.mxu0 0.0
  %3772 = vmatpush1.msra.mxu0 %v3761
  %3773 = vmatprep.subr.mxu0 0.0
  %3774 = vmatpush1.msra.mxu0 0.0
  %3775 = vmatprep.subr.mxu0 0.0
  %3776 = vmatpush1.msra.mxu0 0.0
  %3777 = vmatprep.subr.mxu0 0.0
  %3778 = vmatpush1.msra.mxu0 0.0
  %3779 = vmatprep.subr.mxu0 0.0
  %3780 = vmatpush1.msra.mxu0 0.0
  %3781 = vmatprep.subr.mxu0 0.0
  %3782 = vmatpush1.msra.mxu0 0.0
  %3783 = vmatprep.subr.mxu0 0.0
  %3784 = vmatpush1.msra.mxu0 0.0
  %3785 = vmatprep.subr.mxu0 0.0
  %3786 = vmatpush1.msra.mxu0 0.0
  %3787 = vmatprep.subr.mxu0 0.0
  %3788 = vmatpush1.msra.mxu0 0.0
  %3789 = vmatprep.subr.mxu0 0.0
  %3790 = vmatpush1.msra.mxu0 0.0
  %3791 = vmatprep.subr.mxu0 0.0
  %3792 = vmatpush1.msra.mxu0 0.0
  %3793 = vmatprep.subr.mxu0 0.0
  %3794 = vmatpush1.msra.mxu0 0.0
  %3795 = vmatprep.subr.mxu0 0.0
  %3796 = vmatpush1.msra.mxu0 0.0
  %3797 = vmatprep.subr.mxu0 0.0
  %3798 = vmatpush1.msra.mxu0 0.0
  %3799 = vmatprep.subr.mxu0 0.0
  %3800 = vmatpush1.msra.mxu0 0.0
  %3801 = vmatprep.subr.mxu0 0.0
  %3802 = vmatpush1.msra.mxu0 0.0
  %3803 = vmatprep.subr.mxu0 0.0
  %3804 = vmatpush1.msra.mxu0 0.0
  %3805 = vmatprep.subr.mxu0 0.0
  %3806 = vmatpush1.msra.mxu0 0.0
  %3807 = vmatprep.subr.mxu0 0.0
  %3808 = vmatpush1.msra.mxu0 0.0
  %3809 = vmatprep.subr.mxu0 0.0
  %3810 = vmatpush1.msra.mxu0 0.0
  %3811 = vmatprep.subr.mxu0 0.0
  %3812 = vmatpush1.msra.mxu0 0.0
  %3813 = vmatprep.subr.mxu0 0.0
  %3814 = vmatpush1.msra.mxu0 0.0
  %3815 = vmatprep.subr.mxu0 0.0
  %3816 = vmatpush1.msra.mxu0 0.0
  %3817 = vmatprep.subr.mxu0 0.0
  %3818 = vmatpush1.msra.mxu0 0.0
  %3819 = vmatprep.subr.mxu0 0.0
  %3820 = vmatpush1.msra.mxu0 0.0
  %3821 = vmatprep.subr.mxu0 0.0
  %3822 = vmatpush1.msra.mxu0 0.0
  %3823 = vmatprep.subr.mxu0 0.0
  %3824 = vmatpush1.msra.mxu0 0.0
  %3825 = vmatprep.subr.mxu0 0.0
  %3826 = vmatpush1.msra.mxu0 0.0
  %3827 = vmatprep.subr.mxu0 0.0
  %3828 = vmatpush1.msra.mxu0 0.0
  %3829 = vmatprep.mubr.f32.mxu0 0.0
  %3830 = vmatmul.mubr.f32.gmra.mrb[0].mxu0 %v3763
  %v3831 = vpop.f32.mrb[0].mxu0
  %v3832 = vadd.f32 0.0, %v3831
  %v3833 = vpop.f32.mrb[0].mxu0
  %3834 = vdwg.mxu0
  %v3835 = vadd.f32 %v3756, %v3832
  %s3836 = scalar_lea.vmem %s7, 160
  %v3837 = vld [vmem:[%s3836] sm:$0xff]
  %v3838 = vld [vmem:[%s3836 + $0x8] sm:$0xff]
  %v3839 = vld [vmem:[%s3836 + $0x10] sm:$0xff]
  %v3840 = vld [vmem:[%s3836 + $0x18] sm:$0xff]
  %v3841 = vrot.slane %v3441, 2
  %v3842 = vsel %vm490, %v3841, 0
  %3844 = vmatprep.subr.mxu0 0.0
  %3845 = vmatpush1.msra.mxu0 %v3837
  %3846 = vmatprep.subr.mxu0 0.0
  %3847 = vmatpush1.msra.mxu0 %v3838
  %3848 = vmatprep.subr.mxu0 0.0
  %3849 = vmatpush1.msra.mxu0 %v3839
  %3850 = vmatprep.subr.mxu0 0.0
  %3851 = vmatpush1.msra.mxu0 %v3840
  %3852 = vmatprep.subr.mxu0 0.0
  %3853 = vmatpush1.msra.mxu0 0.0
  %3854 = vmatprep.subr.mxu0 0.0
  %3855 = vmatpush1.msra.mxu0 0.0
  %3856 = vmatprep.subr.mxu0 0.0
  %3857 = vmatpush1.msra.mxu0 0.0
  %3858 = vmatprep.subr.mxu0 0.0
  %3859 = vmatpush1.msra.mxu0 0.0
  %3860 = vmatprep.subr.mxu0 0.0
  %3861 = vmatpush1.msra.mxu0 0.0
  %3862 = vmatprep.subr.mxu0 0.0
  %3863 = vmatpush1.msra.mxu0 0.0
  %3864 = vmatprep.subr.mxu0 0.0
  %3865 = vmatpush1.msra.mxu0 0.0
  %3866 = vmatprep.subr.mxu0 0.0
  %3867 = vmatpush1.msra.mxu0 0.0
  %3868 = vmatprep.subr.mxu0 0.0
  %3869 = vmatpush1.msra.mxu0 0.0
  %3870 = vmatprep.subr.mxu0 0.0
  %3871 = vmatpush1.msra.mxu0 0.0
  %3872 = vmatprep.subr.mxu0 0.0
  %3873 = vmatpush1.msra.mxu0 0.0
  %3874 = vmatprep.subr.mxu0 0.0
  %3875 = vmatpush1.msra.mxu0 0.0
  %3876 = vmatprep.subr.mxu0 0.0
  %3877 = vmatpush1.msra.mxu0 0.0
  %3878 = vmatprep.subr.mxu0 0.0
  %3879 = vmatpush1.msra.mxu0 0.0
  %3880 = vmatprep.subr.mxu0 0.0
  %3881 = vmatpush1.msra.mxu0 0.0
  %3882 = vmatprep.subr.mxu0 0.0
  %3883 = vmatpush1.msra.mxu0 0.0
  %3884 = vmatprep.subr.mxu0 0.0
  %3885 = vmatpush1.msra.mxu0 0.0
  %3886 = vmatprep.subr.mxu0 0.0
  %3887 = vmatpush1.msra.mxu0 0.0
  %3888 = vmatprep.subr.mxu0 0.0
  %3889 = vmatpush1.msra.mxu0 0.0
  %3890 = vmatprep.subr.mxu0 0.0
  %3891 = vmatpush1.msra.mxu0 0.0
  %3892 = vmatprep.subr.mxu0 0.0
  %3893 = vmatpush1.msra.mxu0 0.0
  %3894 = vmatprep.subr.mxu0 0.0
  %3895 = vmatpush1.msra.mxu0 0.0
  %3896 = vmatprep.subr.mxu0 0.0
  %3897 = vmatpush1.msra.mxu0 0.0
  %3898 = vmatprep.subr.mxu0 0.0
  %3899 = vmatpush1.msra.mxu0 0.0
  %3900 = vmatprep.subr.mxu0 0.0
  %3901 = vmatpush1.msra.mxu0 0.0
  %3902 = vmatprep.subr.mxu0 0.0
  %3903 = vmatpush1.msra.mxu0 0.0
  %3904 = vmatprep.subr.mxu0 0.0
  %3905 = vmatpush1.msra.mxu0 0.0
  %3906 = vmatprep.subr.mxu0 0.0
  %3907 = vmatpush1.msra.mxu0 0.0
  %3908 = vmatprep.mubr.f32.mxu0 0.0
  %3909 = vmatmul.mubr.f32.gmra.mrb[0].mxu0 %v3842
  %v3910 = vpop.f32.mrb[0].mxu0
  %v3911 = vadd.f32 0.0, %v3910
  %v3912 = vpop.f32.mrb[0].mxu0
  %3913 = vdwg.mxu0
  %v3914 = vadd.f32 %v3835, %v3911
  %s3915 = scalar_lea.vmem %s7, 192
  %v3916 = vld [vmem:[%s3915] sm:$0xff]
  %v3917 = vld [vmem:[%s3915 + $0x8] sm:$0xff]
  %v3918 = vld [vmem:[%s3915 + $0x10] sm:$0xff]
  %v3919 = vld [vmem:[%s3915 + $0x18] sm:$0xff]
  %v3920 = vrot.slane %v3441, 4
  %v3921 = vsel %vm490, %v3920, 0
  %3923 = vmatprep.subr.mxu0 0.0
  %3924 = vmatpush1.msra.mxu0 %v3916
  %3925 = vmatprep.subr.mxu0 0.0
  %3926 = vmatpush1.msra.mxu0 %v3917
  %3927 = vmatprep.subr.mxu0 0.0
  %3928 = vmatpush1.msra.mxu0 %v3918
  %3929 = vmatprep.subr.mxu0 0.0
  %3930 = vmatpush1.msra.mxu0 %v3919
  %3931 = vmatprep.subr.mxu0 0.0
  %3932 = vmatpush1.msra.mxu0 0.0
  %3933 = vmatprep.subr.mxu0 0.0
  %3934 = vmatpush1.msra.mxu0 0.0
  %3935 = vmatprep.subr.mxu0 0.0
  %3936 = vmatpush1.msra.mxu0 0.0
  %3937 = vmatprep.subr.mxu0 0.0
  %3938 = vmatpush1.msra.mxu0 0.0
  %3939 = vmatprep.subr.mxu0 0.0
  %3940 = vmatpush1.msra.mxu0 0.0
  %3941 = vmatprep.subr.mxu0 0.0
  %3942 = vmatpush1.msra.mxu0 0.0
  %3943 = vmatprep.subr.mxu0 0.0
  %3944 = vmatpush1.msra.mxu0 0.0
  %3945 = vmatprep.subr.mxu0 0.0
  %3946 = vmatpush1.msra.mxu0 0.0
  %3947 = vmatprep.subr.mxu0 0.0
  %3948 = vmatpush1.msra.mxu0 0.0
  %3949 = vmatprep.subr.mxu0 0.0
  %3950 = vmatpush1.msra.mxu0 0.0
  %3951 = vmatprep.subr.mxu0 0.0
  %3952 = vmatpush1.msra.mxu0 0.0
  %3953 = vmatprep.subr.mxu0 0.0
  %3954 = vmatpush1.msra.mxu0 0.0
  %3955 = vmatprep.subr.mxu0 0.0
  %3956 = vmatpush1.msra.mxu0 0.0
  %3957 = vmatprep.subr.mxu0 0.0
  %3958 = vmatpush1.msra.mxu0 0.0
  %3959 = vmatprep.subr.mxu0 0.0
  %3960 = vmatpush1.msra.mxu0 0.0
  %3961 = vmatprep.subr.mxu0 0.0
  %3962 = vmatpush1.msra.mxu0 0.0
  %3963 = vmatprep.subr.mxu0 0.0
  %3964 = vmatpush1.msra.mxu0 0.0
  %3965 = vmatprep.subr.mxu0 0.0
  %3966 = vmatpush1.msra.mxu0 0.0
  %3967 = vmatprep.subr.mxu0 0.0
  %3968 = vmatpush1.msra.mxu0 0.0
  %3969 = vmatprep.subr.mxu0 0.0
  %3970 = vmatpush1.msra.mxu0 0.0
  %3971 = vmatprep.subr.mxu0 0.0
  %3972 = vmatpush1.msra.mxu0 0.0
  %3973 = vmatprep.subr.mxu0 0.0
  %3974 = vmatpush1.msra.mxu0 0.0
  %3975 = vmatprep.subr.mxu0 0.0
  %3976 = vmatpush1.msra.mxu0 0.0
  %3977 = vmatprep.subr.mxu0 0.0
  %3978 = vmatpush1.msra.mxu0 0.0
  %3979 = vmatprep.subr.mxu0 0.0
  %3980 = vmatpush1.msra.mxu0 0.0
  %3981 = vmatprep.subr.mxu0 0.0
  %3982 = vmatpush1.msra.mxu0 0.0
  %3983 = vmatprep.subr.mxu0 0.0
  %3984 = vmatpush1.msra.mxu0 0.0
  %3985 = vmatprep.subr.mxu0 0.0
  %3986 = vmatpush1.msra.mxu0 0.0
  %3987 = vmatprep.mubr.f32.mxu0 0.0
  %3988 = vmatmul.mubr.f32.gmra.mrb[0].mxu0 %v3921
  %v3989 = vpop.f32.mrb[0].mxu0
  %v3990 = vadd.f32 0.0, %v3989
  %v3991 = vpop.f32.mrb[0].mxu0
  %3992 = vdwg.mxu0
  %v3993 = vadd.f32 %v3914, %v3990
  %s3994 = scalar_lea.vmem %s7, 224
  %v3995 = vld [vmem:[%s3994] sm:$0xff]
  %v3996 = vld [vmem:[%s3994 + $0x8] sm:$0xff]
  %v3997 = vld [vmem:[%s3994 + $0x10] sm:$0xff]
  %v3998 = vld [vmem:[%s3994 + $0x18] sm:$0xff]
  %v3999 = vrot.slane %v3441, 6
  %v4000 = vsel %vm490, %v3999, 0
  %4002 = vmatprep.subr.mxu0 0.0
  %4003 = vmatpush1.msra.mxu0 %v3995
  %4004 = vmatprep.subr.mxu0 0.0
  %4005 = vmatpush1.msra.mxu0 %v3996
  %4006 = vmatprep.subr.mxu0 0.0
  %4007 = vmatpush1.msra.mxu0 %v3997
  %4008 = vmatprep.subr.mxu0 0.0
  %4009 = vmatpush1.msra.mxu0 %v3998
  %4010 = vmatprep.subr.mxu0 0.0
  %4011 = vmatpush1.msra.mxu0 0.0
  %4012 = vmatprep.subr.mxu0 0.0
  %4013 = vmatpush1.msra.mxu0 0.0
  %4014 = vmatprep.subr.mxu0 0.0
  %4015 = vmatpush1.msra.mxu0 0.0
  %4016 = vmatprep.subr.mxu0 0.0
  %4017 = vmatpush1.msra.mxu0 0.0
  %4018 = vmatprep.subr.mxu0 0.0
  %4019 = vmatpush1.msra.mxu0 0.0
  %4020 = vmatprep.subr.mxu0 0.0
  %4021 = vmatpush1.msra.mxu0 0.0
  %4022 = vmatprep.subr.mxu0 0.0
  %4023 = vmatpush1.msra.mxu0 0.0
  %4024 = vmatprep.subr.mxu0 0.0
  %4025 = vmatpush1.msra.mxu0 0.0
  %4026 = vmatprep.subr.mxu0 0.0
  %4027 = vmatpush1.msra.mxu0 0.0
  %4028 = vmatprep.subr.mxu0 0.0
  %4029 = vmatpush1.msra.mxu0 0.0
  %4030 = vmatprep.subr.mxu0 0.0
  %4031 = vmatpush1.msra.mxu0 0.0
  %4032 = vmatprep.subr.mxu0 0.0
  %4033 = vmatpush1.msra.mxu0 0.0
  %4034 = vmatprep.subr.mxu0 0.0
  %4035 = vmatpush1.msra.mxu0 0.0
  %4036 = vmatprep.subr.mxu0 0.0
  %4037 = vmatpush1.msra.mxu0 0.0
  %4038 = vmatprep.subr.mxu0 0.0
  %4039 = vmatpush1.msra.mxu0 0.0
  %4040 = vmatprep.subr.mxu0 0.0
  %4041 = vmatpush1.msra.mxu0 0.0
  %4042 = vmatprep.subr.mxu0 0.0
  %4043 = vmatpush1.msra.mxu0 0.0
  %4044 = vmatprep.subr.mxu0 0.0
  %4045 = vmatpush1.msra.mxu0 0.0
  %4046 = vmatprep.subr.mxu0 0.0
  %4047 = vmatpush1.msra.mxu0 0.0
  %4048 = vmatprep.subr.mxu0 0.0
  %4049 = vmatpush1.msra.mxu0 0.0
  %4050 = vmatprep.subr.mxu0 0.0
  %4051 = vmatpush1.msra.mxu0 0.0
  %4052 = vmatprep.subr.mxu0 0.0
  %4053 = vmatpush1.msra.mxu0 0.0
  %4054 = vmatprep.subr.mxu0 0.0
  %4055 = vmatpush1.msra.mxu0 0.0
  %4056 = vmatprep.subr.mxu0 0.0
  %4057 = vmatpush1.msra.mxu0 0.0
  %4058 = vmatprep.subr.mxu0 0.0
  %4059 = vmatpush1.msra.mxu0 0.0
  %4060 = vmatprep.subr.mxu0 0.0
  %4061 = vmatpush1.msra.mxu0 0.0
  %4062 = vmatprep.subr.mxu0 0.0
  %4063 = vmatpush1.msra.mxu0 0.0
  %4064 = vmatprep.subr.mxu0 0.0
  %4065 = vmatpush1.msra.mxu0 0.0
  %4066 = vmatprep.mubr.f32.mxu0 0.0
  %4067 = vmatmul.mubr.f32.gmra.mrb[0].mxu0 %v4000
  %v4068 = vpop.f32.mrb[0].mxu0
  %v4069 = vadd.f32 0.0, %v4068
  %v4070 = vpop.f32.mrb[0].mxu0
  %4071 = vdwg.mxu0
  %v4072 = vadd.f32 %v3993, %v4069
  %s4073 = scalar_lea.vmem %s7, 256
  %v4074 = vld [vmem:[%s4073] sm:$0xff]
  %v4075 = vld [vmem:[%s4073 + $0x8] sm:$0xff]
  %v4076 = vld [vmem:[%s4073 + $0x10] sm:$0xff]
  %v4077 = vld [vmem:[%s4073 + $0x18] sm:$0xff]
  %v4079 = vsel %vm490, %v3442, 0
  %4081 = vmatprep.subr.mxu0 0.0
  %4082 = vmatpush1.msra.mxu0 %v4074
  %4083 = vmatprep.subr.mxu0 0.0
  %4084 = vmatpush1.msra.mxu0 %v4075
  %4085 = vmatprep.subr.mxu0 0.0
  %4086 = vmatpush1.msra.mxu0 %v4076
  %4087 = vmatprep.subr.mxu0 0.0
  %4088 = vmatpush1.msra.mxu0 %v4077
  %4089 = vmatprep.subr.mxu0 0.0
  %4090 = vmatpush1.msra.mxu0 0.0
  %4091 = vmatprep.subr.mxu0 0.0
  %4092 = vmatpush1.msra.mxu0 0.0
  %4093 = vmatprep.subr.mxu0 0.0
  %4094 = vmatpush1.msra.mxu0 0.0
  %4095 = vmatprep.subr.mxu0 0.0
  %4096 = vmatpush1.msra.mxu0 0.0
  %4097 = vmatprep.subr.mxu0 0.0
  %4098 = vmatpush1.msra.mxu0 0.0
  %4099 = vmatprep.subr.mxu0 0.0
  %4100 = vmatpush1.msra.mxu0 0.0
  %4101 = vmatprep.subr.mxu0 0.0
  %4102 = vmatpush1.msra.mxu0 0.0
  %4103 = vmatprep.subr.mxu0 0.0
  %4104 = vmatpush1.msra.mxu0 0.0
  %4105 = vmatprep.subr.mxu0 0.0
  %4106 = vmatpush1.msra.mxu0 0.0
  %4107 = vmatprep.subr.mxu0 0.0
  %4108 = vmatpush1.msra.mxu0 0.0
  %4109 = vmatprep.subr.mxu0 0.0
  %4110 = vmatpush1.msra.mxu0 0.0
  %4111 = vmatprep.subr.mxu0 0.0
  %4112 = vmatpush1.msra.mxu0 0.0
  %4113 = vmatprep.subr.mxu0 0.0
  %4114 = vmatpush1.msra.mxu0 0.0
  %4115 = vmatprep.subr.mxu0 0.0
  %4116 = vmatpush1.msra.mxu0 0.0
  %4117 = vmatprep.subr.mxu0 0.0
  %4118 = vmatpush1.msra.mxu0 0.0
  %4119 = vmatprep.subr.mxu0 0.0
  %4120 = vmatpush1.msra.mxu0 0.0
  %4121 = vmatprep.subr.mxu0 0.0
  %4122 = vmatpush1.msra.mxu0 0.0
  %4123 = vmatprep.subr.mxu0 0.0
  %4124 = vmatpush1.msra.mxu0 0.0
  %4125 = vmatprep.subr.mxu0 0.0
  %4126 = vmatpush1.msra.mxu0 0.0
  %4127 = vmatprep.subr.mxu0 0.0
  %4128 = vmatpush1.msra.mxu0 0.0
  %4129 = vmatprep.subr.mxu0 0.0
  %4130 = vmatpush1.msra.mxu0 0.0
  %4131 = vmatprep.subr.mxu0 0.0
  %4132 = vmatpush1.msra.mxu0 0.0
  %4133 = vmatprep.subr.mxu0 0.0
  %4134 = vmatpush1.msra.mxu0 0.0
  %4135 = vmatprep.subr.mxu0 0.0
  %4136 = vmatpush1.msra.mxu0 0.0
  %4137 = vmatprep.subr.mxu0 0.0
  %4138 = vmatpush1.msra.mxu0 0.0
  %4139 = vmatprep.subr.mxu0 0.0
  %4140 = vmatpush1.msra.mxu0 0.0
  %4141 = vmatprep.subr.mxu0 0.0
  %4142 = vmatpush1.msra.mxu0 0.0
  %4143 = vmatprep.subr.mxu0 0.0
  %4144 = vmatpush1.msra.mxu0 0.0
  %4145 = vmatprep.mubr.f32.mxu0 0.0
  %4146 = vmatmul.mubr.f32.gmra.mrb[0].mxu0 %v4079
  %v4147 = vpop.f32.mrb[0].mxu0
  %v4148 = vadd.f32 0.0, %v4147
  %v4149 = vpop.f32.mrb[0].mxu0
  %4150 = vdwg.mxu0
  %v4151 = vadd.f32 %v4072, %v4148
  %s4152 = scalar_lea.vmem %s7, 288
  %v4153 = vld [vmem:[%s4152] sm:$0xff]
  %v4154 = vld [vmem:[%s4152 + $0x8] sm:$0xff]
  %v4155 = vld [vmem:[%s4152 + $0x10] sm:$0xff]
  %v4156 = vld [vmem:[%s4152 + $0x18] sm:$0xff]
  %v4157 = vrot.slane %v3442, 2
  %v4158 = vsel %vm490, %v4157, 0
  %4160 = vmatprep.subr.mxu0 0.0
  %4161 = vmatpush1.msra.mxu0 %v4153
  %4162 = vmatprep.subr.mxu0 0.0
  %4163 = vmatpush1.msra.mxu0 %v4154
  %4164 = vmatprep.subr.mxu0 0.0
  %4165 = vmatpush1.msra.mxu0 %v4155
  %4166 = vmatprep.subr.mxu0 0.0
  %4167 = vmatpush1.msra.mxu0 %v4156
  %4168 = vmatprep.subr.mxu0 0.0
  %4169 = vmatpush1.msra.mxu0 0.0
  %4170 = vmatprep.subr.mxu0 0.0
  %4171 = vmatpush1.msra.mxu0 0.0
  %4172 = vmatprep.subr.mxu0 0.0
  %4173 = vmatpush1.msra.mxu0 0.0
  %4174 = vmatprep.subr.mxu0 0.0
  %4175 = vmatpush1.msra.mxu0 0.0
  %4176 = vmatprep.subr.mxu0 0.0
  %4177 = vmatpush1.msra.mxu0 0.0
  %4178 = vmatprep.subr.mxu0 0.0
  %4179 = vmatpush1.msra.mxu0 0.0
  %4180 = vmatprep.subr.mxu0 0.0
  %4181 = vmatpush1.msra.mxu0 0.0
  %4182 = vmatprep.subr.mxu0 0.0
  %4183 = vmatpush1.msra.mxu0 0.0
  %4184 = vmatprep.subr.mxu0 0.0
  %4185 = vmatpush1.msra.mxu0 0.0
  %4186 = vmatprep.subr.mxu0 0.0
  %4187 = vmatpush1.msra.mxu0 0.0
  %4188 = vmatprep.subr.mxu0 0.0
  %4189 = vmatpush1.msra.mxu0 0.0
  %4190 = vmatprep.subr.mxu0 0.0
  %4191 = vmatpush1.msra.mxu0 0.0
  %4192 = vmatprep.subr.mxu0 0.0
  %4193 = vmatpush1.msra.mxu0 0.0
  %4194 = vmatprep.subr.mxu0 0.0
  %4195 = vmatpush1.msra.mxu0 0.0
  %4196 = vmatprep.subr.mxu0 0.0
  %4197 = vmatpush1.msra.mxu0 0.0
  %4198 = vmatprep.subr.mxu0 0.0
  %4199 = vmatpush1.msra.mxu0 0.0
  %4200 = vmatprep.subr.mxu0 0.0
  %4201 = vmatpush1.msra.mxu0 0.0
  %4202 = vmatprep.subr.mxu0 0.0
  %4203 = vmatpush1.msra.mxu0 0.0
  %4204 = vmatprep.subr.mxu0 0.0
  %4205 = vmatpush1.msra.mxu0 0.0
  %4206 = vmatprep.subr.mxu0 0.0
  %4207 = vmatpush1.msra.mxu0 0.0
  %4208 = vmatprep.subr.mxu0 0.0
  %4209 = vmatpush1.msra.mxu0 0.0
  %4210 = vmatprep.subr.mxu0 0.0
  %4211 = vmatpush1.msra.mxu0 0.0
  %4212 = vmatprep.subr.mxu0 0.0
  %4213 = vmatpush1.msra.mxu0 0.0
  %4214 = vmatprep.subr.mxu0 0.0
  %4215 = vmatpush1.msra.mxu0 0.0
  %4216 = vmatprep.subr.mxu0 0.0
  %4217 = vmatpush1.msra.mxu0 0.0
  %4218 = vmatprep.subr.mxu0 0.0
  %4219 = vmatpush1.msra.mxu0 0.0
  %4220 = vmatprep.subr.mxu0 0.0
  %4221 = vmatpush1.msra.mxu0 0.0
  %4222 = vmatprep.subr.mxu0 0.0
  %4223 = vmatpush1.msra.mxu0 0.0
  %4224 = vmatprep.mubr.f32.mxu0 0.0
  %4225 = vmatmul.mubr.f32.gmra.mrb[0].mxu0 %v4158
  %v4226 = vpop.f32.mrb[0].mxu0
  %v4227 = vadd.f32 0.0, %v4226
  %v4228 = vpop.f32.mrb[0].mxu0
  %4229 = vdwg.mxu0
  %v4230 = vadd.f32 %v4151, %v4227
  %s4231 = scalar_lea.vmem %s7, 320
  %v4232 = vld [vmem:[%s4231] sm:$0xff]
  %v4233 = vld [vmem:[%s4231 + $0x8] sm:$0xff]
  %v4234 = vld [vmem:[%s4231 + $0x10] sm:$0xff]
  %v4235 = vld [vmem:[%s4231 + $0x18] sm:$0xff]
  %v4236 = vrot.slane %v3442, 4
  %v4237 = vsel %vm490, %v4236, 0
  %4239 = vmatprep.subr.mxu0 0.0
  %4240 = vmatpush1.msra.mxu0 %v4232
  %4241 = vmatprep.subr.mxu0 0.0
  %4242 = vmatpush1.msra.mxu0 %v4233
  %4243 = vmatprep.subr.mxu0 0.0
  %4244 = vmatpush1.msra.mxu0 %v4234
  %4245 = vmatprep.subr.mxu0 0.0
  %4246 = vmatpush1.msra.mxu0 %v4235
  %4247 = vmatprep.subr.mxu0 0.0
  %4248 = vmatpush1.msra.mxu0 0.0
  %4249 = vmatprep.subr.mxu0 0.0
  %4250 = vmatpush1.msra.mxu0 0.0
  %4251 = vmatprep.subr.mxu0 0.0
  %4252 = vmatpush1.msra.mxu0 0.0
  %4253 = vmatprep.subr.mxu0 0.0
  %4254 = vmatpush1.msra.mxu0 0.0
  %4255 = vmatprep.subr.mxu0 0.0
  %4256 = vmatpush1.msra.mxu0 0.0
  %4257 = vmatprep.subr.mxu0 0.0
  %4258 = vmatpush1.msra.mxu0 0.0
  %4259 = vmatprep.subr.mxu0 0.0
  %4260 = vmatpush1.msra.mxu0 0.0
  %4261 = vmatprep.subr.mxu0 0.0
  %4262 = vmatpush1.msra.mxu0 0.0
  %4263 = vmatprep.subr.mxu0 0.0
  %4264 = vmatpush1.msra.mxu0 0.0
  %4265 = vmatprep.subr.mxu0 0.0
  %4266 = vmatpush1.msra.mxu0 0.0
  %4267 = vmatprep.subr.mxu0 0.0
  %4268 = vmatpush1.msra.mxu0 0.0
  %4269 = vmatprep.subr.mxu0 0.0
  %4270 = vmatpush1.msra.mxu0 0.0
  %4271 = vmatprep.subr.mxu0 0.0
  %4272 = vmatpush1.msra.mxu0 0.0
  %4273 = vmatprep.subr.mxu0 0.0
  %4274 = vmatpush1.msra.mxu0 0.0
  %4275 = vmatprep.subr.mxu0 0.0
  %4276 = vmatpush1.msra.mxu0 0.0
  %4277 = vmatprep.subr.mxu0 0.0
  %4278 = vmatpush1.msra.mxu0 0.0
  %4279 = vmatprep.subr.mxu0 0.0
  %4280 = vmatpush1.msra.mxu0 0.0
  %4281 = vmatprep.subr.mxu0 0.0
  %4282 = vmatpush1.msra.mxu0 0.0
  %4283 = vmatprep.subr.mxu0 0.0
  %4284 = vmatpush1.msra.mxu0 0.0
  %4285 = vmatprep.subr.mxu0 0.0
  %4286 = vmatpush1.msra.mxu0 0.0
  %4287 = vmatprep.subr.mxu0 0.0
  %4288 = vmatpush1.msra.mxu0 0.0
  %4289 = vmatprep.subr.mxu0 0.0
  %4290 = vmatpush1.msra.mxu0 0.0
  %4291 = vmatprep.subr.mxu0 0.0
  %4292 = vmatpush1.msra.mxu0 0.0
  %4293 = vmatprep.subr.mxu0 0.0
  %4294 = vmatpush1.msra.mxu0 0.0
  %4295 = vmatprep.subr.mxu0 0.0
  %4296 = vmatpush1.msra.mxu0 0.0
  %4297 = vmatprep.subr.mxu0 0.0
  %4298 = vmatpush1.msra.mxu0 0.0
  %4299 = vmatprep.subr.mxu0 0.0
  %4300 = vmatpush1.msra.mxu0 0.0
  %4301 = vmatprep.subr.mxu0 0.0
  %4302 = vmatpush1.msra.mxu0 0.0
  %4303 = vmatprep.mubr.f32.mxu0 0.0
  %4304 = vmatmul.mubr.f32.gmra.mrb[0].mxu0 %v4237
  %v4305 = vpop.f32.mrb[0].mxu0
  %v4306 = vadd.f32 0.0, %v4305
  %v4307 = vpop.f32.mrb[0].mxu0
  %4308 = vdwg.mxu0
  %v4309 = vadd.f32 %v4230, %v4306
  %s4310 = scalar_lea.vmem %s7, 352
  %v4311 = vld [vmem:[%s4310] sm:$0xff]
  %v4312 = vld [vmem:[%s4310 + $0x8] sm:$0xff]
  %v4313 = vld [vmem:[%s4310 + $0x10] sm:$0xff]
  %v4314 = vld [vmem:[%s4310 + $0x18] sm:$0xff]
  %v4315 = vrot.slane %v3442, 6
  %v4316 = vsel %vm490, %v4315, 0
  %4318 = vmatprep.subr.mxu0 0.0
  %4319 = vmatpush1.msra.mxu0 %v4311
  %4320 = vmatprep.subr.mxu0 0.0
  %4321 = vmatpush1.msra.mxu0 %v4312
  %4322 = vmatprep.subr.mxu0 0.0
  %4323 = vmatpush1.msra.mxu0 %v4313
  %4324 = vmatprep.subr.mxu0 0.0
  %4325 = vmatpush1.msra.mxu0 %v4314
  %4326 = vmatprep.subr.mxu0 0.0
  %4327 = vmatpush1.msra.mxu0 0.0
  %4328 = vmatprep.subr.mxu0 0.0
  %4329 = vmatpush1.msra.mxu0 0.0
  %4330 = vmatprep.subr.mxu0 0.0
  %4331 = vmatpush1.msra.mxu0 0.0
  %4332 = vmatprep.subr.mxu0 0.0
  %4333 = vmatpush1.msra.mxu0 0.0
  %4334 = vmatprep.subr.mxu0 0.0
  %4335 = vmatpush1.msra.mxu0 0.0
  %4336 = vmatprep.subr.mxu0 0.0
  %4337 = vmatpush1.msra.mxu0 0.0
  %4338 = vmatprep.subr.mxu0 0.0
  %4339 = vmatpush1.msra.mxu0 0.0
  %4340 = vmatprep.subr.mxu0 0.0
  %4341 = vmatpush1.msra.mxu0 0.0
  %4342 = vmatprep.subr.mxu0 0.0
  %4343 = vmatpush1.msra.mxu0 0.0
  %4344 = vmatprep.subr.mxu0 0.0
  %4345 = vmatpush1.msra.mxu0 0.0
  %4346 = vmatprep.subr.mxu0 0.0
  %4347 = vmatpush1.msra.mxu0 0.0
  %4348 = vmatprep.subr.mxu0 0.0
  %4349 = vmatpush1.msra.mxu0 0.0
  %4350 = vmatprep.subr.mxu0 0.0
  %4351 = vmatpush1.msra.mxu0 0.0
  %4352 = vmatprep.subr.mxu0 0.0
  %4353 = vmatpush1.msra.mxu0 0.0
  %4354 = vmatprep.subr.mxu0 0.0
  %4355 = vmatpush1.msra.mxu0 0.0
  %4356 = vmatprep.subr.mxu0 0.0
  %4357 = vmatpush1.msra.mxu0 0.0
  %4358 = vmatprep.subr.mxu0 0.0
  %4359 = vmatpush1.msra.mxu0 0.0
  %4360 = vmatprep.subr.mxu0 0.0
  %4361 = vmatpush1.msra.mxu0 0.0
  %4362 = vmatprep.subr.mxu0 0.0
  %4363 = vmatpush1.msra.mxu0 0.0
  %4364 = vmatprep.subr.mxu0 0.0
  %4365 = vmatpush1.msra.mxu0 0.0
  %4366 = vmatprep.subr.mxu0 0.0
  %4367 = vmatpush1.msra.mxu0 0.0
  %4368 = vmatprep.subr.mxu0 0.0
  %4369 = vmatpush1.msra.mxu0 0.0
  %4370 = vmatprep.subr.mxu0 0.0
  %4371 = vmatpush1.msra.mxu0 0.0
  %4372 = vmatprep.subr.mxu0 0.0
  %4373 = vmatpush1.msra.mxu0 0.0
  %4374 = vmatprep.subr.mxu0 0.0
  %4375 = vmatpush1.msra.mxu0 0.0
  %4376 = vmatprep.subr.mxu0 0.0
  %4377 = vmatpush1.msra.mxu0 0.0
  %4378 = vmatprep.subr.mxu0 0.0
  %4379 = vmatpush1.msra.mxu0 0.0
  %4380 = vmatprep.subr.mxu0 0.0
  %4381 = vmatpush1.msra.mxu0 0.0
  %4382 = vmatprep.mubr.f32.mxu0 0.0
  %4383 = vmatmul.mubr.f32.gmra.mrb[0].mxu0 %v4316
  %v4384 = vpop.f32.mrb[0].mxu0
  %v4385 = vadd.f32 0.0, %v4384
  %v4386 = vpop.f32.mrb[0].mxu0
  %4387 = vdwg.mxu0
  %v4388 = vadd.f32 %v4309, %v4385
  %s4389 = scalar_lea.vmem %s7, 384
  %v4390 = vld [vmem:[%s4389] sm:$0xff]
  %v4391 = vld [vmem:[%s4389 + $0x8] sm:$0xff]
  %v4392 = vld [vmem:[%s4389 + $0x10] sm:$0xff]
  %v4393 = vld [vmem:[%s4389 + $0x18] sm:$0xff]
  %v4395 = vsel %vm490, %v3443, 0
  %4397 = vmatprep.subr.mxu0 0.0
  %4398 = vmatpush1.msra.mxu0 %v4390
  %4399 = vmatprep.subr.mxu0 0.0
  %4400 = vmatpush1.msra.mxu0 %v4391
  %4401 = vmatprep.subr.mxu0 0.0
  %4402 = vmatpush1.msra.mxu0 %v4392
  %4403 = vmatprep.subr.mxu0 0.0
  %4404 = vmatpush1.msra.mxu0 %v4393
  %4405 = vmatprep.subr.mxu0 0.0
  %4406 = vmatpush1.msra.mxu0 0.0
  %4407 = vmatprep.subr.mxu0 0.0
  %4408 = vmatpush1.msra.mxu0 0.0
  %4409 = vmatprep.subr.mxu0 0.0
  %4410 = vmatpush1.msra.mxu0 0.0
  %4411 = vmatprep.subr.mxu0 0.0
  %4412 = vmatpush1.msra.mxu0 0.0
  %4413 = vmatprep.subr.mxu0 0.0
  %4414 = vmatpush1.msra.mxu0 0.0
  %4415 = vmatprep.subr.mxu0 0.0
  %4416 = vmatpush1.msra.mxu0 0.0
  %4417 = vmatprep.subr.mxu0 0.0
  %4418 = vmatpush1.msra.mxu0 0.0
  %4419 = vmatprep.subr.mxu0 0.0
  %4420 = vmatpush1.msra.mxu0 0.0
  %4421 = vmatprep.subr.mxu0 0.0
  %4422 = vmatpush1.msra.mxu0 0.0
  %4423 = vmatprep.subr.mxu0 0.0
  %4424 = vmatpush1.msra.mxu0 0.0
  %4425 = vmatprep.subr.mxu0 0.0
  %4426 = vmatpush1.msra.mxu0 0.0
  %4427 = vmatprep.subr.mxu0 0.0
  %4428 = vmatpush1.msra.mxu0 0.0
  %4429 = vmatprep.subr.mxu0 0.0
  %4430 = vmatpush1.msra.mxu0 0.0
  %4431 = vmatprep.subr.mxu0 0.0
  %4432 = vmatpush1.msra.mxu0 0.0
  %4433 = vmatprep.subr.mxu0 0.0
  %4434 = vmatpush1.msra.mxu0 0.0
  %4435 = vmatprep.subr.mxu0 0.0
  %4436 = vmatpush1.msra.mxu0 0.0
  %4437 = vmatprep.subr.mxu0 0.0
  %4438 = vmatpush1.msra.mxu0 0.0
  %4439 = vmatprep.subr.mxu0 0.0
  %4440 = vmatpush1.msra.mxu0 0.0
  %4441 = vmatprep.subr.mxu0 0.0
  %4442 = vmatpush1.msra.mxu0 0.0
  %4443 = vmatprep.subr.mxu0 0.0
  %4444 = vmatpush1.msra.mxu0 0.0
  %4445 = vmatprep.subr.mxu0 0.0
  %4446 = vmatpush1.msra.mxu0 0.0
  %4447 = vmatprep.subr.mxu0 0.0
  %4448 = vmatpush1.msra.mxu0 0.0
  %4449 = vmatprep.subr.mxu0 0.0
  %4450 = vmatpush1.msra.mxu0 0.0
  %4451 = vmatprep.subr.mxu0 0.0
  %4452 = vmatpush1.msra.mxu0 0.0
  %4453 = vmatprep.subr.mxu0 0.0
  %4454 = vmatpush1.msra.mxu0 0.0
  %4455 = vmatprep.subr.mxu0 0.0
  %4456 = vmatpush1.msra.mxu0 0.0
  %4457 = vmatprep.subr.mxu0 0.0
  %4458 = vmatpush1.msra.mxu0 0.0
  %4459 = vmatprep.subr.mxu0 0.0
  %4460 = vmatpush1.msra.mxu0 0.0
  %4461 = vmatprep.mubr.f32.mxu0 0.0
  %4462 = vmatmul.mubr.f32.gmra.mrb[0].mxu0 %v4395
  %v4463 = vpop.f32.mrb[0].mxu0
  %v4464 = vadd.f32 0.0, %v4463
  %v4465 = vpop.f32.mrb[0].mxu0
  %4466 = vdwg.mxu0
  %v4467 = vadd.f32 %v4388, %v4464
  %s4468 = scalar_lea.vmem %s7, 416
  %v4469 = vld [vmem:[%s4468] sm:$0xff]
  %v4470 = vld [vmem:[%s4468 + $0x8] sm:$0xff]
  %v4471 = vld [vmem:[%s4468 + $0x10] sm:$0xff]
  %v4472 = vld [vmem:[%s4468 + $0x18] sm:$0xff]
  %v4473 = vrot.slane %v3443, 2
  %v4474 = vsel %vm490, %v4473, 0
  %4476 = vmatprep.subr.mxu0 0.0
  %4477 = vmatpush1.msra.mxu0 %v4469
  %4478 = vmatprep.subr.mxu0 0.0
  %4479 = vmatpush1.msra.mxu0 %v4470
  %4480 = vmatprep.subr.mxu0 0.0
  %4481 = vmatpush1.msra.mxu0 %v4471
  %4482 = vmatprep.subr.mxu0 0.0
  %4483 = vmatpush1.msra.mxu0 %v4472
  %4484 = vmatprep.subr.mxu0 0.0
  %4485 = vmatpush1.msra.mxu0 0.0
  %4486 = vmatprep.subr.mxu0 0.0
  %4487 = vmatpush1.msra.mxu0 0.0
  %4488 = vmatprep.subr.mxu0 0.0
  %4489 = vmatpush1.msra.mxu0 0.0
  %4490 = vmatprep.subr.mxu0 0.0
  %4491 = vmatpush1.msra.mxu0 0.0
  %4492 = vmatprep.subr.mxu0 0.0
  %4493 = vmatpush1.msra.mxu0 0.0
  %4494 = vmatprep.subr.mxu0 0.0
  %4495 = vmatpush1.msra.mxu0 0.0
  %4496 = vmatprep.subr.mxu0 0.0
  %4497 = vmatpush1.msra.mxu0 0.0
  %4498 = vmatprep.subr.mxu0 0.0
  %4499 = vmatpush1.msra.mxu0 0.0
  %4500 = vmatprep.subr.mxu0 0.0
  %4501 = vmatpush1.msra.mxu0 0.0
  %4502 = vmatprep.subr.mxu0 0.0
  %4503 = vmatpush1.msra.mxu0 0.0
  %4504 = vmatprep.subr.mxu0 0.0
  %4505 = vmatpush1.msra.mxu0 0.0
  %4506 = vmatprep.subr.mxu0 0.0
  %4507 = vmatpush1.msra.mxu0 0.0
  %4508 = vmatprep.subr.mxu0 0.0
  %4509 = vmatpush1.msra.mxu0 0.0
  %4510 = vmatprep.subr.mxu0 0.0
  %4511 = vmatpush1.msra.mxu0 0.0
  %4512 = vmatprep.subr.mxu0 0.0
  %4513 = vmatpush1.msra.mxu0 0.0
  %4514 = vmatprep.subr.mxu0 0.0
  %4515 = vmatpush1.msra.mxu0 0.0
  %4516 = vmatprep.subr.mxu0 0.0
  %4517 = vmatpush1.msra.mxu0 0.0
  %4518 = vmatprep.subr.mxu0 0.0
  %4519 = vmatpush1.msra.mxu0 0.0
  %4520 = vmatprep.subr.mxu0 0.0
  %4521 = vmatpush1.msra.mxu0 0.0
  %4522 = vmatprep.subr.mxu0 0.0
  %4523 = vmatpush1.msra.mxu0 0.0
  %4524 = vmatprep.subr.mxu0 0.0
  %4525 = vmatpush1.msra.mxu0 0.0
  %4526 = vmatprep.subr.mxu0 0.0
  %4527 = vmatpush1.msra.mxu0 0.0
  %4528 = vmatprep.subr.mxu0 0.0
  %4529 = vmatpush1.msra.mxu0 0.0
  %4530 = vmatprep.subr.mxu0 0.0
  %4531 = vmatpush1.msra.mxu0 0.0
  %4532 = vmatprep.subr.mxu0 0.0
  %4533 = vmatpush1.msra.mxu0 0.0
  %4534 = vmatprep.subr.mxu0 0.0
  %4535 = vmatpush1.msra.mxu0 0.0
  %4536 = vmatprep.subr.mxu0 0.0
  %4537 = vmatpush1.msra.mxu0 0.0
  %4538 = vmatprep.subr.mxu0 0.0
  %4539 = vmatpush1.msra.mxu0 0.0
  %4540 = vmatprep.mubr.f32.mxu0 0.0
  %4541 = vmatmul.mubr.f32.gmra.mrb[0].mxu0 %v4474
  %v4542 = vpop.f32.mrb[0].mxu0
  %v4543 = vadd.f32 0.0, %v4542
  %v4544 = vpop.f32.mrb[0].mxu0
  %4545 = vdwg.mxu0
  %v4546 = vadd.f32 %v4467, %v4543
  %s4547 = scalar_lea.vmem %s7, 448
  %v4548 = vld [vmem:[%s4547] sm:$0xff]
  %v4549 = vld [vmem:[%s4547 + $0x8] sm:$0xff]
  %v4550 = vld [vmem:[%s4547 + $0x10] sm:$0xff]
  %v4551 = vld [vmem:[%s4547 + $0x18] sm:$0xff]
  %v4552 = vrot.slane %v3443, 4
  %v4553 = vsel %vm490, %v4552, 0
  %4555 = vmatprep.subr.mxu0 0.0
  %4556 = vmatpush1.msra.mxu0 %v4548
  %4557 = vmatprep.subr.mxu0 0.0
  %4558 = vmatpush1.msra.mxu0 %v4549
  %4559 = vmatprep.subr.mxu0 0.0
  %4560 = vmatpush1.msra.mxu0 %v4550
  %4561 = vmatprep.subr.mxu0 0.0
  %4562 = vmatpush1.msra.mxu0 %v4551
  %4563 = vmatprep.subr.mxu0 0.0
  %4564 = vmatpush1.msra.mxu0 0.0
  %4565 = vmatprep.subr.mxu0 0.0
  %4566 = vmatpush1.msra.mxu0 0.0
  %4567 = vmatprep.subr.mxu0 0.0
  %4568 = vmatpush1.msra.mxu0 0.0
  %4569 = vmatprep.subr.mxu0 0.0
  %4570 = vmatpush1.msra.mxu0 0.0
  %4571 = vmatprep.subr.mxu0 0.0
  %4572 = vmatpush1.msra.mxu0 0.0
  %4573 = vmatprep.subr.mxu0 0.0
  %4574 = vmatpush1.msra.mxu0 0.0
  %4575 = vmatprep.subr.mxu0 0.0
  %4576 = vmatpush1.msra.mxu0 0.0
  %4577 = vmatprep.subr.mxu0 0.0
  %4578 = vmatpush1.msra.mxu0 0.0
  %4579 = vmatprep.subr.mxu0 0.0
  %4580 = vmatpush1.msra.mxu0 0.0
  %4581 = vmatprep.subr.mxu0 0.0
  %4582 = vmatpush1.msra.mxu0 0.0
  %4583 = vmatprep.subr.mxu0 0.0
  %4584 = vmatpush1.msra.mxu0 0.0
  %4585 = vmatprep.subr.mxu0 0.0
  %4586 = vmatpush1.msra.mxu0 0.0
  %4587 = vmatprep.subr.mxu0 0.0
  %4588 = vmatpush1.msra.mxu0 0.0
  %4589 = vmatprep.subr.mxu0 0.0
  %4590 = vmatpush1.msra.mxu0 0.0
  %4591 = vmatprep.subr.mxu0 0.0
  %4592 = vmatpush1.msra.mxu0 0.0
  %4593 = vmatprep.subr.mxu0 0.0
  %4594 = vmatpush1.msra.mxu0 0.0
  %4595 = vmatprep.subr.mxu0 0.0
  %4596 = vmatpush1.msra.mxu0 0.0
  %4597 = vmatprep.subr.mxu0 0.0
  %4598 = vmatpush1.msra.mxu0 0.0
  %4599 = vmatprep.subr.mxu0 0.0
  %4600 = vmatpush1.msra.mxu0 0.0
  %4601 = vmatprep.subr.mxu0 0.0
  %4602 = vmatpush1.msra.mxu0 0.0
  %4603 = vmatprep.subr.mxu0 0.0
  %4604 = vmatpush1.msra.mxu0 0.0
  %4605 = vmatprep.subr.mxu0 0.0
  %4606 = vmatpush1.msra.mxu0 0.0
  %4607 = vmatprep.subr.mxu0 0.0
  %4608 = vmatpush1.msra.mxu0 0.0
  %4609 = vmatprep.subr.mxu0 0.0
  %4610 = vmatpush1.msra.mxu0 0.0
  %4611 = vmatprep.subr.mxu0 0.0
  %4612 = vmatpush1.msra.mxu0 0.0
  %4613 = vmatprep.subr.mxu0 0.0
  %4614 = vmatpush1.msra.mxu0 0.0
  %4615 = vmatprep.subr.mxu0 0.0
  %4616 = vmatpush1.msra.mxu0 0.0
  %4617 = vmatprep.subr.mxu0 0.0
  %4618 = vmatpush1.msra.mxu0 0.0
  %4619 = vmatprep.mubr.f32.mxu0 0.0
  %4620 = vmatmul.mubr.f32.gmra.mrb[0].mxu0 %v4553
  %v4621 = vpop.f32.mrb[0].mxu0
  %v4622 = vadd.f32 0.0, %v4621
  %v4623 = vpop.f32.mrb[0].mxu0
  %4624 = vdwg.mxu0
  %v4625 = vadd.f32 %v4546, %v4622
  %s4626 = scalar_lea.vmem %s7, 480
  %v4627 = vld [vmem:[%s4626] sm:$0xff]
  %v4628 = vld [vmem:[%s4626 + $0x8] sm:$0xff]
  %v4629 = vld [vmem:[%s4626 + $0x10] sm:$0xff]
  %v4630 = vld [vmem:[%s4626 + $0x18] sm:$0xff]
  %v4631 = vrot.slane %v3443, 6
  %v4632 = vsel %vm490, %v4631, 0
  %4634 = vmatprep.subr.mxu0 0.0
  %4635 = vmatpush1.msra.mxu0 %v4627
  %4636 = vmatprep.subr.mxu0 0.0
  %4637 = vmatpush1.msra.mxu0 %v4628
  %4638 = vmatprep.subr.mxu0 0.0
  %4639 = vmatpush1.msra.mxu0 %v4629
  %4640 = vmatprep.subr.mxu0 0.0
  %4641 = vmatpush1.msra.mxu0 %v4630
  %4642 = vmatprep.subr.mxu0 0.0
  %4643 = vmatpush1.msra.mxu0 0.0
  %4644 = vmatprep.subr.mxu0 0.0
  %4645 = vmatpush1.msra.mxu0 0.0
  %4646 = vmatprep.subr.mxu0 0.0
  %4647 = vmatpush1.msra.mxu0 0.0
  %4648 = vmatprep.subr.mxu0 0.0
  %4649 = vmatpush1.msra.mxu0 0.0
  %4650 = vmatprep.subr.mxu0 0.0
  %4651 = vmatpush1.msra.mxu0 0.0
  %4652 = vmatprep.subr.mxu0 0.0
  %4653 = vmatpush1.msra.mxu0 0.0
  %4654 = vmatprep.subr.mxu0 0.0
  %4655 = vmatpush1.msra.mxu0 0.0
  %4656 = vmatprep.subr.mxu0 0.0
  %4657 = vmatpush1.msra.mxu0 0.0
  %4658 = vmatprep.subr.mxu0 0.0
  %4659 = vmatpush1.msra.mxu0 0.0
  %4660 = vmatprep.subr.mxu0 0.0
  %4661 = vmatpush1.msra.mxu0 0.0
  %4662 = vmatprep.subr.mxu0 0.0
  %4663 = vmatpush1.msra.mxu0 0.0
  %4664 = vmatprep.subr.mxu0 0.0
  %4665 = vmatpush1.msra.mxu0 0.0
  %4666 = vmatprep.subr.mxu0 0.0
  %4667 = vmatpush1.msra.mxu0 0.0
  %4668 = vmatprep.subr.mxu0 0.0
  %4669 = vmatpush1.msra.mxu0 0.0
  %4670 = vmatprep.subr.mxu0 0.0
  %4671 = vmatpush1.msra.mxu0 0.0
  %4672 = vmatprep.subr.mxu0 0.0
  %4673 = vmatpush1.msra.mxu0 0.0
  %4674 = vmatprep.subr.mxu0 0.0
  %4675 = vmatpush1.msra.mxu0 0.0
  %4676 = vmatprep.subr.mxu0 0.0
  %4677 = vmatpush1.msra.mxu0 0.0
  %4678 = vmatprep.subr.mxu0 0.0
  %4679 = vmatpush1.msra.mxu0 0.0
  %4680 = vmatprep.subr.mxu0 0.0
  %4681 = vmatpush1.msra.mxu0 0.0
  %4682 = vmatprep.subr.mxu0 0.0
  %4683 = vmatpush1.msra.mxu0 0.0
  %4684 = vmatprep.subr.mxu0 0.0
  %4685 = vmatpush1.msra.mxu0 0.0
  %4686 = vmatprep.subr.mxu0 0.0
  %4687 = vmatpush1.msra.mxu0 0.0
  %4688 = vmatprep.subr.mxu0 0.0
  %4689 = vmatpush1.msra.mxu0 0.0
  %4690 = vmatprep.subr.mxu0 0.0
  %4691 = vmatpush1.msra.mxu0 0.0
  %4692 = vmatprep.subr.mxu0 0.0
  %4693 = vmatpush1.msra.mxu0 0.0
  %4694 = vmatprep.subr.mxu0 0.0
  %4695 = vmatpush1.msra.mxu0 0.0
  %4696 = vmatprep.subr.mxu0 0.0
  %4697 = vmatpush1.msra.mxu0 0.0
  %4698 = vmatprep.mubr.f32.mxu0 0.0
  %4699 = vmatmul.mubr.f32.gmra.mrb[0].mxu0 %v4632
  %v4700 = vpop.f32.mrb[0].mxu0
  %v4701 = vadd.f32 0.0, %v4700
  %v4702 = vpop.f32.mrb[0].mxu0
  %4703 = vdwg.mxu0
  %v4704 = vadd.f32 %v4625, %v4701
  %v4705 = vld [vmem:[%s8] sm:$0x1]
  %v4707 = vlaneseq
  %v4708 = vshrl.u32 %v4707, 7
  %v4709 = vsub.s32 0, %v4708
  %v4710 = vrot.slane %v4705, %v4709
  %v4712 = vadd.f32 %v4704, %v4710
  %v4713 = vmax.f32 %v4712, 0.0
  %v4714 = vld [vmem:[%s9] sm:$0xff]
  %v4715 = vld [vmem:[%s9 + $0x8] sm:$0xff]
  %v4716 = vld [vmem:[%s9 + $0x10] sm:$0xff]
  %v4717 = vld [vmem:[%s9 + $0x18] sm:$0xff]
  %v4718 = vld [vmem:[%s10] sm:$0x1]
  %v4720 = vlaneseq
  %v4721 = vshrl.u32 %v4720, 7
  %v4722 = vsub.s32 0, %v4721
  %v4723 = vrot.slane %v4718, %v4722
  %v4726 = vsel %vm490, %v4713, 0
  %4728 = vmatprep.subr.mxu0 0.0
  %4729 = vmatpush1.msra.mxu0 %v4714
  %4730 = vmatprep.subr.mxu0 0.0
  %4731 = vmatpush1.msra.mxu0 %v4715
  %4732 = vmatprep.subr.mxu0 0.0
  %4733 = vmatpush1.msra.mxu0 %v4716
  %4734 = vmatprep.subr.mxu0 0.0
  %4735 = vmatpush1.msra.mxu0 %v4717
  %4736 = vmatprep.subr.mxu0 0.0
  %4737 = vmatpush1.msra.mxu0 0.0
  %4738 = vmatprep.subr.mxu0 0.0
  %4739 = vmatpush1.msra.mxu0 0.0
  %4740 = vmatprep.subr.mxu0 0.0
  %4741 = vmatpush1.msra.mxu0 0.0
  %4742 = vmatprep.subr.mxu0 0.0
  %4743 = vmatpush1.msra.mxu0 0.0
  %4744 = vmatprep.subr.mxu0 0.0
  %4745 = vmatpush1.msra.mxu0 0.0
  %4746 = vmatprep.subr.mxu0 0.0
  %4747 = vmatpush1.msra.mxu0 0.0
  %4748 = vmatprep.subr.mxu0 0.0
  %4749 = vmatpush1.msra.mxu0 0.0
  %4750 = vmatprep.subr.mxu0 0.0
  %4751 = vmatpush1.msra.mxu0 0.0
  %4752 = vmatprep.subr.mxu0 0.0
  %4753 = vmatpush1.msra.mxu0 0.0
  %4754 = vmatprep.subr.mxu0 0.0
  %4755 = vmatpush1.msra.mxu0 0.0
  %4756 = vmatprep.subr.mxu0 0.0
  %4757 = vmatpush1.msra.mxu0 0.0
  %4758 = vmatprep.subr.mxu0 0.0
  %4759 = vmatpush1.msra.mxu0 0.0
  %4760 = vmatprep.subr.mxu0 0.0
  %4761 = vmatpush1.msra.mxu0 0.0
  %4762 = vmatprep.subr.mxu0 0.0
  %4763 = vmatpush1.msra.mxu0 0.0
  %4764 = vmatprep.subr.mxu0 0.0
  %4765 = vmatpush1.msra.mxu0 0.0
  %4766 = vmatprep.subr.mxu0 0.0
  %4767 = vmatpush1.msra.mxu0 0.0
  %4768 = vmatprep.subr.mxu0 0.0
  %4769 = vmatpush1.msra.mxu0 0.0
  %4770 = vmatprep.subr.mxu0 0.0
  %4771 = vmatpush1.msra.mxu0 0.0
  %4772 = vmatprep.subr.mxu0 0.0
  %4773 = vmatpush1.msra.mxu0 0.0
  %4774 = vmatprep.subr.mxu0 0.0
  %4775 = vmatpush1.msra.mxu0 0.0
  %4776 = vmatprep.subr.mxu0 0.0
  %4777 = vmatpush1.msra.mxu0 0.0
  %4778 = vmatprep.subr.mxu0 0.0
  %4779 = vmatpush1.msra.mxu0 0.0
  %4780 = vmatprep.subr.mxu0 0.0
  %4781 = vmatpush1.msra.mxu0 0.0
  %4782 = vmatprep.subr.mxu0 0.0
  %4783 = vmatpush1.msra.mxu0 0.0
  %4784 = vmatprep.subr.mxu0 0.0
  %4785 = vmatpush1.msra.mxu0 0.0
  %4786 = vmatprep.subr.mxu0 0.0
  %4787 = vmatpush1.msra.mxu0 0.0
  %4788 = vmatprep.subr.mxu0 0.0
  %4789 = vmatpush1.msra.mxu0 0.0
  %4790 = vmatprep.subr.mxu0 0.0
  %4791 = vmatpush1.msra.mxu0 0.0
  %4792 = vmatprep.mubr.f32.mxu0 0.0
  %4793 = vmatmul.mubr.f32.gmra.mrb[0].mxu0 %v4726
  %v4794 = vpop.f32.mrb[0].mxu0
  %v4795 = vadd.f32 %v4723, %v4794
  %v4796 = vpop.f32.mrb[0].mxu0
  %4797 = vdwg.mxu0
  %v4798 = vmax.f32 %v4795, 0.0
  %v4799 = vld [vmem:[%s11] sm:$0xff]
  %v4800 = vld [vmem:[%s11 + $0x8] sm:$0xff]
  %v4801 = vld [vmem:[%s11 + $0x10] sm:$0xff]
  %v4802 = vld [vmem:[%s11 + $0x18] sm:$0xff]
  %v4803 = vld [vmem:[%s1] sm:$0x3]
  %v4804 = vld [vmem:[%s12] sm:$0xff]
  %v4805 = vld [vmem:[%s12 + $0x8] sm:$0x3]
  %vm4806 = vcmask 80896
  %v4808 = vsel %vm4806, %v4803, 0
  %vm4810 = vcmask 1041408
  %v4812 = vsel %vm4810, %v4805, 0
  %4814 = vmatprep.subr.mxu0 0.0
  %4815 = vmatpush1.msra.mxu0 %v4804
  %4816 = vmatprep.subr.mxu0 0.0
  %4817 = vmatpush1.msra.mxu0 %v4812
  %4818 = vmatprep.subr.mxu0 0.0
  %4819 = vmatpush1.msra.mxu0 0.0
  %4820 = vmatprep.subr.mxu0 0.0
  %4821 = vmatpush1.msra.mxu0 0.0
  %4822 = vmatprep.subr.mxu0 0.0
  %4823 = vmatpush1.msra.mxu0 0.0
  %4824 = vmatprep.subr.mxu0 0.0
  %4825 = vmatpush1.msra.mxu0 0.0
  %4826 = vmatprep.subr.mxu0 0.0
  %4827 = vmatpush1.msra.mxu0 0.0
  %4828 = vmatprep.subr.mxu0 0.0
  %4829 = vmatpush1.msra.mxu0 0.0
  %4830 = vmatprep.subr.mxu0 0.0
  %4831 = vmatpush1.msra.mxu0 0.0
  %4832 = vmatprep.subr.mxu0 0.0
  %4833 = vmatpush1.msra.mxu0 0.0
  %4834 = vmatprep.subr.mxu0 0.0
  %4835 = vmatpush1.msra.mxu0 0.0
  %4836 = vmatprep.subr.mxu0 0.0
  %4837 = vmatpush1.msra.mxu0 0.0
  %4838 = vmatprep.subr.mxu0 0.0
  %4839 = vmatpush1.msra.mxu0 0.0
  %4840 = vmatprep.subr.mxu0 0.0
  %4841 = vmatpush1.msra.mxu0 0.0
  %4842 = vmatprep.subr.mxu0 0.0
  %4843 = vmatpush1.msra.mxu0 0.0
  %4844 = vmatprep.subr.mxu0 0.0
  %4845 = vmatpush1.msra.mxu0 0.0
  %4846 = vmatprep.subr.mxu0 0.0
  %4847 = vmatpush1.msra.mxu0 0.0
  %4848 = vmatprep.subr.mxu0 0.0
  %4849 = vmatpush1.msra.mxu0 0.0
  %4850 = vmatprep.subr.mxu0 0.0
  %4851 = vmatpush1.msra.mxu0 0.0
  %4852 = vmatprep.subr.mxu0 0.0
  %4853 = vmatpush1.msra.mxu0 0.0
  %4854 = vmatprep.subr.mxu0 0.0
  %4855 = vmatpush1.msra.mxu0 0.0
  %4856 = vmatprep.subr.mxu0 0.0
  %4857 = vmatpush1.msra.mxu0 0.0
  %4858 = vmatprep.subr.mxu0 0.0
  %4859 = vmatpush1.msra.mxu0 0.0
  %4860 = vmatprep.subr.mxu0 0.0
  %4861 = vmatpush1.msra.mxu0 0.0
  %4862 = vmatprep.subr.mxu0 0.0
  %4863 = vmatpush1.msra.mxu0 0.0
  %4864 = vmatprep.subr.mxu0 0.0
  %4865 = vmatpush1.msra.mxu0 0.0
  %4866 = vmatprep.subr.mxu0 0.0
  %4867 = vmatpush1.msra.mxu0 0.0
  %4868 = vmatprep.subr.mxu0 0.0
  %4869 = vmatpush1.msra.mxu0 0.0
  %4870 = vmatprep.subr.mxu0 0.0
  %4871 = vmatpush1.msra.mxu0 0.0
  %4872 = vmatprep.subr.mxu0 0.0
  %4873 = vmatpush1.msra.mxu0 0.0
  %4874 = vmatprep.subr.mxu0 0.0
  %4875 = vmatpush1.msra.mxu0 0.0
  %4876 = vmatprep.subr.mxu0 0.0
  %4877 = vmatpush1.msra.mxu0 0.0
  %4878 = vmatprep.mubr.f32.mxu0 0.0
  %4879 = vmatmul.mubr.f32.gmra.mrb[0].mxu0 %v4808
  %v4880 = vpop.f32.mrb[0].mxu0
  %v4881 = vadd.f32 0.0, %v4880
  %v4882 = vpop.f32.mrb[0].mxu0
  %4883 = vdwg.mxu0
  %v4885 = vsel %vm490, %v4798, 0
  %4887 = vmatprep.subr.mxu0 0.0
  %4888 = vmatpush1.msra.mxu0 %v4799
  %4889 = vmatprep.subr.mxu0 0.0
  %4890 = vmatpush1.msra.mxu0 %v4800
  %4891 = vmatprep.subr.mxu0 0.0
  %4892 = vmatpush1.msra.mxu0 %v4801
  %4893 = vmatprep.subr.mxu0 0.0
  %4894 = vmatpush1.msra.mxu0 %v4802
  %4895 = vmatprep.subr.mxu0 0.0
  %4896 = vmatpush1.msra.mxu0 0.0
  %4897 = vmatprep.subr.mxu0 0.0
  %4898 = vmatpush1.msra.mxu0 0.0
  %4899 = vmatprep.subr.mxu0 0.0
  %4900 = vmatpush1.msra.mxu0 0.0
  %4901 = vmatprep.subr.mxu0 0.0
  %4902 = vmatpush1.msra.mxu0 0.0
  %4903 = vmatprep.subr.mxu0 0.0
  %4904 = vmatpush1.msra.mxu0 0.0
  %4905 = vmatprep.subr.mxu0 0.0
  %4906 = vmatpush1.msra.mxu0 0.0
  %4907 = vmatprep.subr.mxu0 0.0
  %4908 = vmatpush1.msra.mxu0 0.0
  %4909 = vmatprep.subr.mxu0 0.0
  %4910 = vmatpush1.msra.mxu0 0.0
  %4911 = vmatprep.subr.mxu0 0.0
  %4912 = vmatpush1.msra.mxu0 0.0
  %4913 = vmatprep.subr.mxu0 0.0
  %4914 = vmatpush1.msra.mxu0 0.0
  %4915 = vmatprep.subr.mxu0 0.0
  %4916 = vmatpush1.msra.mxu0 0.0
  %4917 = vmatprep.subr.mxu0 0.0
  %4918 = vmatpush1.msra.mxu0 0.0
  %4919 = vmatprep.subr.mxu0 0.0
  %4920 = vmatpush1.msra.mxu0 0.0
  %4921 = vmatprep.subr.mxu0 0.0
  %4922 = vmatpush1.msra.mxu0 0.0
  %4923 = vmatprep.subr.mxu0 0.0
  %4924 = vmatpush1.msra.mxu0 0.0
  %4925 = vmatprep.subr.mxu0 0.0
  %4926 = vmatpush1.msra.mxu0 0.0
  %4927 = vmatprep.subr.mxu0 0.0
  %4928 = vmatpush1.msra.mxu0 0.0
  %4929 = vmatprep.subr.mxu0 0.0
  %4930 = vmatpush1.msra.mxu0 0.0
  %4931 = vmatprep.subr.mxu0 0.0
  %4932 = vmatpush1.msra.mxu0 0.0
  %4933 = vmatprep.subr.mxu0 0.0
  %4934 = vmatpush1.msra.mxu0 0.0
  %4935 = vmatprep.subr.mxu0 0.0
  %4936 = vmatpush1.msra.mxu0 0.0
  %4937 = vmatprep.subr.mxu0 0.0
  %4938 = vmatpush1.msra.mxu0 0.0
  %4939 = vmatprep.subr.mxu0 0.0
  %4940 = vmatpush1.msra.mxu0 0.0
  %4941 = vmatprep.subr.mxu0 0.0
  %4942 = vmatpush1.msra.mxu0 0.0
  %4943 = vmatprep.subr.mxu0 0.0
  %4944 = vmatpush1.msra.mxu0 0.0
  %4945 = vmatprep.subr.mxu0 0.0
  %4946 = vmatpush1.msra.mxu0 0.0
  %4947 = vmatprep.subr.mxu0 0.0
  %4948 = vmatpush1.msra.mxu0 0.0
  %4949 = vmatprep.subr.mxu0 0.0
  %4950 = vmatpush1.msra.mxu0 0.0
  %4951 = vmatprep.mubr.f32.mxu0 0.0
  %4952 = vmatmul.mubr.f32.gmra.mrb[0].mxu0 %v4885
  %v4953 = vpop.f32.mrb[0].mxu0
  %v4954 = vadd.f32 %v4881, %v4953
  %v4955 = vpop.f32.mrb[0].mxu0
  %4956 = vdwg.mxu0
  %v4957 = vld [vmem:[%s13] sm:$0x1]
  %v4959 = vlaneseq
  %v4960 = vshrl.u32 %v4959, 7
  %v4961 = vsub.s32 0, %v4960
  %v4962 = vrot.slane %v4957, %v4961
  %v4964 = vadd.f32 %v4954, %v4962
  %v4965 = vmax.f32 %v4964, 0.0
  %v4966 = vld [vmem:[%s14] sm:$0xff]
  %v4967 = vld [vmem:[%s14 + $0x8] sm:$0xff]
  %v4968 = vld [vmem:[%s14 + $0x10] sm:$0xff]
  %v4969 = vld [vmem:[%s14 + $0x18] sm:$0xff]
  %v4970 = vld [vmem:[%s14 + $0x20] sm:$0xff]
  %v4971 = vld [vmem:[%s14 + $0x28] sm:$0xff]
  %v4972 = vld [vmem:[%s14 + $0x30] sm:$0xff]
  %v4973 = vld [vmem:[%s14 + $0x38] sm:$0xff]
  %v4974 = vld [vmem:[%s15] sm:$0x1]
  %v4976 = vlaneseq
  %v4977 = vshrl.u32 %v4976, 7
  %v4978 = vsub.s32 0, %v4977
  %v4979 = vrot.slane %v4974, %v4978
  %v4982 = vsel %vm92, %v4965, 0
  %4984 = vmatprep.subr.mxu0 0.0
  %4985 = vmatpush1.msra.mxu0 %v4966
  %4986 = vmatprep.subr.mxu0 0.0
  %4987 = vmatpush1.msra.mxu0 %v4967
  %4988 = vmatprep.subr.mxu0 0.0
  %4989 = vmatpush1.msra.mxu0 %v4968
  %4990 = vmatprep.subr.mxu0 0.0
  %4991 = vmatpush1.msra.mxu0 %v4969
  %4992 = vmatprep.subr.mxu0 0.0
  %4993 = vmatpush1.msra.mxu0 %v4970
  %4994 = vmatprep.subr.mxu0 0.0
  %4995 = vmatpush1.msra.mxu0 %v4971
  %4996 = vmatprep.subr.mxu0 0.0
  %4997 = vmatpush1.msra.mxu0 %v4972
  %4998 = vmatprep.subr.mxu0 0.0
  %4999 = vmatpush1.msra.mxu0 %v4973
  %5000 = vmatprep.subr.mxu0 0.0
  %5001 = vmatpush1.msra.mxu0 0.0
  %5002 = vmatprep.subr.mxu0 0.0
  %5003 = vmatpush1.msra.mxu0 0.0
  %5004 = vmatprep.subr.mxu0 0.0
  %5005 = vmatpush1.msra.mxu0 0.0
  %5006 = vmatprep.subr.mxu0 0.0
  %5007 = vmatpush1.msra.mxu0 0.0
  %5008 = vmatprep.subr.mxu0 0.0
  %5009 = vmatpush1.msra.mxu0 0.0
  %5010 = vmatprep.subr.mxu0 0.0
  %5011 = vmatpush1.msra.mxu0 0.0
  %5012 = vmatprep.subr.mxu0 0.0
  %5013 = vmatpush1.msra.mxu0 0.0
  %5014 = vmatprep.subr.mxu0 0.0
  %5015 = vmatpush1.msra.mxu0 0.0
  %5016 = vmatprep.subr.mxu0 0.0
  %5017 = vmatpush1.msra.mxu0 0.0
  %5018 = vmatprep.subr.mxu0 0.0
  %5019 = vmatpush1.msra.mxu0 0.0
  %5020 = vmatprep.subr.mxu0 0.0
  %5021 = vmatpush1.msra.mxu0 0.0
  %5022 = vmatprep.subr.mxu0 0.0
  %5023 = vmatpush1.msra.mxu0 0.0
  %5024 = vmatprep.subr.mxu0 0.0
  %5025 = vmatpush1.msra.mxu0 0.0
  %5026 = vmatprep.subr.mxu0 0.0
  %5027 = vmatpush1.msra.mxu0 0.0
  %5028 = vmatprep.subr.mxu0 0.0
  %5029 = vmatpush1.msra.mxu0 0.0
  %5030 = vmatprep.subr.mxu0 0.0
  %5031 = vmatpush1.msra.mxu0 0.0
  %5032 = vmatprep.subr.mxu0 0.0
  %5033 = vmatpush1.msra.mxu0 0.0
  %5034 = vmatprep.subr.mxu0 0.0
  %5035 = vmatpush1.msra.mxu0 0.0
  %5036 = vmatprep.subr.mxu0 0.0
  %5037 = vmatpush1.msra.mxu0 0.0
  %5038 = vmatprep.subr.mxu0 0.0
  %5039 = vmatpush1.msra.mxu0 0.0
  %5040 = vmatprep.subr.mxu0 0.0
  %5041 = vmatpush1.msra.mxu0 0.0
  %5042 = vmatprep.subr.mxu0 0.0
  %5043 = vmatpush1.msra.mxu0 0.0
  %5044 = vmatprep.subr.mxu0 0.0
  %5045 = vmatpush1.msra.mxu0 0.0
  %5046 = vmatprep.subr.mxu0 0.0
  %5047 = vmatpush1.msra.mxu0 0.0
  %5048 = vmatprep.mubr.f32.mxu0 0.0
  %5049 = vmatmul.mubr.f32.gmra.mrb[0].mxu0 %v4982
  %v5050 = vpop.f32.mrb[0].mxu0
  %v5051 = vadd.f32 %v4979, %v5050
  %v5052 = vpop.f32.mrb[0].mxu0
  %5053 = vdwg.mxu0
  %v5054 = vmax.f32 %v5051, 0.0
  %v5055 = vld [vmem:[%s16] sm:$0xff]
  %v5056 = vld [vmem:[%s16 + $0x8] sm:$0xff]
  %v5057 = vld [vmem:[%s16 + $0x10] sm:$0xff]
  %v5058 = vld [vmem:[%s16 + $0x18] sm:$0xff]
  %v5059 = vld [vmem:[%s16 + $0x20] sm:$0xff]
  %v5060 = vld [vmem:[%s16 + $0x28] sm:$0xff]
  %v5061 = vld [vmem:[%s16 + $0x30] sm:$0xff]
  %v5062 = vld [vmem:[%s16 + $0x38] sm:$0xff]
  %v5063 = vld [vmem:[#allocation2] sm:$0x1]
  %v5065 = vlaneseq
  %v5066 = vshrl.u32 %v5065, 7
  %v5067 = vsub.s32 0, %v5066
  %v5068 = vrot.slane %v5063, %v5067
  %v5071 = vsel %vm92, %v5054, 0
  %5073 = vmatprep.subr.mxu0 0.0
  %5074 = vmatpush1.msra.mxu0 %v5055
  %5075 = vmatprep.subr.mxu0 0.0
  %5076 = vmatpush1.msra.mxu0 %v5056
  %5077 = vmatprep.subr.mxu0 0.0
  %5078 = vmatpush1.msra.mxu0 %v5057
  %5079 = vmatprep.subr.mxu0 0.0
  %5080 = vmatpush1.msra.mxu0 %v5058
  %5081 = vmatprep.subr.mxu0 0.0
  %5082 = vmatpush1.msra.mxu0 %v5059
  %5083 = vmatprep.subr.mxu0 0.0
  %5084 = vmatpush1.msra.mxu0 %v5060
  %5085 = vmatprep.subr.mxu0 0.0
  %5086 = vmatpush1.msra.mxu0 %v5061
  %5087 = vmatprep.subr.mxu0 0.0
  %5088 = vmatpush1.msra.mxu0 %v5062
  %5089 = vmatprep.subr.mxu0 0.0
  %5090 = vmatpush1.msra.mxu0 0.0
  %5091 = vmatprep.subr.mxu0 0.0
  %5092 = vmatpush1.msra.mxu0 0.0
  %5093 = vmatprep.subr.mxu0 0.0
  %5094 = vmatpush1.msra.mxu0 0.0
  %5095 = vmatprep.subr.mxu0 0.0
  %5096 = vmatpush1.msra.mxu0 0.0
  %5097 = vmatprep.subr.mxu0 0.0
  %5098 = vmatpush1.msra.mxu0 0.0
  %5099 = vmatprep.subr.mxu0 0.0
  %5100 = vmatpush1.msra.mxu0 0.0
  %5101 = vmatprep.subr.mxu0 0.0
  %5102 = vmatpush1.msra.mxu0 0.0
  %5103 = vmatprep.subr.mxu0 0.0
  %5104 = vmatpush1.msra.mxu0 0.0
  %5105 = vmatprep.subr.mxu0 0.0
  %5106 = vmatpush1.msra.mxu0 0.0
  %5107 = vmatprep.subr.mxu0 0.0
  %5108 = vmatpush1.msra.mxu0 0.0
  %5109 = vmatprep.subr.mxu0 0.0
  %5110 = vmatpush1.msra.mxu0 0.0
  %5111 = vmatprep.subr.mxu0 0.0
  %5112 = vmatpush1.msra.mxu0 0.0
  %5113 = vmatprep.subr.mxu0 0.0
  %5114 = vmatpush1.msra.mxu0 0.0
  %5115 = vmatprep.subr.mxu0 0.0
  %5116 = vmatpush1.msra.mxu0 0.0
  %5117 = vmatprep.subr.mxu0 0.0
  %5118 = vmatpush1.msra.mxu0 0.0
  %5119 = vmatprep.subr.mxu0 0.0
  %5120 = vmatpush1.msra.mxu0 0.0
  %5121 = vmatprep.subr.mxu0 0.0
  %5122 = vmatpush1.msra.mxu0 0.0
  %5123 = vmatprep.subr.mxu0 0.0
  %5124 = vmatpush1.msra.mxu0 0.0
  %5125 = vmatprep.subr.mxu0 0.0
  %5126 = vmatpush1.msra.mxu0 0.0
  %5127 = vmatprep.subr.mxu0 0.0
  %5128 = vmatpush1.msra.mxu0 0.0
  %5129 = vmatprep.subr.mxu0 0.0
  %5130 = vmatpush1.msra.mxu0 0.0
  %5131 = vmatprep.subr.mxu0 0.0
  %5132 = vmatpush1.msra.mxu0 0.0
  %5133 = vmatprep.subr.mxu0 0.0
  %5134 = vmatpush1.msra.mxu0 0.0
  %5135 = vmatprep.subr.mxu0 0.0
  %5136 = vmatpush1.msra.mxu0 0.0
  %5137 = vmatprep.mubr.f32.mxu0 0.0
  %5138 = vmatmul.mubr.f32.gmra.mrb[0].mxu0 %v5071
  %v5139 = vpop.f32.mrb[0].mxu0
  %v5140 = vadd.f32 %v5068, %v5139
  %v5141 = vpop.f32.mrb[0].mxu0
  %5142 = vdwg.mxu0
  %vm5143 = vcmask 1024
  %5144 = vst.msk [vmem:[%s18] sm:$0x3] %vm5143, %v5140
  // Predicated region
  $region74: #{burgess_discriminator_forward.1} parent=0 // pred_check
    _
  $region75: #{burgess_discriminator_forward.1} parent=0 // pred_check_branch
    %5146 = sbr.rel (0) target = $region77
  $region76: #{burgess_discriminator_forward.1} parent=0 // pred_region
    _
  $region77: #{burgess_discriminator_forward.1} parent=0 // pred_fallthru
    _
  // Predicated region
  $region78: #{burgess_discriminator_forward.1} parent=0 // pred_check
    _
  $region79: #{burgess_discriminator_forward.1} parent=0 // pred_check_branch
    %5148 = sbr.rel (0) target = $region81
  $region80: #{burgess_discriminator_forward.1} parent=0 // pred_region
    _
  $region81: #{burgess_discriminator_forward.1} parent=0 // pred_fallthru
    _

</llo_original>
